<compile_context>
chip_gen: v5e
topology: v5e:2x2
jax: 0.10.0
libtpu: 0.0.40
codegen_flags: <defaults>
</compile_context>

<pallas_src>
import functools

import jax
import jax.numpy as jnp
from jax.experimental import pallas as pl
from jax.experimental.pallas import tpu as pltpu


def _silu(x):
    return x * jax.nn.sigmoid(x)


def _choose_tm(m):
    """Largest row tile (multiple of 8) that divides M and gives >=2 grid steps."""
    for tm in (512, 256, 128, 64, 32, 16, 8):
        if m % tm == 0 and m // tm >= 2:
            return tm
    return m


# ----------------------------------------------------------------------------
# Kernel 1: head = fused cv1 (1x1 conv + folded BN + SiLU) and cv2 (plain 1x1)
# ----------------------------------------------------------------------------
def _head_kernel(x_ref, w1f_ref, b1_ref, w2_ref, a_ref, y2_ref):
    x = x_ref[...]                                                   # (tm, c1)
    t = jnp.dot(x, w1f_ref[...], preferred_element_type=jnp.float32) + b1_ref[...]
    a_ref[...] = _silu(t).astype(a_ref.dtype)
    y2_ref[...] = jnp.dot(x, w2_ref[...],
                          preferred_element_type=jnp.float32).astype(y2_ref.dtype)


def head_call(x_flat, w1f, b1, w2):
    M, c1 = x_flat.shape
    c_ = w1f.shape[1]
    tm = _choose_tm(M)
    return pl.pallas_call(
        _head_kernel,
        out_shape=(jax.ShapeDtypeStruct((M, c_), x_flat.dtype),
                   jax.ShapeDtypeStruct((M, c_), x_flat.dtype)),
        grid=(M // tm,),
        in_specs=[
            pl.BlockSpec((tm, c1), lambda i: (i, 0)),
            pl.BlockSpec((c1, c_), lambda i: (0, 0)),
            pl.BlockSpec((1, c_), lambda i: (0, 0)),
            pl.BlockSpec((c1, c_), lambda i: (0, 0)),
        ],
        out_specs=(pl.BlockSpec((tm, c_), lambda i: (i, 0)),
                   pl.BlockSpec((tm, c_), lambda i: (i, 0))),
        compiler_params=pltpu.CompilerParams(dimension_semantics=("parallel",)),
    )(x_flat, w1f, b1, w2)


# ----------------------------------------------------------------------------
# Kernel 2: 3x3 conv (stride 1, pad 1) + folded BN + SiLU [+ residual add]
# ----------------------------------------------------------------------------
def _conv3x3_row_kernel(*refs, W, add_residual):
    if add_residual:
        xp_ref, res_ref, w_ref, b_ref, o_ref = refs
    else:
        xp_ref, w_ref, b_ref, o_ref = refs
    y = pl.program_id(1)
    rows = xp_ref[0, pl.ds(y, 3)]                 # (3, W+2, C) — padded rows y..y+2
    c = o_ref.shape[-1]
    acc = jnp.zeros((W, c), jnp.float32)
    for dy in range(3):
        r = rows[dy]                              # (W+2, C)
        for dx in range(3):
            acc = acc + jnp.dot(r[dx:dx + W, :], w_ref[3 * dy + dx],
                                preferred_element_type=jnp.float32)
    out = _silu(acc + b_ref[...])                 # bias broadcast (1, C)
    if add_residual:
        out = out + res_ref[0, 0]                 # Bottleneck shortcut
    o_ref[0, 0] = out.astype(o_ref.dtype)


def conv3x3_bn_silu(x_nhwc, w9, bias, residual=None):
    N, H, W, c = x_nhwc.shape
    xp = jnp.pad(x_nhwc, ((0, 0), (1, 1), (1, 1), (0, 0)))
    kern = functools.partial(_conv3x3_row_kernel, W=W,
                             add_residual=residual is not None)
    # The padded image block index is constant along the row axis, so it stays
    # resident in VMEM across all H grid steps (re-fetched only per batch image).
    in_specs = [pl.BlockSpec((1, H + 2, W + 2, c), lambda n, y: (n, 0, 0, 0))]
    args = [xp]
    if residual is not None:
        in_specs.append(pl.BlockSpec((1, 1, W, c), lambda n, y: (n, y, 0, 0)))
        args.append(residual)
    in_specs += [pl.BlockSpec((9, c, c), lambda n, y: (0, 0, 0)),
                 pl.BlockSpec((1, c), lambda n, y: (0, 0))]
    args += [w9, bias]
    return pl.pallas_call(
        kern,
        out_shape=jax.ShapeDtypeStruct((N, H, W, c), x_nhwc.dtype),
        grid=(N, H),
        in_specs=in_specs,
        out_specs=pl.BlockSpec((1, 1, W, c), lambda n, y: (n, y, 0, 0)),
        compiler_params=pltpu.CompilerParams(
            dimension_semantics=("parallel", "arbitrary")),
    )(*args)


# ----------------------------------------------------------------------------
# Kernel 3: tail = cv3 + outer BN + SiLU + cv4 (+BN+SiLU), concat-free
# ----------------------------------------------------------------------------
def _tail_kernel(b_ref, y2_ref, w3f_ref, ba_ref, sb_ref, bb_ref,
                 w4a_ref, w4b_ref, b4_ref, out_ref):
    a1 = _silu(jnp.dot(b_ref[...], w3f_ref[...],
                       preferred_element_type=jnp.float32) + ba_ref[...])
    a2 = _silu(y2_ref[...] * sb_ref[...] + bb_ref[...])
    y = (jnp.dot(a1, w4a_ref[...], preferred_element_type=jnp.float32)
         + jnp.dot(a2, w4b_ref[...], preferred_element_type=jnp.float32)
         + b4_ref[...])
    out_ref[...] = _silu(y).astype(out_ref.dtype)


def tail_call(b_flat, y2_flat, kp):
    M, c_ = b_flat.shape
    c2 = kp["w4a"].shape[1]
    tm = _choose_tm(M)
    return pl.pallas_call(
        _tail_kernel,
        out_shape=jax.ShapeDtypeStruct((M, c2), b_flat.dtype),
        grid=(M // tm,),
        in_specs=[
            pl.BlockSpec((tm, c_), lambda i: (i, 0)),
            pl.BlockSpec((tm, c_), lambda i: (i, 0)),
            pl.BlockSpec((c_, c_), lambda i: (0, 0)),
            pl.BlockSpec((1, c_), lambda i: (0, 0)),
            pl.BlockSpec((1, c_), lambda i: (0, 0)),
            pl.BlockSpec((1, c_), lambda i: (0, 0)),
            pl.BlockSpec((c_, c2), lambda i: (0, 0)),
            pl.BlockSpec((c_, c2), lambda i: (0, 0)),
            pl.BlockSpec((1, c2), lambda i: (0, 0)),
        ],
        out_specs=pl.BlockSpec((tm, c2), lambda i: (i, 0)),
        compiler_params=pltpu.CompilerParams(dimension_semantics=("parallel",)),
    )(b_flat, y2_flat, kp["w3f"], kp["bn_ba"], kp["bn_sb"], kp["bn_bb"],
      kp["w4a"], kp["w4b"], kp["b4"])


# ----------------------------------------------------------------------------
# BottleneckCSP forward
# ----------------------------------------------------------------------------
def bottleneck_csp_forward(x_nchw, kp, shortcut=True):
    N, C1, H, W = x_nchw.shape
    c_ = kp["w1f"].shape[1]
    x = jnp.transpose(x_nchw, (0, 2, 3, 1))                   # NCHW -> NHWC
    x_flat = x.reshape(N * H * W, C1)

    # cv1 (Conv) and cv2 (plain conv) share one read of x.
    a_flat, y2_flat = head_call(x_flat, kp["w1f"], kp["b1"], kp["w2"])
    a = a_flat.reshape(N, H, W, c_)

    # m = Sequential(Bottleneck(c_, c_, shortcut, e=1.0) x n)
    for bp in kp["bottlenecks"]:
        mid = conv3x3_bn_silu(a, bp["wb1"], bp["bb1"])
        a = conv3x3_bn_silu(mid, bp["wb2"], bp["bb2"],
                            residual=a if shortcut else None)

    # cv3 + BN(cat) + SiLU + cv4, fused and concat-free.
    out_flat = tail_call(a.reshape(N * H * W, c_), y2_flat, kp)
    c2 = out_flat.shape[1]
    return jnp.transpose(out_flat.reshape(N, H, W, c2), (0, 3, 1, 2))


# ----------------------------------------------------------------------------
# Deterministic synthetic parameters + BN folding + pure-JAX reference
# ----------------------------------------------------------------------------
_EPS_CONV = 1e-3   # ultralytics Conv uses BatchNorm2d(eps=1e-3)
_EPS_BN = 1e-5     # standalone nn.BatchNorm2d default


def make_raw_params(c1, c2, n=1, e=0.5, key=None, dtype=jnp.float32):
    c_ = int(c2 * e)
    keys = iter(jax.random.split(key, 16 + 10 * n))

    def nk():
        return next(keys)

    def bn_params(c):
        gamma = 1.0 + 0.1 * jax.random.normal(nk(), (c,), dtype)
        beta = 0.1 * jax.random.normal(nk(), (c,), dtype)
        mean = 0.1 * jax.random.normal(nk(), (c,), dtype)
        var = jnp.abs(1.0 + 0.1 * jax.random.normal(nk(), (c,), dtype))
        return gamma, beta, mean, var

    raw = {
        "cv1_w": 0.3 * jax.random.normal(nk(), (c1, c_), dtype),
        "cv1_bn": bn_params(c_),
        "cv2_w": 0.3 * jax.random.normal(nk(), (c1, c_), dtype),
        "cv3_w": 0.3 * jax.random.normal(nk(), (c_, c_), dtype),
        "bn": bn_params(2 * c_),
        "cv4_w": 0.3 * jax.random.normal(nk(), (2 * c_, c2), dtype),
        "cv4_bn": bn_params(c2),
        "bottlenecks": [
            {"w1": 0.3 * jax.random.normal(nk(), (3, 3, c_, c_), dtype),
             "bn1": bn_params(c_),
             "w2": 0.3 * jax.random.normal(nk(), (3, 3, c_, c_), dtype),
             "bn2": bn_params(c_)}
            for _ in range(n)
        ],
    }
    return raw


def fold_params(raw):
    c_ = raw["cv1_w"].shape[1]
    c2 = raw["cv4_w"].shape[1]

    def fold(bn, eps):
        g, b, m, v = bn
        s = g * jax.lax.rsqrt(v + eps)
        return s, b - m * s

    s1, b1 = fold(raw["cv1_bn"], _EPS_CONV)
    sC, bC = fold(raw["bn"], _EPS_BN)
    s4, b4 = fold(raw["cv4_bn"], _EPS_CONV)
    s_a, b_a = sC[:c_], bC[:c_]
    s_b, b_b = sC[c_:], bC[c_:]
    w4f = raw["cv4_w"] * s4[None, :]

    kp = {
        "w1f": raw["cv1_w"] * s1[None, :],
        "b1": b1.reshape(1, c_),
        "w2": raw["cv2_w"],
        "w3f": raw["cv3_w"] * s_a[None, :],
        "bn_ba": b_a.reshape(1, c_),
        "bn_sb": s_b.reshape(1, c_),
        "bn_bb": b_b.reshape(1, c_),
        "w4a": w4f[:c_],
        "w4b": w4f[c_:],
        "b4": b4.reshape(1, c2),
        "bottlenecks": [],
    }
    for bp in raw["bottlenecks"]:
        sA, bA = fold(bp["bn1"], _EPS_CONV)
        sB, bB = fold(bp["bn2"], _EPS_CONV)
        kp["bottlenecks"].append({
            "wb1": (bp["w1"] * sA[None, None, None, :]).reshape(9, c_, c_),
            "bb1": bA.reshape(1, c_),
            "wb2": (bp["w2"] * sB[None, None, None, :]).reshape(9, c_, c_),
            "bb2": bB.reshape(1, c_),
        })
    return kp


def reference_forward(x_nchw, raw, shortcut=True):
    hi = jax.lax.Precision.HIGHEST

    def bn(t, p, eps):
        g, b, m, v = p
        return (t - m) * (g * jax.lax.rsqrt(v + eps)) + b

    def conv3(t, w):
        return jax.lax.conv_general_dilated(
            t, w, (1, 1), "SAME",
            dimension_numbers=("NHWC", "HWIO", "NHWC"), precision=hi)

    x = jnp.transpose(x_nchw, (0, 2, 3, 1))
    a = _silu(bn(jnp.einsum("nhwc,cd->nhwd", x, raw["cv1_w"], precision=hi),
                 raw["cv1_bn"], _EPS_CONV))
    for bp in raw["bottlenecks"]:
        t = _silu(bn(conv3(a, bp["w1"]), bp["bn1"], _EPS_CONV))
        t = _silu(bn(conv3(t, bp["w2"]), bp["bn2"], _EPS_CONV))
        a = a + t if shortcut else t
    y1 = jnp.einsum("nhwc,cd->nhwd", a, raw["cv3_w"], precision=hi)
    y2 = jnp.einsum("nhwc,cd->nhwd", x, raw["cv2_w"], precision=hi)
    z = _silu(bn(jnp.concatenate([y1, y2], axis=-1), raw["bn"], _EPS_BN))
    out = _silu(bn(jnp.einsum("nhwc,cd->nhwd", z, raw["cv4_w"], precision=hi),
                   raw["cv4_bn"], _EPS_CONV))
    return jnp.transpose(out, (0, 3, 1, 2))


if __name__ == "__main__":
    key = jax.random.PRNGKey(0)
    kx, kparam = jax.random.split(key)

    N, C1, H, W, C2 = 2, 4, 16, 16, 4
    x = jax.random.normal(kx, (N, C1, H, W), jnp.float32)
    raw = make_raw_params(C1, C2, n=1, e=0.5, key=kparam)
    kp = fold_params(raw)

    out = jax.jit(bottleneck_csp_forward)(x, kp)
    jax.block_until_ready(out)
    assert out.shape == (N, C2, H, W), out.shape

    ref = reference_forward(x, raw)
    err = float(jnp.max(jnp.abs(out - ref)))
    assert err < 5e-3, f"max abs err vs reference: {err}"
    print("KERNEL_OK")
</pallas_src>

<mosaic_0001>
module attributes {stable_mosaic.version = 11 : i64} {
  func.func @_head_kernel(%arg0: i32, %arg1: memref<256x4xf32, #tpu.memory_space<vmem>>, %arg2: memref<4x2xf32, #tpu.memory_space<vmem>>, %arg3: memref<1x2xf32, #tpu.memory_space<vmem>>, %arg4: memref<4x2xf32, #tpu.memory_space<vmem>>, %arg5: memref<256x2xf32, #tpu.memory_space<vmem>>, %arg6: memref<256x2xf32, #tpu.memory_space<vmem>>) attributes {dimension_semantics = [#tpu.dimension_semantics<parallel>], iteration_bounds = array<i64: 2>, scalar_prefetch = 0 : i64, scratch_operands = 0 : i64, tpu.core_type = #tpu.core_type<tc>, window_params = [{transform_indices = @transform_0, window_bounds = array<i64: 256, 4>}, {pipeline_mode = #tpu.pipeline_mode<synchronous>, transform_indices = @transform_1, window_bounds = array<i64: 4, 2>}, {pipeline_mode = #tpu.pipeline_mode<synchronous>, transform_indices = @transform_2, window_bounds = array<i64: 1, 2>}, {pipeline_mode = #tpu.pipeline_mode<synchronous>, transform_indices = @transform_3, window_bounds = array<i64: 4, 2>}, {transform_indices = @transform_4, window_bounds = array<i64: 256, 2>}, {transform_indices = @transform_5, window_bounds = array<i64: 256, 2>}]} {
    %c0 = arith.constant 0 : index
    %c0_0 = arith.constant 0 : index
    %0 = vector.load %arg1[%c0, %c0_0] : memref<256x4xf32, #tpu.memory_space<vmem>>, vector<256x4xf32>
    %c0_1 = arith.constant 0 : index
    %c0_2 = arith.constant 0 : index
    %1 = vector.load %arg2[%c0_1, %c0_2] : memref<4x2xf32, #tpu.memory_space<vmem>>, vector<4x2xf32>
    %cst = arith.constant dense<0.000000e+00> : vector<256x2xf32>
    %2 = tpu.matmul %0, %1, %cst {dimension_numbers = #tpu.dot_dimension_numbers<[1], [0], [0], [1], [0, 0, 1, 1], [], []>} : vector<256x4xf32>, vector<4x2xf32>, vector<256x2xf32> -> vector<256x2xf32>
    %c0_3 = arith.constant 0 : index
    %c0_4 = arith.constant 0 : index
    %3 = vector.load %arg3[%c0_3, %c0_4] : memref<1x2xf32, #tpu.memory_space<vmem>>, vector<1x2xf32>
    %4 = vector.broadcast %3 : vector<1x2xf32> to vector<256x2xf32>
    %5 = arith.addf %2, %4 : vector<256x2xf32>
    %6 = arith.negf %5 : vector<256x2xf32>
    %7 = math.exp %6 : vector<256x2xf32>
    %cst_5 = arith.constant 1.000000e+00 : f32
    %8 = vector.broadcast %cst_5 : f32 to vector<256x2xf32>
    %9 = arith.addf %8, %7 : vector<256x2xf32>
    %10 = arith.divf %8, %9 : vector<256x2xf32>
    %11 = arith.mulf %5, %10 : vector<256x2xf32>
    %c0_6 = arith.constant 0 : index
    %c0_7 = arith.constant 0 : index
    %12 = vector.load %arg5[%c0_6, %c0_7] : memref<256x2xf32, #tpu.memory_space<vmem>>, vector<256x2xf32>
    tpu.vector_store %arg5[%c0_6, %c0_7], %11 {strides = array<i32>} : memref<256x2xf32, #tpu.memory_space<vmem>>, vector<256x2xf32>,
    %c0_8 = arith.constant 0 : index
    %c0_9 = arith.constant 0 : index
    %13 = vector.load %arg4[%c0_8, %c0_9] : memref<4x2xf32, #tpu.memory_space<vmem>>, vector<4x2xf32>
    %cst_10 = arith.constant dense<0.000000e+00> : vector<256x2xf32>
    %14 = tpu.matmul %0, %13, %cst_10 {dimension_numbers = #tpu.dot_dimension_numbers<[1], [0], [0], [1], [0, 0, 1, 1], [], []>} : vector<256x4xf32>, vector<4x2xf32>, vector<256x2xf32> -> vector<256x2xf32>
    %c0_11 = arith.constant 0 : index
    %c0_12 = arith.constant 0 : index
    %15 = vector.load %arg6[%c0_11, %c0_12] : memref<256x2xf32, #tpu.memory_space<vmem>>, vector<256x2xf32>
    tpu.vector_store %arg6[%c0_11, %c0_12], %14 {strides = array<i32>} : memref<256x2xf32, #tpu.memory_space<vmem>>, vector<256x2xf32>,
    return
  }
  func.func @transform_0(%arg0: i32) -> (i32, i32) {
    %c0_i32 = arith.constant 0 : i32
    %c0_i32_0 = arith.constant 0 : i32
    return %arg0, %c0_i32 : i32, i32
  }
  func.func @transform_1(%arg0: i32) -> (i32, i32) {
    %c0_i32 = arith.constant 0 : i32
    %c0_i32_0 = arith.constant 0 : i32
    %c0_i32_1 = arith.constant 0 : i32
    return %c0_i32, %c0_i32_0 : i32, i32
  }
  func.func @transform_2(%arg0: i32) -> (i32, i32) {
    %c0_i32 = arith.constant 0 : i32
    %c0_i32_0 = arith.constant 0 : i32
    %c0_i32_1 = arith.constant 0 : i32
    return %c0_i32, %c0_i32_0 : i32, i32
  }
  func.func @transform_3(%arg0: i32) -> (i32, i32) {
    %c0_i32 = arith.constant 0 : i32
    %c0_i32_0 = arith.constant 0 : i32
    %c0_i32_1 = arith.constant 0 : i32
    return %c0_i32, %c0_i32_0 : i32, i32
  }
  func.func @transform_4(%arg0: i32) -> (i32, i32) {
    %c0_i32 = arith.constant 0 : i32
    %c0_i32_0 = arith.constant 0 : i32
    return %arg0, %c0_i32 : i32, i32
  }
  func.func @transform_5(%arg0: i32) -> (i32, i32) {
    %c0_i32 = arith.constant 0 : i32
    %c0_i32_0 = arith.constant 0 : i32
    return %arg0, %c0_i32 : i32, i32
  }
}

module attributes {stable_mosaic.version = 11 : i64} {
  func.func @_conv3x3_row_kernel(%arg0: i32, %arg1: i32, %arg2: memref<1x18x18x2xf32, #tpu.memory_space<vmem>>, %arg3: memref<9x2x2xf32, #tpu.memory_space<vmem>>, %arg4: memref<1x2xf32, #tpu.memory_space<vmem>>, %arg5: memref<1x1x16x2xf32, #tpu.memory_space<vmem>>) attributes {dimension_semantics = [#tpu.dimension_semantics<parallel>, #tpu.dimension_semantics<arbitrary>], iteration_bounds = array<i64: 2, 16>, scalar_prefetch = 0 : i64, scratch_operands = 0 : i64, tpu.core_type = #tpu.core_type<tc>, window_params = [{transform_indices = @transform_0, window_bounds = array<i64: 1, 18, 18, 2>}, {pipeline_mode = #tpu.pipeline_mode<synchronous>, transform_indices = @transform_1, window_bounds = array<i64: 9, 2, 2>}, {pipeline_mode = #tpu.pipeline_mode<synchronous>, transform_indices = @transform_2, window_bounds = array<i64: 1, 2>}, {transform_indices = @transform_3, window_bounds = array<i64: 1, 1, 16, 2>}]} {
    %c0 = arith.constant 0 : index
    %0 = arith.index_cast %arg1 : i32 to index
    %c0_0 = arith.constant 0 : index
    %c0_1 = arith.constant 0 : index
    %1 = vector.load %arg2[%c0, %0, %c0_0, %c0_1] : memref<1x18x18x2xf32, #tpu.memory_space<vmem>>, vector<1x3x18x2xf32>
    %2 = vector.shape_cast %1 : vector<1x3x18x2xf32> to vector<3x18x2xf32>
    %cst = arith.constant 0.000000e+00 : f32
    %3 = vector.broadcast %cst : f32 to vector<16x2xf32>
    %4 = vector.extract_strided_slice %2 {offsets = [0, 0, 0], sizes = [1, 18, 2], strides = [1, 1, 1]} : vector<3x18x2xf32> to vector<1x18x2xf32>
    %5 = vector.shape_cast %4 : vector<1x18x2xf32> to vector<18x2xf32>
    %6 = vector.extract_strided_slice %5 {offsets = [0, 0], sizes = [16, 2], strides = [1, 1]} : vector<18x2xf32> to vector<16x2xf32>
    %c0_2 = arith.constant 0 : index
    %c0_3 = arith.constant 0 : index
    %c0_4 = arith.constant 0 : index
    %7 = vector.load %arg3[%c0_2, %c0_3, %c0_4] : memref<9x2x2xf32, #tpu.memory_space<vmem>>, vector<1x2x2xf32>
    %8 = vector.shape_cast %7 : vector<1x2x2xf32> to vector<2x2xf32>
    %cst_5 = arith.constant dense<0.000000e+00> : vector<16x2xf32>
    %9 = tpu.matmul %6, %8, %cst_5 {dimension_numbers = #tpu.dot_dimension_numbers<[1], [0], [0], [1], [0, 0, 1, 1], [], []>} : vector<16x2xf32>, vector<2x2xf32>, vector<16x2xf32> -> vector<16x2xf32>
    %10 = arith.addf %3, %9 : vector<16x2xf32>
    %11 = vector.extract_strided_slice %5 {offsets = [1, 0], sizes = [16, 2], strides = [1, 1]} : vector<18x2xf32> to vector<16x2xf32>
    %c1 = arith.constant 1 : index
    %c0_6 = arith.constant 0 : index
    %c0_7 = arith.constant 0 : index
    %12 = vector.load %arg3[%c1, %c0_6, %c0_7] : memref<9x2x2xf32, #tpu.memory_space<vmem>>, vector<1x2x2xf32>
    %13 = vector.shape_cast %12 : vector<1x2x2xf32> to vector<2x2xf32>
    %cst_8 = arith.constant dense<0.000000e+00> : vector<16x2xf32>
    %14 = tpu.matmul %11, %13, %cst_8 {dimension_numbers = #tpu.dot_dimension_numbers<[1], [0], [0], [1], [0, 0, 1, 1], [], []>} : vector<16x2xf32>, vector<2x2xf32>, vector<16x2xf32> -> vector<16x2xf32>
    %15 = arith.addf %10, %14 : vector<16x2xf32>
    %16 = vector.extract_strided_slice %5 {offsets = [2, 0], sizes = [16, 2], strides = [1, 1]} : vector<18x2xf32> to vector<16x2xf32>
    %c2 = arith.constant 2 : index
    %c0_9 = arith.constant 0 : index
    %c0_10 = arith.constant 0 : index
    %17 = vector.load %arg3[%c2, %c0_9, %c0_10] : memref<9x2x2xf32, #tpu.memory_space<vmem>>, vector<1x2x2xf32>
    %18 = vector.shape_cast %17 : vector<1x2x2xf32> to vector<2x2xf32>
    %cst_11 = arith.constant dense<0.000000e+00> : vector<16x2xf32>
    %19 = tpu.matmul %16, %18, %cst_11 {dimension_numbers = #tpu.dot_dimension_numbers<[1], [0], [0], [1], [0, 0, 1, 1], [], []>} : vector<16x2xf32>, vector<2x2xf32>, vector<16x2xf32> -> vector<16x2xf32>
    %20 = arith.addf %15, %19 : vector<16x2xf32>
    %21 = vector.extract_strided_slice %2 {offsets = [1, 0, 0], sizes = [1, 18, 2], strides = [1, 1, 1]} : vector<3x18x2xf32> to vector<1x18x2xf32>
    %22 = vector.shape_cast %21 : vector<1x18x2xf32> to vector<18x2xf32>
    %23 = vector.extract_strided_slice %22 {offsets = [0, 0], sizes = [16, 2], strides = [1, 1]} : vector<18x2xf32> to vector<16x2xf32>
    %c3 = arith.constant 3 : index
    %c0_12 = arith.constant 0 : index
    %c0_13 = arith.constant 0 : index
    %24 = vector.load %arg3[%c3, %c0_12, %c0_13] : memref<9x2x2xf32, #tpu.memory_space<vmem>>, vector<1x2x2xf32>
    %25 = vector.shape_cast %24 : vector<1x2x2xf32> to vector<2x2xf32>
    %cst_14 = arith.constant dense<0.000000e+00> : vector<16x2xf32>
    %26 = tpu.matmul %23, %25, %cst_14 {dimension_numbers = #tpu.dot_dimension_numbers<[1], [0], [0], [1], [0, 0, 1, 1], [], []>} : vector<16x2xf32>, vector<2x2xf32>, vector<16x2xf32> -> vector<16x2xf32>
    %27 = arith.addf %20, %26 : vector<16x2xf32>
    %28 = vector.extract_strided_slice %22 {offsets = [1, 0], sizes = [16, 2], strides = [1, 1]} : vector<18x2xf32> to vector<16x2xf32>
    %c4 = arith.constant 4 : index
    %c0_15 = arith.constant 0 : index
    %c0_16 = arith.constant 0 : index
    %29 = vector.load %arg3[%c4, %c0_15, %c0_16] : memref<9x2x2xf32, #tpu.memory_space<vmem>>, vector<1x2x2xf32>
    %30 = vector.shape_cast %29 : vector<1x2x2xf32> to vector<2x2xf32>
    %cst_17 = arith.constant dense<0.000000e+00> : vector<16x2xf32>
    %31 = tpu.matmul %28, %30, %cst_17 {dimension_numbers = #tpu.dot_dimension_numbers<[1], [0], [0], [1], [0, 0, 1, 1], [], []>} : vector<16x2xf32>, vector<2x2xf32>, vector<16x2xf32> -> vector<16x2xf32>
    %32 = arith.addf %27, %31 : vector<16x2xf32>
    %33 = vector.extract_strided_slice %22 {offsets = [2, 0], sizes = [16, 2], strides = [1, 1]} : vector<18x2xf32> to vector<16x2xf32>
    %c5 = arith.constant 5 : index
    %c0_18 = arith.constant 0 : index
    %c0_19 = arith.constant 0 : index
    %34 = vector.load %arg3[%c5, %c0_18, %c0_19] : memref<9x2x2xf32, #tpu.memory_space<vmem>>, vector<1x2x2xf32>
    %35 = vector.shape_cast %34 : vector<1x2x2xf32> to vector<2x2xf32>
    %cst_20 = arith.constant dense<0.000000e+00> : vector<16x2xf32>
    %36 = tpu.matmul %33, %35, %cst_20 {dimension_numbers = #tpu.dot_dimension_numbers<[1], [0], [0], [1], [0, 0, 1, 1], [], []>} : vector<16x2xf32>, vector<2x2xf32>, vector<16x2xf32> -> vector<16x2xf32>
    %37 = arith.addf %32, %36 : vector<16x2xf32>
    %38 = vector.extract_strided_slice %2 {offsets = [2, 0, 0], sizes = [1, 18, 2], strides = [1, 1, 1]} : vector<3x18x2xf32> to vector<1x18x2xf32>
    %39 = vector.shape_cast %38 : vector<1x18x2xf32> to vector<18x2xf32>
    %40 = vector.extract_strided_slice %39 {offsets = [0, 0], sizes = [16, 2], strides = [1, 1]} : vector<18x2xf32> to vector<16x2xf32>
    %c6 = arith.constant 6 : index
    %c0_21 = arith.constant 0 : index
    %c0_22 = arith.constant 0 : index
    %41 = vector.load %arg3[%c6, %c0_21, %c0_22] : memref<9x2x2xf32, #tpu.memory_space<vmem>>, vector<1x2x2xf32>
    %42 = vector.shape_cast %41 : vector<1x2x2xf32> to vector<2x2xf32>
    %cst_23 = arith.constant dense<0.000000e+00> : vector<16x2xf32>
    %43 = tpu.matmul %40, %42, %cst_23 {dimension_numbers = #tpu.dot_dimension_numbers<[1], [0], [0], [1], [0, 0, 1, 1], [], []>} : vector<16x2xf32>, vector<2x2xf32>, vector<16x2xf32> -> vector<16x2xf32>
    %44 = arith.addf %37, %43 : vector<16x2xf32>
    %45 = vector.extract_strided_slice %39 {offsets = [1, 0], sizes = [16, 2], strides = [1, 1]} : vector<18x2xf32> to vector<16x2xf32>
    %c7 = arith.constant 7 : index
    %c0_24 = arith.constant 0 : index
    %c0_25 = arith.constant 0 : index
    %46 = vector.load %arg3[%c7, %c0_24, %c0_25] : memref<9x2x2xf32, #tpu.memory_space<vmem>>, vector<1x2x2xf32>
    %47 = vector.shape_cast %46 : vector<1x2x2xf32> to vector<2x2xf32>
    %cst_26 = arith.constant dense<0.000000e+00> : vector<16x2xf32>
    %48 = tpu.matmul %45, %47, %cst_26 {dimension_numbers = #tpu.dot_dimension_numbers<[1], [0], [0], [1], [0, 0, 1, 1], [], []>} : vector<16x2xf32>, vector<2x2xf32>, vector<16x2xf32> -> vector<16x2xf32>
    %49 = arith.addf %44, %48 : vector<16x2xf32>
    %50 = vector.extract_strided_slice %39 {offsets = [2, 0], sizes = [16, 2], strides = [1, 1]} : vector<18x2xf32> to vector<16x2xf32>
    %c8 = arith.constant 8 : index
    %c0_27 = arith.constant 0 : index
    %c0_28 = arith.constant 0 : index
    %51 = vector.load %arg3[%c8, %c0_27, %c0_28] : memref<9x2x2xf32, #tpu.memory_space<vmem>>, vector<1x2x2xf32>
    %52 = vector.shape_cast %51 : vector<1x2x2xf32> to vector<2x2xf32>
    %cst_29 = arith.constant dense<0.000000e+00> : vector<16x2xf32>
    %53 = tpu.matmul %50, %52, %cst_29 {dimension_numbers = #tpu.dot_dimension_numbers<[1], [0], [0], [1], [0, 0, 1, 1], [], []>} : vector<16x2xf32>, vector<2x2xf32>, vector<16x2xf32> -> vector<16x2xf32>
    %54 = arith.addf %49, %53 : vector<16x2xf32>
    %c0_30 = arith.constant 0 : index
    %c0_31 = arith.constant 0 : index
    %55 = vector.load %arg4[%c0_30, %c0_31] : memref<1x2xf32, #tpu.memory_space<vmem>>, vector<1x2xf32>
    %56 = vector.broadcast %55 : vector<1x2xf32> to vector<16x2xf32>
    %57 = arith.addf %54, %56 : vector<16x2xf32>
    %58 = arith.negf %57 : vector<16x2xf32>
    %59 = math.exp %58 : vector<16x2xf32>
    %cst_32 = arith.constant 1.000000e+00 : f32
    %60 = vector.broadcast %cst_32 : f32 to vector<16x2xf32>
    %61 = arith.addf %60, %59 : vector<16x2xf32>
    %62 = arith.divf %60, %61 : vector<16x2xf32>
    %63 = arith.mulf %57, %62 : vector<16x2xf32>
    %c0_33 = arith.constant 0 : index
    %c0_34 = arith.constant 0 : index
    %c0_35 = arith.constant 0 : index
    %c0_36 = arith.constant 0 : index
    %64 = vector.load %arg5[%c0_33, %c0_34, %c0_35, %c0_36] : memref<1x1x16x2xf32, #tpu.memory_space<vmem>>, vector<1x1x16x2xf32>
    %65 = vector.shape_cast %64 : vector<1x1x16x2xf32> to vector<16x2xf32>
    %66 = vector.shape_cast %63 : vector<16x2xf32> to vector<1x1x16x2xf32>
    tpu.vector_store %arg5[%c0_33, %c0_34, %c0_35, %c0_36], %66 {strides = array<i32>} : memref<1x1x16x2xf32, #tpu.memory_space<vmem>>, vector<1x1x16x2xf32>,
    return
  }
  func.func @transform_0(%arg0: i32, %arg1: i32) -> (i32, i32, i32, i32) {
    %c0_i32 = arith.constant 0 : i32
    %c0_i32_0 = arith.constant 0 : i32
    %c0_i32_1 = arith.constant 0 : i32
    %c0_i32_2 = arith.constant 0 : i32
    return %arg0, %c0_i32, %c0_i32_0, %c0_i32_1 : i32, i32, i32, i32
  }
  func.func @transform_1(%arg0: i32, %arg1: i32) -> (i32, i32, i32) {
    %c0_i32 = arith.constant 0 : i32
    %c0_i32_0 = arith.constant 0 : i32
    %c0_i32_1 = arith.constant 0 : i32
    %c0_i32_2 = arith.constant 0 : i32
    return %c0_i32, %c0_i32_0, %c0_i32_1 : i32, i32, i32
  }
  func.func @transform_2(%arg0: i32, %arg1: i32) -> (i32, i32) {
    %c0_i32 = arith.constant 0 : i32
    %c0_i32_0 = arith.constant 0 : i32
    %c0_i32_1 = arith.constant 0 : i32
    return %c0_i32, %c0_i32_0 : i32, i32
  }
  func.func @transform_3(%arg0: i32, %arg1: i32) -> (i32, i32, i32, i32) {
    %c0_i32 = arith.constant 0 : i32
    %c0_i32_0 = arith.constant 0 : i32
    %c0_i32_1 = arith.constant 0 : i32
    return %arg0, %arg1, %c0_i32, %c0_i32_0 : i32, i32, i32, i32
  }
}

module attributes {stable_mosaic.version = 11 : i64} {
  func.func @_conv3x3_row_kernel(%arg0: i32, %arg1: i32, %arg2: memref<1x18x18x2xf32, #tpu.memory_space<vmem>>, %arg3: memref<1x1x16x2xf32, #tpu.memory_space<vmem>>, %arg4: memref<9x2x2xf32, #tpu.memory_space<vmem>>, %arg5: memref<1x2xf32, #tpu.memory_space<vmem>>, %arg6: memref<1x1x16x2xf32, #tpu.memory_space<vmem>>) attributes {dimension_semantics = [#tpu.dimension_semantics<parallel>, #tpu.dimension_semantics<arbitrary>], iteration_bounds = array<i64: 2, 16>, scalar_prefetch = 0 : i64, scratch_operands = 0 : i64, tpu.core_type = #tpu.core_type<tc>, window_params = [{transform_indices = @transform_0, window_bounds = array<i64: 1, 18, 18, 2>}, {transform_indices = @transform_1, window_bounds = array<i64: 1, 1, 16, 2>}, {pipeline_mode = #tpu.pipeline_mode<synchronous>, transform_indices = @transform_2, window_bounds = array<i64: 9, 2, 2>}, {pipeline_mode = #tpu.pipeline_mode<synchronous>, transform_indices = @transform_3, window_bounds = array<i64: 1, 2>}, {transform_indices = @transform_4, window_bounds = array<i64: 1, 1, 16, 2>}]} {
    %c0 = arith.constant 0 : index
    %0 = arith.index_cast %arg1 : i32 to index
    %c0_0 = arith.constant 0 : index
    %c0_1 = arith.constant 0 : index
    %1 = vector.load %arg2[%c0, %0, %c0_0, %c0_1] : memref<1x18x18x2xf32, #tpu.memory_space<vmem>>, vector<1x3x18x2xf32>
    %2 = vector.shape_cast %1 : vector<1x3x18x2xf32> to vector<3x18x2xf32>
    %cst = arith.constant 0.000000e+00 : f32
    %3 = vector.broadcast %cst : f32 to vector<16x2xf32>
    %4 = vector.extract_strided_slice %2 {offsets = [0, 0, 0], sizes = [1, 18, 2], strides = [1, 1, 1]} : vector<3x18x2xf32> to vector<1x18x2xf32>
    %5 = vector.shape_cast %4 : vector<1x18x2xf32> to vector<18x2xf32>
    %6 = vector.extract_strided_slice %5 {offsets = [0, 0], sizes = [16, 2], strides = [1, 1]} : vector<18x2xf32> to vector<16x2xf32>
    %c0_2 = arith.constant 0 : index
    %c0_3 = arith.constant 0 : index
    %c0_4 = arith.constant 0 : index
    %7 = vector.load %arg4[%c0_2, %c0_3, %c0_4] : memref<9x2x2xf32, #tpu.memory_space<vmem>>, vector<1x2x2xf32>
    %8 = vector.shape_cast %7 : vector<1x2x2xf32> to vector<2x2xf32>
    %cst_5 = arith.constant dense<0.000000e+00> : vector<16x2xf32>
    %9 = tpu.matmul %6, %8, %cst_5 {dimension_numbers = #tpu.dot_dimension_numbers<[1], [0], [0], [1], [0, 0, 1, 1], [], []>} : vector<16x2xf32>, vector<2x2xf32>, vector<16x2xf32> -> vector<16x2xf32>
    %10 = arith.addf %3, %9 : vector<16x2xf32>
    %11 = vector.extract_strided_slice %5 {offsets = [1, 0], sizes = [16, 2], strides = [1, 1]} : vector<18x2xf32> to vector<16x2xf32>
    %c1 = arith.constant 1 : index
    %c0_6 = arith.constant 0 : index
    %c0_7 = arith.constant 0 : index
    %12 = vector.load %arg4[%c1, %c0_6, %c0_7] : memref<9x2x2xf32, #tpu.memory_space<vmem>>, vector<1x2x2xf32>
    %13 = vector.shape_cast %12 : vector<1x2x2xf32> to vector<2x2xf32>
    %cst_8 = arith.constant dense<0.000000e+00> : vector<16x2xf32>
    %14 = tpu.matmul %11, %13, %cst_8 {dimension_numbers = #tpu.dot_dimension_numbers<[1], [0], [0], [1], [0, 0, 1, 1], [], []>} : vector<16x2xf32>, vector<2x2xf32>, vector<16x2xf32> -> vector<16x2xf32>
    %15 = arith.addf %10, %14 : vector<16x2xf32>
    %16 = vector.extract_strided_slice %5 {offsets = [2, 0], sizes = [16, 2], strides = [1, 1]} : vector<18x2xf32> to vector<16x2xf32>
    %c2 = arith.constant 2 : index
    %c0_9 = arith.constant 0 : index
    %c0_10 = arith.constant 0 : index
    %17 = vector.load %arg4[%c2, %c0_9, %c0_10] : memref<9x2x2xf32, #tpu.memory_space<vmem>>, vector<1x2x2xf32>
    %18 = vector.shape_cast %17 : vector<1x2x2xf32> to vector<2x2xf32>
    %cst_11 = arith.constant dense<0.000000e+00> : vector<16x2xf32>
    %19 = tpu.matmul %16, %18, %cst_11 {dimension_numbers = #tpu.dot_dimension_numbers<[1], [0], [0], [1], [0, 0, 1, 1], [], []>} : vector<16x2xf32>, vector<2x2xf32>, vector<16x2xf32> -> vector<16x2xf32>
    %20 = arith.addf %15, %19 : vector<16x2xf32>
    %21 = vector.extract_strided_slice %2 {offsets = [1, 0, 0], sizes = [1, 18, 2], strides = [1, 1, 1]} : vector<3x18x2xf32> to vector<1x18x2xf32>
    %22 = vector.shape_cast %21 : vector<1x18x2xf32> to vector<18x2xf32>
    %23 = vector.extract_strided_slice %22 {offsets = [0, 0], sizes = [16, 2], strides = [1, 1]} : vector<18x2xf32> to vector<16x2xf32>
    %c3 = arith.constant 3 : index
    %c0_12 = arith.constant 0 : index
    %c0_13 = arith.constant 0 : index
    %24 = vector.load %arg4[%c3, %c0_12, %c0_13] : memref<9x2x2xf32, #tpu.memory_space<vmem>>, vector<1x2x2xf32>
    %25 = vector.shape_cast %24 : vector<1x2x2xf32> to vector<2x2xf32>
    %cst_14 = arith.constant dense<0.000000e+00> : vector<16x2xf32>
    %26 = tpu.matmul %23, %25, %cst_14 {dimension_numbers = #tpu.dot_dimension_numbers<[1], [0], [0], [1], [0, 0, 1, 1], [], []>} : vector<16x2xf32>, vector<2x2xf32>, vector<16x2xf32> -> vector<16x2xf32>
    %27 = arith.addf %20, %26 : vector<16x2xf32>
    %28 = vector.extract_strided_slice %22 {offsets = [1, 0], sizes = [16, 2], strides = [1, 1]} : vector<18x2xf32> to vector<16x2xf32>
    %c4 = arith.constant 4 : index
    %c0_15 = arith.constant 0 : index
    %c0_16 = arith.constant 0 : index
    %29 = vector.load %arg4[%c4, %c0_15, %c0_16] : memref<9x2x2xf32, #tpu.memory_space<vmem>>, vector<1x2x2xf32>
    %30 = vector.shape_cast %29 : vector<1x2x2xf32> to vector<2x2xf32>
    %cst_17 = arith.constant dense<0.000000e+00> : vector<16x2xf32>
    %31 = tpu.matmul %28, %30, %cst_17 {dimension_numbers = #tpu.dot_dimension_numbers<[1], [0], [0], [1], [0, 0, 1, 1], [], []>} : vector<16x2xf32>, vector<2x2xf32>, vector<16x2xf32> -> vector<16x2xf32>
    %32 = arith.addf %27, %31 : vector<16x2xf32>
    %33 = vector.extract_strided_slice %22 {offsets = [2, 0], sizes = [16, 2], strides = [1, 1]} : vector<18x2xf32> to vector<16x2xf32>
    %c5 = arith.constant 5 : index
    %c0_18 = arith.constant 0 : index
    %c0_19 = arith.constant 0 : index
    %34 = vector.load %arg4[%c5, %c0_18, %c0_19] : memref<9x2x2xf32, #tpu.memory_space<vmem>>, vector<1x2x2xf32>
    %35 = vector.shape_cast %34 : vector<1x2x2xf32> to vector<2x2xf32>
    %cst_20 = arith.constant dense<0.000000e+00> : vector<16x2xf32>
    %36 = tpu.matmul %33, %35, %cst_20 {dimension_numbers = #tpu.dot_dimension_numbers<[1], [0], [0], [1], [0, 0, 1, 1], [], []>} : vector<16x2xf32>, vector<2x2xf32>, vector<16x2xf32> -> vector<16x2xf32>
    %37 = arith.addf %32, %36 : vector<16x2xf32>
    %38 = vector.extract_strided_slice %2 {offsets = [2, 0, 0], sizes = [1, 18, 2], strides = [1, 1, 1]} : vector<3x18x2xf32> to vector<1x18x2xf32>
    %39 = vector.shape_cast %38 : vector<1x18x2xf32> to vector<18x2xf32>
    %40 = vector.extract_strided_slice %39 {offsets = [0, 0], sizes = [16, 2], strides = [1, 1]} : vector<18x2xf32> to vector<16x2xf32>
    %c6 = arith.constant 6 : index
    %c0_21 = arith.constant 0 : index
    %c0_22 = arith.constant 0 : index
    %41 = vector.load %arg4[%c6, %c0_21, %c0_22] : memref<9x2x2xf32, #tpu.memory_space<vmem>>, vector<1x2x2xf32>
    %42 = vector.shape_cast %41 : vector<1x2x2xf32> to vector<2x2xf32>
    %cst_23 = arith.constant dense<0.000000e+00> : vector<16x2xf32>
    %43 = tpu.matmul %40, %42, %cst_23 {dimension_numbers = #tpu.dot_dimension_numbers<[1], [0], [0], [1], [0, 0, 1, 1], [], []>} : vector<16x2xf32>, vector<2x2xf32>, vector<16x2xf32> -> vector<16x2xf32>
    %44 = arith.addf %37, %43 : vector<16x2xf32>
    %45 = vector.extract_strided_slice %39 {offsets = [1, 0], sizes = [16, 2], strides = [1, 1]} : vector<18x2xf32> to vector<16x2xf32>
    %c7 = arith.constant 7 : index
    %c0_24 = arith.constant 0 : index
    %c0_25 = arith.constant 0 : index
    %46 = vector.load %arg4[%c7, %c0_24, %c0_25] : memref<9x2x2xf32, #tpu.memory_space<vmem>>, vector<1x2x2xf32>
    %47 = vector.shape_cast %46 : vector<1x2x2xf32> to vector<2x2xf32>
    %cst_26 = arith.constant dense<0.000000e+00> : vector<16x2xf32>
    %48 = tpu.matmul %45, %47, %cst_26 {dimension_numbers = #tpu.dot_dimension_numbers<[1], [0], [0], [1], [0, 0, 1, 1], [], []>} : vector<16x2xf32>, vector<2x2xf32>, vector<16x2xf32> -> vector<16x2xf32>
    %49 = arith.addf %44, %48 : vector<16x2xf32>
    %50 = vector.extract_strided_slice %39 {offsets = [2, 0], sizes = [16, 2], strides = [1, 1]} : vector<18x2xf32> to vector<16x2xf32>
    %c8 = arith.constant 8 : index
    %c0_27 = arith.constant 0 : index
    %c0_28 = arith.constant 0 : index
    %51 = vector.load %arg4[%c8, %c0_27, %c0_28] : memref<9x2x2xf32, #tpu.memory_space<vmem>>, vector<1x2x2xf32>
    %52 = vector.shape_cast %51 : vector<1x2x2xf32> to vector<2x2xf32>
    %cst_29 = arith.constant dense<0.000000e+00> : vector<16x2xf32>
    %53 = tpu.matmul %50, %52, %cst_29 {dimension_numbers = #tpu.dot_dimension_numbers<[1], [0], [0], [1], [0, 0, 1, 1], [], []>} : vector<16x2xf32>, vector<2x2xf32>, vector<16x2xf32> -> vector<16x2xf32>
    %54 = arith.addf %49, %53 : vector<16x2xf32>
    %c0_30 = arith.constant 0 : index
    %c0_31 = arith.constant 0 : index
    %55 = vector.load %arg5[%c0_30, %c0_31] : memref<1x2xf32, #tpu.memory_space<vmem>>, vector<1x2xf32>
    %56 = vector.broadcast %55 : vector<1x2xf32> to vector<16x2xf32>
    %57 = arith.addf %54, %56 : vector<16x2xf32>
    %58 = arith.negf %57 : vector<16x2xf32>
    %59 = math.exp %58 : vector<16x2xf32>
    %cst_32 = arith.constant 1.000000e+00 : f32
    %60 = vector.broadcast %cst_32 : f32 to vector<16x2xf32>
    %61 = arith.addf %60, %59 : vector<16x2xf32>
    %62 = arith.divf %60, %61 : vector<16x2xf32>
    %63 = arith.mulf %57, %62 : vector<16x2xf32>
    %c0_33 = arith.constant 0 : index
    %c0_34 = arith.constant 0 : index
    %c0_35 = arith.constant 0 : index
    %c0_36 = arith.constant 0 : index
    %64 = vector.load %arg3[%c0_33, %c0_34, %c0_35, %c0_36] : memref<1x1x16x2xf32, #tpu.memory_space<vmem>>, vector<1x1x16x2xf32>
    %65 = vector.shape_cast %64 : vector<1x1x16x2xf32> to vector<16x2xf32>
    %66 = arith.addf %63, %65 : vector<16x2xf32>
    %c0_37 = arith.constant 0 : index
    %c0_38 = arith.constant 0 : index
    %c0_39 = arith.constant 0 : index
    %c0_40 = arith.constant 0 : index
    %67 = vector.load %arg6[%c0_37, %c0_38, %c0_39, %c0_40] : memref<1x1x16x2xf32, #tpu.memory_space<vmem>>, vector<1x1x16x2xf32>
    %68 = vector.shape_cast %67 : vector<1x1x16x2xf32> to vector<16x2xf32>
    %69 = vector.shape_cast %66 : vector<16x2xf32> to vector<1x1x16x2xf32>
    tpu.vector_store %arg6[%c0_37, %c0_38, %c0_39, %c0_40], %69 {strides = array<i32>} : memref<1x1x16x2xf32, #tpu.memory_space<vmem>>, vector<1x1x16x2xf32>,
    return
  }
  func.func @transform_0(%arg0: i32, %arg1: i32) -> (i32, i32, i32, i32) {
    %c0_i32 = arith.constant 0 : i32
    %c0_i32_0 = arith.constant 0 : i32
    %c0_i32_1 = arith.constant 0 : i32
    %c0_i32_2 = arith.constant 0 : i32
    return %arg0, %c0_i32, %c0_i32_0, %c0_i32_1 : i32, i32, i32, i32
  }
  func.func @transform_1(%arg0: i32, %arg1: i32) -> (i32, i32, i32, i32) {
    %c0_i32 = arith.constant 0 : i32
    %c0_i32_0 = arith.constant 0 : i32
    %c0_i32_1 = arith.constant 0 : i32
    return %arg0, %arg1, %c0_i32, %c0_i32_0 : i32, i32, i32, i32
  }
  func.func @transform_2(%arg0: i32, %arg1: i32) -> (i32, i32, i32) {
    %c0_i32 = arith.constant 0 : i32
    %c0_i32_0 = arith.constant 0 : i32
    %c0_i32_1 = arith.constant 0 : i32
    %c0_i32_2 = arith.constant 0 : i32
    return %c0_i32, %c0_i32_0, %c0_i32_1 : i32, i32, i32
  }
  func.func @transform_3(%arg0: i32, %arg1: i32) -> (i32, i32) {
    %c0_i32 = arith.constant 0 : i32
    %c0_i32_0 = arith.constant 0 : i32
    %c0_i32_1 = arith.constant 0 : i32
    return %c0_i32, %c0_i32_0 : i32, i32
  }
  func.func @transform_4(%arg0: i32, %arg1: i32) -> (i32, i32, i32, i32) {
    %c0_i32 = arith.constant 0 : i32
    %c0_i32_0 = arith.constant 0 : i32
    %c0_i32_1 = arith.constant 0 : i32
    return %arg0, %arg1, %c0_i32, %c0_i32_0 : i32, i32, i32, i32
  }
}

module attributes {stable_mosaic.version = 11 : i64} {
  func.func @_tail_kernel(%arg0: i32, %arg1: memref<256x2xf32, #tpu.memory_space<vmem>>, %arg2: memref<256x2xf32, #tpu.memory_space<vmem>>, %arg3: memref<2x2xf32, #tpu.memory_space<vmem>>, %arg4: memref<1x2xf32, #tpu.memory_space<vmem>>, %arg5: memref<1x2xf32, #tpu.memory_space<vmem>>, %arg6: memref<1x2xf32, #tpu.memory_space<vmem>>, %arg7: memref<2x4xf32, #tpu.memory_space<vmem>>, %arg8: memref<2x4xf32, #tpu.memory_space<vmem>>, %arg9: memref<1x4xf32, #tpu.memory_space<vmem>>, %arg10: memref<256x4xf32, #tpu.memory_space<vmem>>) attributes {dimension_semantics = [#tpu.dimension_semantics<parallel>], iteration_bounds = array<i64: 2>, scalar_prefetch = 0 : i64, scratch_operands = 0 : i64, tpu.core_type = #tpu.core_type<tc>, window_params = [{transform_indices = @transform_0, window_bounds = array<i64: 256, 2>}, {transform_indices = @transform_1, window_bounds = array<i64: 256, 2>}, {pipeline_mode = #tpu.pipeline_mode<synchronous>, transform_indices = @transform_2, window_bounds = array<i64: 2, 2>}, {pipeline_mode = #tpu.pipeline_mode<synchronous>, transform_indices = @transform_3, window_bounds = array<i64: 1, 2>}, {pipeline_mode = #tpu.pipeline_mode<synchronous>, transform_indices = @transform_4, window_bounds = array<i64: 1, 2>}, {pipeline_mode = #tpu.pipeline_mode<synchronous>, transform_indices = @transform_5, window_bounds = array<i64: 1, 2>}, {pipeline_mode = #tpu.pipeline_mode<synchronous>, transform_indices = @transform_6, window_bounds = array<i64: 2, 4>}, {pipeline_mode = #tpu.pipeline_mode<synchronous>, transform_indices = @transform_7, window_bounds = array<i64: 2, 4>}, {pipeline_mode = #tpu.pipeline_mode<synchronous>, transform_indices = @transform_8, window_bounds = array<i64: 1, 4>}, {transform_indices = @transform_9, window_bounds = array<i64: 256, 4>}]} {
    %c0 = arith.constant 0 : index
    %c0_0 = arith.constant 0 : index
    %0 = vector.load %arg1[%c0, %c0_0] : memref<256x2xf32, #tpu.memory_space<vmem>>, vector<256x2xf32>
    %c0_1 = arith.constant 0 : index
    %c0_2 = arith.constant 0 : index
    %1 = vector.load %arg3[%c0_1, %c0_2] : memref<2x2xf32, #tpu.memory_space<vmem>>, vector<2x2xf32>
    %cst = arith.constant dense<0.000000e+00> : vector<256x2xf32>
    %2 = tpu.matmul %0, %1, %cst {dimension_numbers = #tpu.dot_dimension_numbers<[1], [0], [0], [1], [0, 0, 1, 1], [], []>} : vector<256x2xf32>, vector<2x2xf32>, vector<256x2xf32> -> vector<256x2xf32>
    %c0_3 = arith.constant 0 : index
    %c0_4 = arith.constant 0 : index
    %3 = vector.load %arg4[%c0_3, %c0_4] : memref<1x2xf32, #tpu.memory_space<vmem>>, vector<1x2xf32>
    %4 = vector.broadcast %3 : vector<1x2xf32> to vector<256x2xf32>
    %5 = arith.addf %2, %4 : vector<256x2xf32>
    %6 = arith.negf %5 : vector<256x2xf32>
    %7 = math.exp %6 : vector<256x2xf32>
    %cst_5 = arith.constant 1.000000e+00 : f32
    %8 = vector.broadcast %cst_5 : f32 to vector<256x2xf32>
    %9 = arith.addf %8, %7 : vector<256x2xf32>
    %10 = arith.divf %8, %9 : vector<256x2xf32>
    %11 = arith.mulf %5, %10 : vector<256x2xf32>
    %c0_6 = arith.constant 0 : index
    %c0_7 = arith.constant 0 : index
    %12 = vector.load %arg2[%c0_6, %c0_7] : memref<256x2xf32, #tpu.memory_space<vmem>>, vector<256x2xf32>
    %c0_8 = arith.constant 0 : index
    %c0_9 = arith.constant 0 : index
    %13 = vector.load %arg5[%c0_8, %c0_9] : memref<1x2xf32, #tpu.memory_space<vmem>>, vector<1x2xf32>
    %14 = vector.broadcast %13 : vector<1x2xf32> to vector<256x2xf32>
    %15 = arith.mulf %12, %14 : vector<256x2xf32>
    %c0_10 = arith.constant 0 : index
    %c0_11 = arith.constant 0 : index
    %16 = vector.load %arg6[%c0_10, %c0_11] : memref<1x2xf32, #tpu.memory_space<vmem>>, vector<1x2xf32>
    %17 = vector.broadcast %16 : vector<1x2xf32> to vector<256x2xf32>
    %18 = arith.addf %15, %17 : vector<256x2xf32>
    %19 = arith.negf %18 : vector<256x2xf32>
    %20 = math.exp %19 : vector<256x2xf32>
    %cst_12 = arith.constant 1.000000e+00 : f32
    %21 = vector.broadcast %cst_12 : f32 to vector<256x2xf32>
    %22 = arith.addf %21, %20 : vector<256x2xf32>
    %23 = arith.divf %21, %22 : vector<256x2xf32>
    %24 = arith.mulf %18, %23 : vector<256x2xf32>
    %c0_13 = arith.constant 0 : index
    %c0_14 = arith.constant 0 : index
    %25 = vector.load %arg7[%c0_13, %c0_14] : memref<2x4xf32, #tpu.memory_space<vmem>>, vector<2x4xf32>
    %cst_15 = arith.constant dense<0.000000e+00> : vector<256x4xf32>
    %26 = tpu.matmul %11, %25, %cst_15 {dimension_numbers = #tpu.dot_dimension_numbers<[1], [0], [0], [1], [0, 0, 1, 1], [], []>} : vector<256x2xf32>, vector<2x4xf32>, vector<256x4xf32> -> vector<256x4xf32>
    %c0_16 = arith.constant 0 : index
    %c0_17 = arith.constant 0 : index
    %27 = vector.load %arg8[%c0_16, %c0_17] : memref<2x4xf32, #tpu.memory_space<vmem>>, vector<2x4xf32>
    %cst_18 = arith.constant dense<0.000000e+00> : vector<256x4xf32>
    %28 = tpu.matmul %24, %27, %cst_18 {dimension_numbers = #tpu.dot_dimension_numbers<[1], [0], [0], [1], [0, 0, 1, 1], [], []>} : vector<256x2xf32>, vector<2x4xf32>, vector<256x4xf32> -> vector<256x4xf32>
    %29 = arith.addf %26, %28 : vector<256x4xf32>
    %c0_19 = arith.constant 0 : index
    %c0_20 = arith.constant 0 : index
    %30 = vector.load %arg9[%c0_19, %c0_20] : memref<1x4xf32, #tpu.memory_space<vmem>>, vector<1x4xf32>
    %31 = vector.broadcast %30 : vector<1x4xf32> to vector<256x4xf32>
    %32 = arith.addf %29, %31 : vector<256x4xf32>
    %33 = arith.negf %32 : vector<256x4xf32>
    %34 = math.exp %33 : vector<256x4xf32>
    %cst_21 = arith.constant 1.000000e+00 : f32
    %35 = vector.broadcast %cst_21 : f32 to vector<256x4xf32>
    %36 = arith.addf %35, %34 : vector<256x4xf32>
    %37 = arith.divf %35, %36 : vector<256x4xf32>
    %38 = arith.mulf %32, %37 : vector<256x4xf32>
    %c0_22 = arith.constant 0 : index
    %c0_23 = arith.constant 0 : index
    %39 = vector.load %arg10[%c0_22, %c0_23] : memref<256x4xf32, #tpu.memory_space<vmem>>, vector<256x4xf32>
    tpu.vector_store %arg10[%c0_22, %c0_23], %38 {strides = array<i32>} : memref<256x4xf32, #tpu.memory_space<vmem>>, vector<256x4xf32>,
    return
  }
  func.func @transform_0(%arg0: i32) -> (i32, i32) {
    %c0_i32 = arith.constant 0 : i32
    %c0_i32_0 = arith.constant 0 : i32
    return %arg0, %c0_i32 : i32, i32
  }
  func.func @transform_1(%arg0: i32) -> (i32, i32) {
    %c0_i32 = arith.constant 0 : i32
    %c0_i32_0 = arith.constant 0 : i32
    return %arg0, %c0_i32 : i32, i32
  }
  func.func @transform_2(%arg0: i32) -> (i32, i32) {
    %c0_i32 = arith.constant 0 : i32
    %c0_i32_0 = arith.constant 0 : i32
    %c0_i32_1 = arith.constant 0 : i32
    return %c0_i32, %c0_i32_0 : i32, i32
  }
  func.func @transform_3(%arg0: i32) -> (i32, i32) {
    %c0_i32 = arith.constant 0 : i32
    %c0_i32_0 = arith.constant 0 : i32
    %c0_i32_1 = arith.constant 0 : i32
    return %c0_i32, %c0_i32_0 : i32, i32
  }
  func.func @transform_4(%arg0: i32) -> (i32, i32) {
    %c0_i32 = arith.constant 0 : i32
    %c0_i32_0 = arith.constant 0 : i32
    %c0_i32_1 = arith.constant 0 : i32
    return %c0_i32, %c0_i32_0 : i32, i32
  }
  func.func @transform_5(%arg0: i32) -> (i32, i32) {
    %c0_i32 = arith.constant 0 : i32
    %c0_i32_0 = arith.constant 0 : i32
    %c0_i32_1 = arith.constant 0 : i32
    return %c0_i32, %c0_i32_0 : i32, i32
  }
  func.func @transform_6(%arg0: i32) -> (i32, i32) {
    %c0_i32 = arith.constant 0 : i32
    %c0_i32_0 = arith.constant 0 : i32
    %c0_i32_1 = arith.constant 0 : i32
    return %c0_i32, %c0_i32_0 : i32, i32
  }
  func.func @transform_7(%arg0: i32) -> (i32, i32) {
    %c0_i32 = arith.constant 0 : i32
    %c0_i32_0 = arith.constant 0 : i32
    %c0_i32_1 = arith.constant 0 : i32
    return %c0_i32, %c0_i32_0 : i32, i32
  }
  func.func @transform_8(%arg0: i32) -> (i32, i32) {
    %c0_i32 = arith.constant 0 : i32
    %c0_i32_0 = arith.constant 0 : i32
    %c0_i32_1 = arith.constant 0 : i32
    return %c0_i32, %c0_i32_0 : i32, i32
  }
  func.func @transform_9(%arg0: i32) -> (i32, i32) {
    %c0_i32 = arith.constant 0 : i32
    %c0_i32_0 = arith.constant 0 : i32
    return %arg0, %c0_i32 : i32, i32
  }
}

</mosaic_0001>

<llo_original>
// kernel: bottleneck_csp_forward.4
$region0: #{bottleneck_csp_forward.4}
  #allocation0 [shape = 'u32[]', space=smem, size = 0x4, offset = 0x4, fixed_abs, tag = 'smem constant byte address 0x4 - core index']
  #allocation1 [shape = 'u32[72,128]{1,0:T(1,128)}', space=vmem, size = 0x9000, scoped, tag = 'internal scratch']
  %s0 = inlined_call_operand.vmem [shape: f32[512,4], index: 0, kind: input, shape index: {}]
  %s1 = inlined_call_operand.vmem [shape: f32[4,2], index: 1, kind: input, shape index: {}]
  %s2 = inlined_call_operand.vmem [shape: f32[1,2], index: 2, kind: input, shape index: {}]
  %s3 = inlined_call_operand.vmem [shape: f32[4,2], index: 3, kind: input, shape index: {}]
  %s4 = inlined_call_operand.vmem [shape: f32[512,2], index: 4, kind: output, shape index: {0}]
  %s5 = inlined_call_operand.vmem [shape: f32[512,2], index: 5, kind: output, shape index: {1}]
  %6 = xla_tuple %s4, %s5
  %s7 = sld [smem:[#allocation0]]
  $region57: #{bottleneck_csp_forward.4} parent=0
    _
  %s9 = ssub.s32 1, %s7
  %s10 = scalar_select 0, %s9, %s7
  loop: start=0, step=1, limit=4
  $region2: #{bottleneck_csp_forward.4} parent=0 // loop_pre_header
    _
  $region3: #{bottleneck_csp_forward.4} parent=0 // loop_header
    %s12 = sphi 0, %s16
    %p13 = scmp.ge.s32.totalorder %s12, 4
    %s22 = sphi 0, %s24
    %s25 = sphi 0, %s22
    %s26 = sphi 0, %s25
    %s42 = sphi 0, %s26
    %s46 = sphi 0, %s46
    %s48 = sphi 0, %s46
    %s49 = sphi 0, %s48
    %s63 = sphi 0, %s49
    %s67 = sphi 0, %s67
    %s69 = sphi 0, %s67
    %s70 = sphi 0, %s69
    %s84 = sphi 0, %s70
    %s88 = sphi 0, %s88
    %s90 = sphi 0, %s88
    %s91 = sphi 0, %s90
    %s105 = sphi 0, %s91
    %s111 = sphi 0, %s113
    %s114 = sphi 0, %s111
    %s115 = sphi 0, %s114
    %s131 = sphi 0, %s115
    %s137 = sphi 0, %s139
    %s140 = sphi 0, %s137
    %s141 = sphi 0, %s140
    %s157 = sphi 0, %s141
  $region4: #{bottleneck_csp_forward.4} parent=0 // loop_header_branch
    %15 = sbr.rel (%p13) target = $region8
  $region5: #{bottleneck_csp_forward.4} parent=0 // loop_body
    %s17 = ssub.s32 %s12, 1
    %s18 = ssub.s32 %s12, 2
    %s19 = sadd.s32 %s12, 1
    %s20 = ssub.s32 %s12, %s19
    %p21 = scmp.eq.s32.totalorder %s20, 0
    %s23 = sadd.s32 %s22, 1
    %s24 = scalar_select %p21, %s22, %s23
    %p27 = pneg %p21
    %p28 = scmp.eq.s32.totalorder %s12, 1
    %p29 = por %p27, %p28
    %p30 = scmp.ne.s32.totalorder %s22, %s25
    %p31 = scmp.eq.s32.totalorder %s12, 0
    %p32 = por %p30, %p31
    %p33 = scmp.ne.s32.totalorder %s22, %s25
    %p34 = scmp.eq.s32.totalorder %s17, 1
    %p35 = por %p33, %p34
    %p36 = scmp.ne.s32.totalorder %s25, %s26
    %p37 = scmp.eq.s32.totalorder %s17, 0
    %p38 = por %p36, %p37
    %p39 = scmp.ne.s32.totalorder %s25, %s26
    %p40 = scmp.eq.s32.totalorder %s18, 1
    %p41 = por %p39, %p40
    %p43 = scmp.ne.s32.totalorder %s26, %s42
    %p44 = scmp.eq.s32.totalorder %s18, 0
    %p45 = por %p43, %p44
    %s47 = sadd.s32 %s46, 1
    %p50 = scmp.eq.s32.totalorder %s12, 1
    %p51 = scmp.ne.s32.totalorder %s46, %s48
    %p52 = scmp.eq.s32.totalorder %s12, 0
    %p53 = por %p51, %p52
    %p54 = scmp.ne.s32.totalorder %s46, %s48
    %p55 = scmp.eq.s32.totalorder %s17, 1
    %p56 = por %p54, %p55
    %p57 = scmp.ne.s32.totalorder %s48, %s49
    %p58 = scmp.eq.s32.totalorder %s17, 0
    %p59 = por %p57, %p58
    %p60 = scmp.ne.s32.totalorder %s48, %s49
    %p61 = scmp.eq.s32.totalorder %s18, 1
    %p62 = por %p60, %p61
    %p64 = scmp.ne.s32.totalorder %s49, %s63
    %p65 = scmp.eq.s32.totalorder %s18, 0
    %p66 = por %p64, %p65
    %s68 = sadd.s32 %s67, 1
    %p71 = scmp.eq.s32.totalorder %s12, 1
    %p72 = scmp.ne.s32.totalorder %s67, %s69
    %p73 = scmp.eq.s32.totalorder %s12, 0
    %p74 = por %p72, %p73
    %p75 = scmp.ne.s32.totalorder %s67, %s69
    %p76 = scmp.eq.s32.totalorder %s17, 1
    %p77 = por %p75, %p76
    %p78 = scmp.ne.s32.totalorder %s69, %s70
    %p79 = scmp.eq.s32.totalorder %s17, 0
    %p80 = por %p78, %p79
    %p81 = scmp.ne.s32.totalorder %s69, %s70
    %p82 = scmp.eq.s32.totalorder %s18, 1
    %p83 = por %p81, %p82
    %p85 = scmp.ne.s32.totalorder %s70, %s84
    %p86 = scmp.eq.s32.totalorder %s18, 0
    %p87 = por %p85, %p86
    %s89 = sadd.s32 %s88, 1
    %p92 = scmp.eq.s32.totalorder %s12, 1
    %p93 = scmp.ne.s32.totalorder %s88, %s90
    %p94 = scmp.eq.s32.totalorder %s12, 0
    %p95 = por %p93, %p94
    %p96 = scmp.ne.s32.totalorder %s88, %s90
    %p97 = scmp.eq.s32.totalorder %s17, 1
    %p98 = por %p96, %p97
    %p99 = scmp.ne.s32.totalorder %s90, %s91
    %p100 = scmp.eq.s32.totalorder %s17, 0
    %p101 = por %p99, %p100
    %p102 = scmp.ne.s32.totalorder %s90, %s91
    %p103 = scmp.eq.s32.totalorder %s18, 1
    %p104 = por %p102, %p103
    %p106 = scmp.ne.s32.totalorder %s91, %s105
    %p107 = scmp.eq.s32.totalorder %s18, 0
    %p108 = por %p106, %p107
    %s109 = ssub.s32 %s12, %s19
    %p110 = scmp.eq.s32.totalorder %s109, 0
    %s112 = sadd.s32 %s111, 1
    %s113 = scalar_select %p110, %s111, %s112
    %p116 = pneg %p110
    %p117 = scmp.eq.s32.totalorder %s12, 1
    %p118 = por %p116, %p117
    %p119 = scmp.ne.s32.totalorder %s111, %s114
    %p120 = scmp.eq.s32.totalorder %s12, 0
    %p121 = por %p119, %p120
    %p122 = scmp.ne.s32.totalorder %s111, %s114
    %p123 = scmp.eq.s32.totalorder %s17, 1
    %p124 = por %p122, %p123
    %p125 = scmp.ne.s32.totalorder %s114, %s115
    %p126 = scmp.eq.s32.totalorder %s17, 0
    %p127 = por %p125, %p126
    %p128 = scmp.ne.s32.totalorder %s114, %s115
    %p129 = scmp.eq.s32.totalorder %s18, 1
    %p130 = por %p128, %p129
    %p132 = scmp.ne.s32.totalorder %s115, %s131
    %p133 = scmp.eq.s32.totalorder %s18, 0
    %p134 = por %p132, %p133
    %s135 = ssub.s32 %s12, %s19
    %p136 = scmp.eq.s32.totalorder %s135, 0
    %s138 = sadd.s32 %s137, 1
    %s139 = scalar_select %p136, %s137, %s138
    %p142 = pneg %p136
    %p143 = scmp.eq.s32.totalorder %s12, 1
    %p144 = por %p142, %p143
    %p145 = scmp.ne.s32.totalorder %s137, %s140
    %p146 = scmp.eq.s32.totalorder %s12, 0
    %p147 = por %p145, %p146
    %p148 = scmp.ne.s32.totalorder %s137, %s140
    %p149 = scmp.eq.s32.totalorder %s17, 1
    %p150 = por %p148, %p149
    %p151 = scmp.ne.s32.totalorder %s140, %s141
    %p152 = scmp.eq.s32.totalorder %s17, 0
    %p153 = por %p151, %p152
    %p154 = scmp.ne.s32.totalorder %s140, %s141
    %p155 = scmp.eq.s32.totalorder %s18, 1
    %p156 = por %p154, %p155
    %p158 = scmp.ne.s32.totalorder %s141, %s157
    %p159 = scmp.eq.s32.totalorder %s18, 0
    %p160 = por %p158, %p159
    %p161 = scmp.le.s32.totalorder 1, %s12
    %p162 = scmp.lt.s32.totalorder %s12, 3
    %p163 = pnand %p161, %p162
    %p164 = pneg %p163
    // Predicated region
    $region9: #{bottleneck_csp_forward.4} parent=5 // pred_check
      _
    $region10: #{bottleneck_csp_forward.4} parent=5 // pred_check_branch
      %166 = sbr.rel (%p163) target = $region12
    $region11: #{bottleneck_csp_forward.4} parent=5 // pred_region
      %s167 = ssub.s32 %s12, 1
      // Predicated region
      $region13: #{bottleneck_csp_forward.4} parent=11 // pred_check
        %p168 = pneg %p59
      $region14: #{bottleneck_csp_forward.4} parent=11 // pred_check_branch
        %170 = sbr.rel (%p168) target = $region16
      $region15: #{bottleneck_csp_forward.4} parent=11 // pred_region
        _
      $region16: #{bottleneck_csp_forward.4} parent=11 // pred_fallthru
        _
      // Predicated region
      $region17: #{bottleneck_csp_forward.4} parent=11 // pred_check
        %p171 = pneg %p80
      $region18: #{bottleneck_csp_forward.4} parent=11 // pred_check_branch
        %173 = sbr.rel (%p171) target = $region20
      $region19: #{bottleneck_csp_forward.4} parent=11 // pred_region
        _
      $region20: #{bottleneck_csp_forward.4} parent=11 // pred_fallthru
        _
      // Predicated region
      $region21: #{bottleneck_csp_forward.4} parent=11 // pred_check
        %p174 = pneg %p101
      $region22: #{bottleneck_csp_forward.4} parent=11 // pred_check_branch
        %176 = sbr.rel (%p174) target = $region24
      $region23: #{bottleneck_csp_forward.4} parent=11 // pred_region
        _
      $region24: #{bottleneck_csp_forward.4} parent=11 // pred_fallthru
        _
    $region12: #{bottleneck_csp_forward.4} parent=5 // pred_fallthru
      _
    %p177 = scmp.lt.s32.totalorder %s12, 2
    // Predicated region
    $region25: #{bottleneck_csp_forward.4} parent=5 // pred_check
      %p178 = pneg %p177
    $region26: #{bottleneck_csp_forward.4} parent=5 // pred_check_branch
      %180 = sbr.rel (%p178) target = $region28
    $region27: #{bottleneck_csp_forward.4} parent=5 // pred_region
      // Predicated region
      $region29: #{bottleneck_csp_forward.4} parent=27 // pred_check
        %p181 = pneg %p32
      $region30: #{bottleneck_csp_forward.4} parent=27 // pred_check_branch
        %183 = sbr.rel (%p181) target = $region32
      $region31: #{bottleneck_csp_forward.4} parent=27 // pred_region
        %s184 = smul.u32 32, %s12
        %p185 = scmp.lt.s32.totalorder %s184, 63
        %s186 = scalar_select %p185, %s184, 63
        %s187 = smul.addr %s186, 8
        %s188 = scalar_lea.vmem %s0, %s187
        %s189 = smul.u32 32, %s12
      $region32: #{bottleneck_csp_forward.4} parent=27 // pred_fallthru
        _
    $region28: #{bottleneck_csp_forward.4} parent=5 // pred_fallthru
      _
    %p190 = scmp.le.s32.totalorder 1, %s12
    %p191 = scmp.lt.s32.totalorder %s12, 3
    %p192 = pnand %p190, %p191
    %p193 = pneg %p192
    // Predicated region
    $region33: #{bottleneck_csp_forward.4} parent=5 // pred_check
      _
    $region34: #{bottleneck_csp_forward.4} parent=5 // pred_check_branch
      %195 = sbr.rel (%p192) target = $region36
    $region35: #{bottleneck_csp_forward.4} parent=5 // pred_region
      %s196 = ssub.s32 %s12, 1
      %s197 = smul.u32 32, %s17
      %p198 = scmp.lt.s32.totalorder %s197, 63
      %s199 = scalar_select %p198, %s197, 63
      %s200 = smul.addr %s199, 8
      %s201 = scalar_lea.vmem %s0, %s200
      %p202 = pneg %p38
      %p203 = pneg %p35
      %p204 = pneg %p59
      %p205 = pneg %p56
      %p206 = pneg %p80
      %p207 = pneg %p77
      %p208 = pneg %p101
      %p209 = pneg %p98
      %p210 = pneg %p127
      %p211 = pneg %p124
      %s212 = smul.u32 32, %s17
      %p213 = scmp.lt.s32.totalorder %s212, 63
      %s214 = scalar_select %p213, %s212, 63
      %s215 = smul.addr %s214, 8
      %s216 = scalar_lea.vmem %s4, %s215
      %p217 = pneg %p153
      %p218 = pneg %p150
      %s219 = smul.u32 32, %s17
      %p220 = scmp.lt.s32.totalorder %s219, 63
      %s221 = scalar_select %p220, %s219, 63
      %s222 = smul.addr %s221, 8
      %s223 = scalar_lea.vmem %s5, %s222
      %s224 = smul.u32 32, %s17
      %p225 = scmp.lt.s32.totalorder %s224, 63
      %s226 = scalar_select %p225, %s224, 63
      %s227 = smul.addr %s226, 8
      %s228 = scalar_lea.vmem %s0, %s227
      %s229 = smul.u32 32, %s17
      %s230 = smul.u32 32, %s17
      %p231 = scmp.lt.s32.totalorder %s230, 63
      %s232 = scalar_select %p231, %s230, 63
      %s233 = smul.addr %s232, 8
      %s234 = scalar_lea.vmem %s4, %s233
      %s235 = smul.u32 32, %s17
      %s236 = smul.u32 32, %s17
      %p237 = scmp.lt.s32.totalorder %s236, 63
      %s238 = scalar_select %p237, %s236, 63
      %s239 = smul.addr %s238, 8
      %s240 = scalar_lea.vmem %s5, %s239
      %s241 = smul.u32 32, %s17
      %v242 = vld [vmem:[%s228] sm:$0xff]
      %v243 = vld [vmem:[%s228 + $0x8] sm:$0xff]
      %v244 = vld [vmem:[%s228 + $0x10] sm:$0xff]
      %v245 = vld [vmem:[%s228 + $0x18] sm:$0xff]
      %v246 = vld [vmem:[%s228 + $0x20] sm:$0xff]
      %v247 = vld [vmem:[%s228 + $0x28] sm:$0xff]
      %v248 = vld [vmem:[%s228 + $0x30] sm:$0xff]
      %v249 = vld [vmem:[%s228 + $0x38] sm:$0xff]
      %v250 = vld [vmem:[%s228 + $0x40] sm:$0xff]
      %v251 = vld [vmem:[%s228 + $0x48] sm:$0xff]
      %v252 = vld [vmem:[%s228 + $0x50] sm:$0xff]
      %v253 = vld [vmem:[%s228 + $0x58] sm:$0xff]
      %v254 = vld [vmem:[%s228 + $0x60] sm:$0xff]
      %v255 = vld [vmem:[%s228 + $0x68] sm:$0xff]
      %v256 = vld [vmem:[%s228 + $0x70] sm:$0xff]
      %v257 = vld [vmem:[%s228 + $0x78] sm:$0xff]
      %v258 = vld [vmem:[%s228 + $0x80] sm:$0xff]
      %v259 = vld [vmem:[%s228 + $0x88] sm:$0xff]
      %v260 = vld [vmem:[%s228 + $0x90] sm:$0xff]
      %v261 = vld [vmem:[%s228 + $0x98] sm:$0xff]
      %v262 = vld [vmem:[%s228 + $0xa0] sm:$0xff]
      %v263 = vld [vmem:[%s228 + $0xa8] sm:$0xff]
      %v264 = vld [vmem:[%s228 + $0xb0] sm:$0xff]
      %v265 = vld [vmem:[%s228 + $0xb8] sm:$0xff]
      %v266 = vld [vmem:[%s228 + $0xc0] sm:$0xff]
      %v267 = vld [vmem:[%s228 + $0xc8] sm:$0xff]
      %v268 = vld [vmem:[%s228 + $0xd0] sm:$0xff]
      %v269 = vld [vmem:[%s228 + $0xd8] sm:$0xff]
      %v270 = vld [vmem:[%s228 + $0xe0] sm:$0xff]
      %v271 = vld [vmem:[%s228 + $0xe8] sm:$0xff]
      %v272 = vld [vmem:[%s228 + $0xf0] sm:$0xff]
      %v273 = vld [vmem:[%s228 + $0xf8] sm:$0xff]
      %v274 = vld [vmem:[%s1] sm:$0xf]
      %v275 = vld [vmem:[%s2] sm:$0x1]
      %v277 = vperm.slane %v275, 0
      %vm279 = vcmask 31744
      %v281 = vsel %vm279, %v242, 0
      %v284 = vsel %vm279, %v243, 0
      %v287 = vsel %vm279, %v244, 0
      %v290 = vsel %vm279, %v245, 0
      %v293 = vsel %vm279, %v246, 0
      %v296 = vsel %vm279, %v247, 0
      %v299 = vsel %vm279, %v248, 0
      %v302 = vsel %vm279, %v249, 0
      %v305 = vsel %vm279, %v250, 0
      %v308 = vsel %vm279, %v251, 0
      %v311 = vsel %vm279, %v252, 0
      %v314 = vsel %vm279, %v253, 0
      %v317 = vsel %vm279, %v254, 0
      %v320 = vsel %vm279, %v255, 0
      %v323 = vsel %vm279, %v256, 0
      %v326 = vsel %vm279, %v257, 0
      %v329 = vsel %vm279, %v258, 0
      %v332 = vsel %vm279, %v259, 0
      %v335 = vsel %vm279, %v260, 0
      %v338 = vsel %vm279, %v261, 0
      %v341 = vsel %vm279, %v262, 0
      %v344 = vsel %vm279, %v263, 0
      %v347 = vsel %vm279, %v264, 0
      %v350 = vsel %vm279, %v265, 0
      %v353 = vsel %vm279, %v266, 0
      %v356 = vsel %vm279, %v267, 0
      %v359 = vsel %vm279, %v268, 0
      %v362 = vsel %vm279, %v269, 0
      %v365 = vsel %vm279, %v270, 0
      %v368 = vsel %vm279, %v271, 0
      %v371 = vsel %vm279, %v272, 0
      %v374 = vsel %vm279, %v273, 0
      %vm376 = vcmask 1043456
      %v378 = vsel %vm376, %v274, 0
      %380 = vmatpush.msra.mxu0 0.0
      %381 = vmatpush.msra.mxu0 0.0
      %382 = vmatpush.msra.mxu0 0.0
      %383 = vmatpush.msra.mxu0 0.0
      %384 = vmatpush.msra.mxu0 0.0
      %385 = vmatpush.msra.mxu0 0.0
      %386 = vmatpush.msra.mxu0 0.0
      %387 = vmatpush.msra.mxu0 0.0
      %388 = vmatpush.msra.mxu0 0.0
      %389 = vmatpush.msra.mxu0 0.0
      %390 = vmatpush.msra.mxu0 0.0
      %391 = vmatpush.msra.mxu0 0.0
      %392 = vmatpush.msra.mxu0 0.0
      %393 = vmatpush.msra.mxu0 0.0
      %394 = vmatpush.msra.mxu0 0.0
      %395 = vmatpush.msra.mxu0 %v378
      %396 = vmatmul.f32.gmra.mxu0 %v281
      %v397 = vpop.f32.mrf.mxu0
      %v398 = vadd.f32 %v277, %v397
      %399 = vmatmul.f32.gmra.mxu0 %v284
      %v400 = vpop.f32.mrf.mxu0
      %v401 = vadd.f32 %v277, %v400
      %402 = vmatmul.f32.gmra.mxu0 %v287
      %v403 = vpop.f32.mrf.mxu0
      %v404 = vadd.f32 %v277, %v403
      %405 = vmatmul.f32.gmra.mxu0 %v290
      %v406 = vpop.f32.mrf.mxu0
      %v407 = vadd.f32 %v277, %v406
      %408 = vmatmul.f32.gmra.mxu0 %v293
      %v409 = vpop.f32.mrf.mxu0
      %v410 = vadd.f32 %v277, %v409
      %411 = vmatmul.f32.gmra.mxu0 %v296
      %v412 = vpop.f32.mrf.mxu0
      %v413 = vadd.f32 %v277, %v412
      %414 = vmatmul.f32.gmra.mxu0 %v299
      %v415 = vpop.f32.mrf.mxu0
      %v416 = vadd.f32 %v277, %v415
      %417 = vmatmul.f32.gmra.mxu0 %v302
      %v418 = vpop.f32.mrf.mxu0
      %v419 = vadd.f32 %v277, %v418
      %420 = vmatmul.f32.gmra.mxu0 %v305
      %v421 = vpop.f32.mrf.mxu0
      %v422 = vadd.f32 %v277, %v421
      %423 = vmatmul.f32.gmra.mxu0 %v308
      %v424 = vpop.f32.mrf.mxu0
      %v425 = vadd.f32 %v277, %v424
      %426 = vmatmul.f32.gmra.mxu0 %v311
      %v427 = vpop.f32.mrf.mxu0
      %v428 = vadd.f32 %v277, %v427
      %429 = vmatmul.f32.gmra.mxu0 %v314
      %v430 = vpop.f32.mrf.mxu0
      %v431 = vadd.f32 %v277, %v430
      %432 = vmatmul.f32.gmra.mxu0 %v317
      %v433 = vpop.f32.mrf.mxu0
      %v434 = vadd.f32 %v277, %v433
      %435 = vmatmul.f32.gmra.mxu0 %v320
      %v436 = vpop.f32.mrf.mxu0
      %v437 = vadd.f32 %v277, %v436
      %438 = vmatmul.f32.gmra.mxu0 %v323
      %v439 = vpop.f32.mrf.mxu0
      %v440 = vadd.f32 %v277, %v439
      %441 = vmatmul.f32.gmra.mxu0 %v326
      %v442 = vpop.f32.mrf.mxu0
      %v443 = vadd.f32 %v277, %v442
      %444 = vmatmul.f32.gmra.mxu0 %v329
      %v445 = vpop.f32.mrf.mxu0
      %v446 = vadd.f32 %v277, %v445
      %447 = vmatmul.f32.gmra.mxu0 %v332
      %v448 = vpop.f32.mrf.mxu0
      %v449 = vadd.f32 %v277, %v448
      %450 = vmatmul.f32.gmra.mxu0 %v335
      %v451 = vpop.f32.mrf.mxu0
      %v452 = vadd.f32 %v277, %v451
      %453 = vmatmul.f32.gmra.mxu0 %v338
      %v454 = vpop.f32.mrf.mxu0
      %v455 = vadd.f32 %v277, %v454
      %456 = vmatmul.f32.gmra.mxu0 %v341
      %v457 = vpop.f32.mrf.mxu0
      %v458 = vadd.f32 %v277, %v457
      %459 = vmatmul.f32.gmra.mxu0 %v344
      %v460 = vpop.f32.mrf.mxu0
      %v461 = vadd.f32 %v277, %v460
      %462 = vmatmul.f32.gmra.mxu0 %v347
      %v463 = vpop.f32.mrf.mxu0
      %v464 = vadd.f32 %v277, %v463
      %465 = vmatmul.f32.gmra.mxu0 %v350
      %v466 = vpop.f32.mrf.mxu0
      %v467 = vadd.f32 %v277, %v466
      %468 = vmatmul.f32.gmra.mxu0 %v353
      %v469 = vpop.f32.mrf.mxu0
      %v470 = vadd.f32 %v277, %v469
      %471 = vmatmul.f32.gmra.mxu0 %v356
      %v472 = vpop.f32.mrf.mxu0
      %v473 = vadd.f32 %v277, %v472
      %474 = vmatmul.f32.gmra.mxu0 %v359
      %v475 = vpop.f32.mrf.mxu0
      %v476 = vadd.f32 %v277, %v475
      %477 = vmatmul.f32.gmra.mxu0 %v362
      %v478 = vpop.f32.mrf.mxu0
      %v479 = vadd.f32 %v277, %v478
      %480 = vmatmul.f32.gmra.mxu0 %v365
      %v481 = vpop.f32.mrf.mxu0
      %v482 = vadd.f32 %v277, %v481
      %483 = vmatmul.f32.gmra.mxu0 %v368
      %v484 = vpop.f32.mrf.mxu0
      %v485 = vadd.f32 %v277, %v484
      %486 = vmatmul.f32.gmra.mxu0 %v371
      %v487 = vpop.f32.mrf.mxu0
      %v488 = vadd.f32 %v277, %v487
      %489 = vmatmul.f32.gmra.mxu0 %v374
      %v490 = vpop.f32.mrf.mxu0
      %v491 = vadd.f32 %v277, %v490
      %492 = vdwg.mxu0
      %v493 = vxor.u32 %v398, 2147483648
      %v494 = vxor.u32 %v401, 2147483648
      %v495 = vxor.u32 %v404, 2147483648
      %v496 = vxor.u32 %v407, 2147483648
      %v497 = vxor.u32 %v410, 2147483648
      %v498 = vxor.u32 %v413, 2147483648
      %v499 = vxor.u32 %v416, 2147483648
      %v500 = vxor.u32 %v419, 2147483648
      %v501 = vxor.u32 %v422, 2147483648
      %v502 = vxor.u32 %v425, 2147483648
      %v503 = vxor.u32 %v428, 2147483648
      %v504 = vxor.u32 %v431, 2147483648
      %v505 = vxor.u32 %v434, 2147483648
      %v506 = vxor.u32 %v437, 2147483648
      %v507 = vxor.u32 %v440, 2147483648
      %v508 = vxor.u32 %v443, 2147483648
      %v509 = vxor.u32 %v446, 2147483648
      %v510 = vxor.u32 %v449, 2147483648
      %v511 = vxor.u32 %v452, 2147483648
      %v512 = vxor.u32 %v455, 2147483648
      %v513 = vxor.u32 %v458, 2147483648
      %v514 = vxor.u32 %v461, 2147483648
      %v515 = vxor.u32 %v464, 2147483648
      %v516 = vxor.u32 %v467, 2147483648
      %v517 = vxor.u32 %v470, 2147483648
      %v518 = vxor.u32 %v473, 2147483648
      %v519 = vxor.u32 %v476, 2147483648
      %v520 = vxor.u32 %v479, 2147483648
      %v521 = vxor.u32 %v482, 2147483648
      %v522 = vxor.u32 %v485, 2147483648
      %v523 = vxor.u32 %v488, 2147483648
      %v524 = vxor.u32 %v491, 2147483648
      %v525 = vmul.f32 %v493, 1.442695
      %v526 = vpow.pop %v525
      %v527 = vmul.f32 %v494, 1.442695
      %v528 = vpow.pop %v527
      %v529 = vmul.f32 %v495, 1.442695
      %v530 = vpow.pop %v529
      %v531 = vmul.f32 %v496, 1.442695
      %v532 = vpow.pop %v531
      %v533 = vmul.f32 %v497, 1.442695
      %v534 = vpow.pop %v533
      %v535 = vmul.f32 %v498, 1.442695
      %v536 = vpow.pop %v535
      %v537 = vmul.f32 %v499, 1.442695
      %v538 = vpow.pop %v537
      %v539 = vmul.f32 %v500, 1.442695
      %v540 = vpow.pop %v539
      %v541 = vmul.f32 %v501, 1.442695
      %v542 = vpow.pop %v541
      %v543 = vmul.f32 %v502, 1.442695
      %v544 = vpow.pop %v543
      %v545 = vmul.f32 %v503, 1.442695
      %v546 = vpow.pop %v545
      %v547 = vmul.f32 %v504, 1.442695
      %v548 = vpow.pop %v547
      %v549 = vmul.f32 %v505, 1.442695
      %v550 = vpow.pop %v549
      %v551 = vmul.f32 %v506, 1.442695
      %v552 = vpow.pop %v551
      %v553 = vmul.f32 %v507, 1.442695
      %v554 = vpow.pop %v553
      %v555 = vmul.f32 %v508, 1.442695
      %v556 = vpow.pop %v555
      %v557 = vmul.f32 %v509, 1.442695
      %v558 = vpow.pop %v557
      %v559 = vmul.f32 %v510, 1.442695
      %v560 = vpow.pop %v559
      %v561 = vmul.f32 %v511, 1.442695
      %v562 = vpow.pop %v561
      %v563 = vmul.f32 %v512, 1.442695
      %v564 = vpow.pop %v563
      %v565 = vmul.f32 %v513, 1.442695
      %v566 = vpow.pop %v565
      %v567 = vmul.f32 %v514, 1.442695
      %v568 = vpow.pop %v567
      %v569 = vmul.f32 %v515, 1.442695
      %v570 = vpow.pop %v569
      %v571 = vmul.f32 %v516, 1.442695
      %v572 = vpow.pop %v571
      %v573 = vmul.f32 %v517, 1.442695
      %v574 = vpow.pop %v573
      %v575 = vmul.f32 %v518, 1.442695
      %v576 = vpow.pop %v575
      %v577 = vmul.f32 %v519, 1.442695
      %v578 = vpow.pop %v577
      %v579 = vmul.f32 %v520, 1.442695
      %v580 = vpow.pop %v579
      %v581 = vmul.f32 %v521, 1.442695
      %v582 = vpow.pop %v581
      %v583 = vmul.f32 %v522, 1.442695
      %v584 = vpow.pop %v583
      %v585 = vmul.f32 %v523, 1.442695
      %v586 = vpow.pop %v585
      %v587 = vmul.f32 %v524, 1.442695
      %v588 = vpow.pop %v587
      %v589 = vadd.f32 %v526, 1.0
      %v590 = vadd.f32 %v528, 1.0
      %v591 = vadd.f32 %v530, 1.0
      %v592 = vadd.f32 %v532, 1.0
      %v593 = vadd.f32 %v534, 1.0
      %v594 = vadd.f32 %v536, 1.0
      %v595 = vadd.f32 %v538, 1.0
      %v596 = vadd.f32 %v540, 1.0
      %v597 = vadd.f32 %v542, 1.0
      %v598 = vadd.f32 %v544, 1.0
      %v599 = vadd.f32 %v546, 1.0
      %v600 = vadd.f32 %v548, 1.0
      %v601 = vadd.f32 %v550, 1.0
      %v602 = vadd.f32 %v552, 1.0
      %v603 = vadd.f32 %v554, 1.0
      %v604 = vadd.f32 %v556, 1.0
      %v605 = vadd.f32 %v558, 1.0
      %v606 = vadd.f32 %v560, 1.0
      %v607 = vadd.f32 %v562, 1.0
      %v608 = vadd.f32 %v564, 1.0
      %v609 = vadd.f32 %v566, 1.0
      %v610 = vadd.f32 %v568, 1.0
      %v611 = vadd.f32 %v570, 1.0
      %v612 = vadd.f32 %v572, 1.0
      %v613 = vadd.f32 %v574, 1.0
      %v614 = vadd.f32 %v576, 1.0
      %v615 = vadd.f32 %v578, 1.0
      %v616 = vadd.f32 %v580, 1.0
      %v617 = vadd.f32 %v582, 1.0
      %v618 = vadd.f32 %v584, 1.0
      %v619 = vadd.f32 %v586, 1.0
      %v620 = vadd.f32 %v588, 1.0
      %v621 = vrcp.pop %v589
      %v622 = vmul.f32 %v589, %v621
      %v623 = vsub.f32 1.0, %v622
      %v624 = vmul.f32 %v621, %v623
      %v625 = vadd.f32 %v621, %v624
      %vm626 = vweird.f32 %v589
      %vm627 = vweird.f32 %v621
      %vm628 = vmor %vm626, %vm627
      %v629 = vsel %vm628, %v621, %v625
      %v630 = vand.u32 2147483647, %v589
      %vm631 = vcmp.eq.f32.partialorder %v630, 8.507059e+37
      %v632 = vand.u32 %v589, 2147483648
      %v633 = vor.u32 1.1754944e-38, %v632
      %v634 = vsel %vm631, %v633, %v629
      %v635 = vmul.f32 1.0, %v634
      %v636 = vrcp.pop %v590
      %v637 = vmul.f32 %v590, %v636
      %v638 = vsub.f32 1.0, %v637
      %v639 = vmul.f32 %v636, %v638
      %v640 = vadd.f32 %v636, %v639
      %vm641 = vweird.f32 %v590
      %vm642 = vweird.f32 %v636
      %vm643 = vmor %vm641, %vm642
      %v644 = vsel %vm643, %v636, %v640
      %v645 = vand.u32 2147483647, %v590
      %vm646 = vcmp.eq.f32.partialorder %v645, 8.507059e+37
      %v647 = vand.u32 %v590, 2147483648
      %v648 = vor.u32 1.1754944e-38, %v647
      %v649 = vsel %vm646, %v648, %v644
      %v650 = vmul.f32 1.0, %v649
      %v651 = vrcp.pop %v591
      %v652 = vmul.f32 %v591, %v651
      %v653 = vsub.f32 1.0, %v652
      %v654 = vmul.f32 %v651, %v653
      %v655 = vadd.f32 %v651, %v654
      %vm656 = vweird.f32 %v591
      %vm657 = vweird.f32 %v651
      %vm658 = vmor %vm656, %vm657
      %v659 = vsel %vm658, %v651, %v655
      %v660 = vand.u32 2147483647, %v591
      %vm661 = vcmp.eq.f32.partialorder %v660, 8.507059e+37
      %v662 = vand.u32 %v591, 2147483648
      %v663 = vor.u32 1.1754944e-38, %v662
      %v664 = vsel %vm661, %v663, %v659
      %v665 = vmul.f32 1.0, %v664
      %v666 = vrcp.pop %v592
      %v667 = vmul.f32 %v592, %v666
      %v668 = vsub.f32 1.0, %v667
      %v669 = vmul.f32 %v666, %v668
      %v670 = vadd.f32 %v666, %v669
      %vm671 = vweird.f32 %v592
      %vm672 = vweird.f32 %v666
      %vm673 = vmor %vm671, %vm672
      %v674 = vsel %vm673, %v666, %v670
      %v675 = vand.u32 2147483647, %v592
      %vm676 = vcmp.eq.f32.partialorder %v675, 8.507059e+37
      %v677 = vand.u32 %v592, 2147483648
      %v678 = vor.u32 1.1754944e-38, %v677
      %v679 = vsel %vm676, %v678, %v674
      %v680 = vmul.f32 1.0, %v679
      %v681 = vrcp.pop %v593
      %v682 = vmul.f32 %v593, %v681
      %v683 = vsub.f32 1.0, %v682
      %v684 = vmul.f32 %v681, %v683
      %v685 = vadd.f32 %v681, %v684
      %vm686 = vweird.f32 %v593
      %vm687 = vweird.f32 %v681
      %vm688 = vmor %vm686, %vm687
      %v689 = vsel %vm688, %v681, %v685
      %v690 = vand.u32 2147483647, %v593
      %vm691 = vcmp.eq.f32.partialorder %v690, 8.507059e+37
      %v692 = vand.u32 %v593, 2147483648
      %v693 = vor.u32 1.1754944e-38, %v692
      %v694 = vsel %vm691, %v693, %v689
      %v695 = vmul.f32 1.0, %v694
      %v696 = vrcp.pop %v594
      %v697 = vmul.f32 %v594, %v696
      %v698 = vsub.f32 1.0, %v697
      %v699 = vmul.f32 %v696, %v698
      %v700 = vadd.f32 %v696, %v699
      %vm701 = vweird.f32 %v594
      %vm702 = vweird.f32 %v696
      %vm703 = vmor %vm701, %vm702
      %v704 = vsel %vm703, %v696, %v700
      %v705 = vand.u32 2147483647, %v594
      %vm706 = vcmp.eq.f32.partialorder %v705, 8.507059e+37
      %v707 = vand.u32 %v594, 2147483648
      %v708 = vor.u32 1.1754944e-38, %v707
      %v709 = vsel %vm706, %v708, %v704
      %v710 = vmul.f32 1.0, %v709
      %v711 = vrcp.pop %v595
      %v712 = vmul.f32 %v595, %v711
      %v713 = vsub.f32 1.0, %v712
      %v714 = vmul.f32 %v711, %v713
      %v715 = vadd.f32 %v711, %v714
      %vm716 = vweird.f32 %v595
      %vm717 = vweird.f32 %v711
      %vm718 = vmor %vm716, %vm717
      %v719 = vsel %vm718, %v711, %v715
      %v720 = vand.u32 2147483647, %v595
      %vm721 = vcmp.eq.f32.partialorder %v720, 8.507059e+37
      %v722 = vand.u32 %v595, 2147483648
      %v723 = vor.u32 1.1754944e-38, %v722
      %v724 = vsel %vm721, %v723, %v719
      %v725 = vmul.f32 1.0, %v724
      %v726 = vrcp.pop %v596
      %v727 = vmul.f32 %v596, %v726
      %v728 = vsub.f32 1.0, %v727
      %v729 = vmul.f32 %v726, %v728
      %v730 = vadd.f32 %v726, %v729
      %vm731 = vweird.f32 %v596
      %vm732 = vweird.f32 %v726
      %vm733 = vmor %vm731, %vm732
      %v734 = vsel %vm733, %v726, %v730
      %v735 = vand.u32 2147483647, %v596
      %vm736 = vcmp.eq.f32.partialorder %v735, 8.507059e+37
      %v737 = vand.u32 %v596, 2147483648
      %v738 = vor.u32 1.1754944e-38, %v737
      %v739 = vsel %vm736, %v738, %v734
      %v740 = vmul.f32 1.0, %v739
      %v741 = vrcp.pop %v597
      %v742 = vmul.f32 %v597, %v741
      %v743 = vsub.f32 1.0, %v742
      %v744 = vmul.f32 %v741, %v743
      %v745 = vadd.f32 %v741, %v744
      %vm746 = vweird.f32 %v597
      %vm747 = vweird.f32 %v741
      %vm748 = vmor %vm746, %vm747
      %v749 = vsel %vm748, %v741, %v745
      %v750 = vand.u32 2147483647, %v597
      %vm751 = vcmp.eq.f32.partialorder %v750, 8.507059e+37
      %v752 = vand.u32 %v597, 2147483648
      %v753 = vor.u32 1.1754944e-38, %v752
      %v754 = vsel %vm751, %v753, %v749
      %v755 = vmul.f32 1.0, %v754
      %v756 = vrcp.pop %v598
      %v757 = vmul.f32 %v598, %v756
      %v758 = vsub.f32 1.0, %v757
      %v759 = vmul.f32 %v756, %v758
      %v760 = vadd.f32 %v756, %v759
      %vm761 = vweird.f32 %v598
      %vm762 = vweird.f32 %v756
      %vm763 = vmor %vm761, %vm762
      %v764 = vsel %vm763, %v756, %v760
      %v765 = vand.u32 2147483647, %v598
      %vm766 = vcmp.eq.f32.partialorder %v765, 8.507059e+37
      %v767 = vand.u32 %v598, 2147483648
      %v768 = vor.u32 1.1754944e-38, %v767
      %v769 = vsel %vm766, %v768, %v764
      %v770 = vmul.f32 1.0, %v769
      %v771 = vrcp.pop %v599
      %v772 = vmul.f32 %v599, %v771
      %v773 = vsub.f32 1.0, %v772
      %v774 = vmul.f32 %v771, %v773
      %v775 = vadd.f32 %v771, %v774
      %vm776 = vweird.f32 %v599
      %vm777 = vweird.f32 %v771
      %vm778 = vmor %vm776, %vm777
      %v779 = vsel %vm778, %v771, %v775
      %v780 = vand.u32 2147483647, %v599
      %vm781 = vcmp.eq.f32.partialorder %v780, 8.507059e+37
      %v782 = vand.u32 %v599, 2147483648
      %v783 = vor.u32 1.1754944e-38, %v782
      %v784 = vsel %vm781, %v783, %v779
      %v785 = vmul.f32 1.0, %v784
      %v786 = vrcp.pop %v600
      %v787 = vmul.f32 %v600, %v786
      %v788 = vsub.f32 1.0, %v787
      %v789 = vmul.f32 %v786, %v788
      %v790 = vadd.f32 %v786, %v789
      %vm791 = vweird.f32 %v600
      %vm792 = vweird.f32 %v786
      %vm793 = vmor %vm791, %vm792
      %v794 = vsel %vm793, %v786, %v790
      %v795 = vand.u32 2147483647, %v600
      %vm796 = vcmp.eq.f32.partialorder %v795, 8.507059e+37
      %v797 = vand.u32 %v600, 2147483648
      %v798 = vor.u32 1.1754944e-38, %v797
      %v799 = vsel %vm796, %v798, %v794
      %v800 = vmul.f32 1.0, %v799
      %v801 = vrcp.pop %v601
      %v802 = vmul.f32 %v601, %v801
      %v803 = vsub.f32 1.0, %v802
      %v804 = vmul.f32 %v801, %v803
      %v805 = vadd.f32 %v801, %v804
      %vm806 = vweird.f32 %v601
      %vm807 = vweird.f32 %v801
      %vm808 = vmor %vm806, %vm807
      %v809 = vsel %vm808, %v801, %v805
      %v810 = vand.u32 2147483647, %v601
      %vm811 = vcmp.eq.f32.partialorder %v810, 8.507059e+37
      %v812 = vand.u32 %v601, 2147483648
      %v813 = vor.u32 1.1754944e-38, %v812
      %v814 = vsel %vm811, %v813, %v809
      %v815 = vmul.f32 1.0, %v814
      %v816 = vrcp.pop %v602
      %v817 = vmul.f32 %v602, %v816
      %v818 = vsub.f32 1.0, %v817
      %v819 = vmul.f32 %v816, %v818
      %v820 = vadd.f32 %v816, %v819
      %vm821 = vweird.f32 %v602
      %vm822 = vweird.f32 %v816
      %vm823 = vmor %vm821, %vm822
      %v824 = vsel %vm823, %v816, %v820
      %v825 = vand.u32 2147483647, %v602
      %vm826 = vcmp.eq.f32.partialorder %v825, 8.507059e+37
      %v827 = vand.u32 %v602, 2147483648
      %v828 = vor.u32 1.1754944e-38, %v827
      %v829 = vsel %vm826, %v828, %v824
      %v830 = vmul.f32 1.0, %v829
      %v831 = vrcp.pop %v603
      %v832 = vmul.f32 %v603, %v831
      %v833 = vsub.f32 1.0, %v832
      %v834 = vmul.f32 %v831, %v833
      %v835 = vadd.f32 %v831, %v834
      %vm836 = vweird.f32 %v603
      %vm837 = vweird.f32 %v831
      %vm838 = vmor %vm836, %vm837
      %v839 = vsel %vm838, %v831, %v835
      %v840 = vand.u32 2147483647, %v603
      %vm841 = vcmp.eq.f32.partialorder %v840, 8.507059e+37
      %v842 = vand.u32 %v603, 2147483648
      %v843 = vor.u32 1.1754944e-38, %v842
      %v844 = vsel %vm841, %v843, %v839
      %v845 = vmul.f32 1.0, %v844
      %v846 = vrcp.pop %v604
      %v847 = vmul.f32 %v604, %v846
      %v848 = vsub.f32 1.0, %v847
      %v849 = vmul.f32 %v846, %v848
      %v850 = vadd.f32 %v846, %v849
      %vm851 = vweird.f32 %v604
      %vm852 = vweird.f32 %v846
      %vm853 = vmor %vm851, %vm852
      %v854 = vsel %vm853, %v846, %v850
      %v855 = vand.u32 2147483647, %v604
      %vm856 = vcmp.eq.f32.partialorder %v855, 8.507059e+37
      %v857 = vand.u32 %v604, 2147483648
      %v858 = vor.u32 1.1754944e-38, %v857
      %v859 = vsel %vm856, %v858, %v854
      %v860 = vmul.f32 1.0, %v859
      %v861 = vrcp.pop %v605
      %v862 = vmul.f32 %v605, %v861
      %v863 = vsub.f32 1.0, %v862
      %v864 = vmul.f32 %v861, %v863
      %v865 = vadd.f32 %v861, %v864
      %vm866 = vweird.f32 %v605
      %vm867 = vweird.f32 %v861
      %vm868 = vmor %vm866, %vm867
      %v869 = vsel %vm868, %v861, %v865
      %v870 = vand.u32 2147483647, %v605
      %vm871 = vcmp.eq.f32.partialorder %v870, 8.507059e+37
      %v872 = vand.u32 %v605, 2147483648
      %v873 = vor.u32 1.1754944e-38, %v872
      %v874 = vsel %vm871, %v873, %v869
      %v875 = vmul.f32 1.0, %v874
      %v876 = vrcp.pop %v606
      %v877 = vmul.f32 %v606, %v876
      %v878 = vsub.f32 1.0, %v877
      %v879 = vmul.f32 %v876, %v878
      %v880 = vadd.f32 %v876, %v879
      %vm881 = vweird.f32 %v606
      %vm882 = vweird.f32 %v876
      %vm883 = vmor %vm881, %vm882
      %v884 = vsel %vm883, %v876, %v880
      %v885 = vand.u32 2147483647, %v606
      %vm886 = vcmp.eq.f32.partialorder %v885, 8.507059e+37
      %v887 = vand.u32 %v606, 2147483648
      %v888 = vor.u32 1.1754944e-38, %v887
      %v889 = vsel %vm886, %v888, %v884
      %v890 = vmul.f32 1.0, %v889
      %v891 = vrcp.pop %v607
      %v892 = vmul.f32 %v607, %v891
      %v893 = vsub.f32 1.0, %v892
      %v894 = vmul.f32 %v891, %v893
      %v895 = vadd.f32 %v891, %v894
      %vm896 = vweird.f32 %v607
      %vm897 = vweird.f32 %v891
      %vm898 = vmor %vm896, %vm897
      %v899 = vsel %vm898, %v891, %v895
      %v900 = vand.u32 2147483647, %v607
      %vm901 = vcmp.eq.f32.partialorder %v900, 8.507059e+37
      %v902 = vand.u32 %v607, 2147483648
      %v903 = vor.u32 1.1754944e-38, %v902
      %v904 = vsel %vm901, %v903, %v899
      %v905 = vmul.f32 1.0, %v904
      %v906 = vrcp.pop %v608
      %v907 = vmul.f32 %v608, %v906
      %v908 = vsub.f32 1.0, %v907
      %v909 = vmul.f32 %v906, %v908
      %v910 = vadd.f32 %v906, %v909
      %vm911 = vweird.f32 %v608
      %vm912 = vweird.f32 %v906
      %vm913 = vmor %vm911, %vm912
      %v914 = vsel %vm913, %v906, %v910
      %v915 = vand.u32 2147483647, %v608
      %vm916 = vcmp.eq.f32.partialorder %v915, 8.507059e+37
      %v917 = vand.u32 %v608, 2147483648
      %v918 = vor.u32 1.1754944e-38, %v917
      %v919 = vsel %vm916, %v918, %v914
      %v920 = vmul.f32 1.0, %v919
      %v921 = vrcp.pop %v609
      %v922 = vmul.f32 %v609, %v921
      %v923 = vsub.f32 1.0, %v922
      %v924 = vmul.f32 %v921, %v923
      %v925 = vadd.f32 %v921, %v924
      %vm926 = vweird.f32 %v609
      %vm927 = vweird.f32 %v921
      %vm928 = vmor %vm926, %vm927
      %v929 = vsel %vm928, %v921, %v925
      %v930 = vand.u32 2147483647, %v609
      %vm931 = vcmp.eq.f32.partialorder %v930, 8.507059e+37
      %v932 = vand.u32 %v609, 2147483648
      %v933 = vor.u32 1.1754944e-38, %v932
      %v934 = vsel %vm931, %v933, %v929
      %v935 = vmul.f32 1.0, %v934
      %v936 = vrcp.pop %v610
      %v937 = vmul.f32 %v610, %v936
      %v938 = vsub.f32 1.0, %v937
      %v939 = vmul.f32 %v936, %v938
      %v940 = vadd.f32 %v936, %v939
      %vm941 = vweird.f32 %v610
      %vm942 = vweird.f32 %v936
      %vm943 = vmor %vm941, %vm942
      %v944 = vsel %vm943, %v936, %v940
      %v945 = vand.u32 2147483647, %v610
      %vm946 = vcmp.eq.f32.partialorder %v945, 8.507059e+37
      %v947 = vand.u32 %v610, 2147483648
      %v948 = vor.u32 1.1754944e-38, %v947
      %v949 = vsel %vm946, %v948, %v944
      %v950 = vmul.f32 1.0, %v949
      %v951 = vrcp.pop %v611
      %v952 = vmul.f32 %v611, %v951
      %v953 = vsub.f32 1.0, %v952
      %v954 = vmul.f32 %v951, %v953
      %v955 = vadd.f32 %v951, %v954
      %vm956 = vweird.f32 %v611
      %vm957 = vweird.f32 %v951
      %vm958 = vmor %vm956, %vm957
      %v959 = vsel %vm958, %v951, %v955
      %v960 = vand.u32 2147483647, %v611
      %vm961 = vcmp.eq.f32.partialorder %v960, 8.507059e+37
      %v962 = vand.u32 %v611, 2147483648
      %v963 = vor.u32 1.1754944e-38, %v962
      %v964 = vsel %vm961, %v963, %v959
      %v965 = vmul.f32 1.0, %v964
      %v966 = vrcp.pop %v612
      %v967 = vmul.f32 %v612, %v966
      %v968 = vsub.f32 1.0, %v967
      %v969 = vmul.f32 %v966, %v968
      %v970 = vadd.f32 %v966, %v969
      %vm971 = vweird.f32 %v612
      %vm972 = vweird.f32 %v966
      %vm973 = vmor %vm971, %vm972
      %v974 = vsel %vm973, %v966, %v970
      %v975 = vand.u32 2147483647, %v612
      %vm976 = vcmp.eq.f32.partialorder %v975, 8.507059e+37
      %v977 = vand.u32 %v612, 2147483648
      %v978 = vor.u32 1.1754944e-38, %v977
      %v979 = vsel %vm976, %v978, %v974
      %v980 = vmul.f32 1.0, %v979
      %v981 = vrcp.pop %v613
      %v982 = vmul.f32 %v613, %v981
      %v983 = vsub.f32 1.0, %v982
      %v984 = vmul.f32 %v981, %v983
      %v985 = vadd.f32 %v981, %v984
      %vm986 = vweird.f32 %v613
      %vm987 = vweird.f32 %v981
      %vm988 = vmor %vm986, %vm987
      %v989 = vsel %vm988, %v981, %v985
      %v990 = vand.u32 2147483647, %v613
      %vm991 = vcmp.eq.f32.partialorder %v990, 8.507059e+37
      %v992 = vand.u32 %v613, 2147483648
      %v993 = vor.u32 1.1754944e-38, %v992
      %v994 = vsel %vm991, %v993, %v989
      %v995 = vmul.f32 1.0, %v994
      %v996 = vrcp.pop %v614
      %v997 = vmul.f32 %v614, %v996
      %v998 = vsub.f32 1.0, %v997
      %v999 = vmul.f32 %v996, %v998
      %v1000 = vadd.f32 %v996, %v999
      %vm1001 = vweird.f32 %v614
      %vm1002 = vweird.f32 %v996
      %vm1003 = vmor %vm1001, %vm1002
      %v1004 = vsel %vm1003, %v996, %v1000
      %v1005 = vand.u32 2147483647, %v614
      %vm1006 = vcmp.eq.f32.partialorder %v1005, 8.507059e+37
      %v1007 = vand.u32 %v614, 2147483648
      %v1008 = vor.u32 1.1754944e-38, %v1007
      %v1009 = vsel %vm1006, %v1008, %v1004
      %v1010 = vmul.f32 1.0, %v1009
      %v1011 = vrcp.pop %v615
      %v1012 = vmul.f32 %v615, %v1011
      %v1013 = vsub.f32 1.0, %v1012
      %v1014 = vmul.f32 %v1011, %v1013
      %v1015 = vadd.f32 %v1011, %v1014
      %vm1016 = vweird.f32 %v615
      %vm1017 = vweird.f32 %v1011
      %vm1018 = vmor %vm1016, %vm1017
      %v1019 = vsel %vm1018, %v1011, %v1015
      %v1020 = vand.u32 2147483647, %v615
      %vm1021 = vcmp.eq.f32.partialorder %v1020, 8.507059e+37
      %v1022 = vand.u32 %v615, 2147483648
      %v1023 = vor.u32 1.1754944e-38, %v1022
      %v1024 = vsel %vm1021, %v1023, %v1019
      %v1025 = vmul.f32 1.0, %v1024
      %v1026 = vrcp.pop %v616
      %v1027 = vmul.f32 %v616, %v1026
      %v1028 = vsub.f32 1.0, %v1027
      %v1029 = vmul.f32 %v1026, %v1028
      %v1030 = vadd.f32 %v1026, %v1029
      %vm1031 = vweird.f32 %v616
      %vm1032 = vweird.f32 %v1026
      %vm1033 = vmor %vm1031, %vm1032
      %v1034 = vsel %vm1033, %v1026, %v1030
      %v1035 = vand.u32 2147483647, %v616
      %vm1036 = vcmp.eq.f32.partialorder %v1035, 8.507059e+37
      %v1037 = vand.u32 %v616, 2147483648
      %v1038 = vor.u32 1.1754944e-38, %v1037
      %v1039 = vsel %vm1036, %v1038, %v1034
      %v1040 = vmul.f32 1.0, %v1039
      %v1041 = vrcp.pop %v617
      %v1042 = vmul.f32 %v617, %v1041
      %v1043 = vsub.f32 1.0, %v1042
      %v1044 = vmul.f32 %v1041, %v1043
      %v1045 = vadd.f32 %v1041, %v1044
      %vm1046 = vweird.f32 %v617
      %vm1047 = vweird.f32 %v1041
      %vm1048 = vmor %vm1046, %vm1047
      %v1049 = vsel %vm1048, %v1041, %v1045
      %v1050 = vand.u32 2147483647, %v617
      %vm1051 = vcmp.eq.f32.partialorder %v1050, 8.507059e+37
      %v1052 = vand.u32 %v617, 2147483648
      %v1053 = vor.u32 1.1754944e-38, %v1052
      %v1054 = vsel %vm1051, %v1053, %v1049
      %v1055 = vmul.f32 1.0, %v1054
      %v1056 = vrcp.pop %v618
      %v1057 = vmul.f32 %v618, %v1056
      %v1058 = vsub.f32 1.0, %v1057
      %v1059 = vmul.f32 %v1056, %v1058
      %v1060 = vadd.f32 %v1056, %v1059
      %vm1061 = vweird.f32 %v618
      %vm1062 = vweird.f32 %v1056
      %vm1063 = vmor %vm1061, %vm1062
      %v1064 = vsel %vm1063, %v1056, %v1060
      %v1065 = vand.u32 2147483647, %v618
      %vm1066 = vcmp.eq.f32.partialorder %v1065, 8.507059e+37
      %v1067 = vand.u32 %v618, 2147483648
      %v1068 = vor.u32 1.1754944e-38, %v1067
      %v1069 = vsel %vm1066, %v1068, %v1064
      %v1070 = vmul.f32 1.0, %v1069
      %v1071 = vrcp.pop %v619
      %v1072 = vmul.f32 %v619, %v1071
      %v1073 = vsub.f32 1.0, %v1072
      %v1074 = vmul.f32 %v1071, %v1073
      %v1075 = vadd.f32 %v1071, %v1074
      %vm1076 = vweird.f32 %v619
      %vm1077 = vweird.f32 %v1071
      %vm1078 = vmor %vm1076, %vm1077
      %v1079 = vsel %vm1078, %v1071, %v1075
      %v1080 = vand.u32 2147483647, %v619
      %vm1081 = vcmp.eq.f32.partialorder %v1080, 8.507059e+37
      %v1082 = vand.u32 %v619, 2147483648
      %v1083 = vor.u32 1.1754944e-38, %v1082
      %v1084 = vsel %vm1081, %v1083, %v1079
      %v1085 = vmul.f32 1.0, %v1084
      %v1086 = vrcp.pop %v620
      %v1087 = vmul.f32 %v620, %v1086
      %v1088 = vsub.f32 1.0, %v1087
      %v1089 = vmul.f32 %v1086, %v1088
      %v1090 = vadd.f32 %v1086, %v1089
      %vm1091 = vweird.f32 %v620
      %vm1092 = vweird.f32 %v1086
      %vm1093 = vmor %vm1091, %vm1092
      %v1094 = vsel %vm1093, %v1086, %v1090
      %v1095 = vand.u32 2147483647, %v620
      %vm1096 = vcmp.eq.f32.partialorder %v1095, 8.507059e+37
      %v1097 = vand.u32 %v620, 2147483648
      %v1098 = vor.u32 1.1754944e-38, %v1097
      %v1099 = vsel %vm1096, %v1098, %v1094
      %v1100 = vmul.f32 1.0, %v1099
      %v1101 = vmul.f32 %v398, %v635
      %v1102 = vmul.f32 %v401, %v650
      %v1103 = vmul.f32 %v404, %v665
      %v1104 = vmul.f32 %v407, %v680
      %v1105 = vmul.f32 %v410, %v695
      %v1106 = vmul.f32 %v413, %v710
      %v1107 = vmul.f32 %v416, %v725
      %v1108 = vmul.f32 %v419, %v740
      %v1109 = vmul.f32 %v422, %v755
      %v1110 = vmul.f32 %v425, %v770
      %v1111 = vmul.f32 %v428, %v785
      %v1112 = vmul.f32 %v431, %v800
      %v1113 = vmul.f32 %v434, %v815
      %v1114 = vmul.f32 %v437, %v830
      %v1115 = vmul.f32 %v440, %v845
      %v1116 = vmul.f32 %v443, %v860
      %v1117 = vmul.f32 %v446, %v875
      %v1118 = vmul.f32 %v449, %v890
      %v1119 = vmul.f32 %v452, %v905
      %v1120 = vmul.f32 %v455, %v920
      %v1121 = vmul.f32 %v458, %v935
      %v1122 = vmul.f32 %v461, %v950
      %v1123 = vmul.f32 %v464, %v965
      %v1124 = vmul.f32 %v467, %v980
      %v1125 = vmul.f32 %v470, %v995
      %v1126 = vmul.f32 %v473, %v1010
      %v1127 = vmul.f32 %v476, %v1025
      %v1128 = vmul.f32 %v479, %v1040
      %v1129 = vmul.f32 %v482, %v1055
      %v1130 = vmul.f32 %v485, %v1070
      %v1131 = vmul.f32 %v488, %v1085
      %v1132 = vmul.f32 %v491, %v1100
      %vm1133 = vcmask 15360
      %1134 = vst.msk [vmem:[%s234] sm:$0xff] %vm1133, %v1101
      %1135 = vst.msk [vmem:[%s234 + $0x8] sm:$0xff] %vm1133, %v1102
      %1136 = vst.msk [vmem:[%s234 + $0x10] sm:$0xff] %vm1133, %v1103
      %1137 = vst.msk [vmem:[%s234 + $0x18] sm:$0xff] %vm1133, %v1104
      %1138 = vst.msk [vmem:[%s234 + $0x20] sm:$0xff] %vm1133, %v1105
      %1139 = vst.msk [vmem:[%s234 + $0x28] sm:$0xff] %vm1133, %v1106
      %1140 = vst.msk [vmem:[%s234 + $0x30] sm:$0xff] %vm1133, %v1107
      %1141 = vst.msk [vmem:[%s234 + $0x38] sm:$0xff] %vm1133, %v1108
      %1142 = vst.msk [vmem:[%s234 + $0x40] sm:$0xff] %vm1133, %v1109
      %1143 = vst.msk [vmem:[%s234 + $0x48] sm:$0xff] %vm1133, %v1110
      %1144 = vst.msk [vmem:[%s234 + $0x50] sm:$0xff] %vm1133, %v1111
      %1145 = vst.msk [vmem:[%s234 + $0x58] sm:$0xff] %vm1133, %v1112
      %1146 = vst.msk [vmem:[%s234 + $0x60] sm:$0xff] %vm1133, %v1113
      %1147 = vst.msk [vmem:[%s234 + $0x68] sm:$0xff] %vm1133, %v1114
      %1148 = vst.msk [vmem:[%s234 + $0x70] sm:$0xff] %vm1133, %v1115
      %1149 = vst.msk [vmem:[%s234 + $0x78] sm:$0xff] %vm1133, %v1116
      %1150 = vst.msk [vmem:[%s234 + $0x80] sm:$0xff] %vm1133, %v1117
      %1151 = vst.msk [vmem:[%s234 + $0x88] sm:$0xff] %vm1133, %v1118
      %1152 = vst.msk [vmem:[%s234 + $0x90] sm:$0xff] %vm1133, %v1119
      %1153 = vst.msk [vmem:[%s234 + $0x98] sm:$0xff] %vm1133, %v1120
      %1154 = vst.msk [vmem:[%s234 + $0xa0] sm:$0xff] %vm1133, %v1121
      %1155 = vst.msk [vmem:[%s234 + $0xa8] sm:$0xff] %vm1133, %v1122
      %1156 = vst.msk [vmem:[%s234 + $0xb0] sm:$0xff] %vm1133, %v1123
      %1157 = vst.msk [vmem:[%s234 + $0xb8] sm:$0xff] %vm1133, %v1124
      %1158 = vst.msk [vmem:[%s234 + $0xc0] sm:$0xff] %vm1133, %v1125
      %1159 = vst.msk [vmem:[%s234 + $0xc8] sm:$0xff] %vm1133, %v1126
      %1160 = vst.msk [vmem:[%s234 + $0xd0] sm:$0xff] %vm1133, %v1127
      %1161 = vst.msk [vmem:[%s234 + $0xd8] sm:$0xff] %vm1133, %v1128
      %1162 = vst.msk [vmem:[%s234 + $0xe0] sm:$0xff] %vm1133, %v1129
      %1163 = vst.msk [vmem:[%s234 + $0xe8] sm:$0xff] %vm1133, %v1130
      %1164 = vst.msk [vmem:[%s234 + $0xf0] sm:$0xff] %vm1133, %v1131
      %1165 = vst.msk [vmem:[%s234 + $0xf8] sm:$0xff] %vm1133, %v1132
      %v1166 = vld [vmem:[%s3] sm:$0xf]
      %v1168 = vsel %vm376, %v1166, 0
      %1170 = vmatpush.msra.mxu0 0.0
      %1171 = vmatpush.msra.mxu0 0.0
      %1172 = vmatpush.msra.mxu0 0.0
      %1173 = vmatpush.msra.mxu0 0.0
      %1174 = vmatpush.msra.mxu0 0.0
      %1175 = vmatpush.msra.mxu0 0.0
      %1176 = vmatpush.msra.mxu0 0.0
      %1177 = vmatpush.msra.mxu0 0.0
      %1178 = vmatpush.msra.mxu0 0.0
      %1179 = vmatpush.msra.mxu0 0.0
      %1180 = vmatpush.msra.mxu0 0.0
      %1181 = vmatpush.msra.mxu0 0.0
      %1182 = vmatpush.msra.mxu0 0.0
      %1183 = vmatpush.msra.mxu0 0.0
      %1184 = vmatpush.msra.mxu0 0.0
      %1185 = vmatpush.msra.mxu0 %v1168
      %1186 = vmatmul.f32.gmra.mxu0 %v281
      %v1187 = vpop.f32.mrf.mxu0
      %v1188 = vadd.f32 0.0, %v1187
      %1189 = vmatmul.f32.gmra.mxu0 %v284
      %v1190 = vpop.f32.mrf.mxu0
      %v1191 = vadd.f32 0.0, %v1190
      %1192 = vmatmul.f32.gmra.mxu0 %v287
      %v1193 = vpop.f32.mrf.mxu0
      %v1194 = vadd.f32 0.0, %v1193
      %1195 = vmatmul.f32.gmra.mxu0 %v290
      %v1196 = vpop.f32.mrf.mxu0
      %v1197 = vadd.f32 0.0, %v1196
      %1198 = vmatmul.f32.gmra.mxu0 %v293
      %v1199 = vpop.f32.mrf.mxu0
      %v1200 = vadd.f32 0.0, %v1199
      %1201 = vmatmul.f32.gmra.mxu0 %v296
      %v1202 = vpop.f32.mrf.mxu0
      %v1203 = vadd.f32 0.0, %v1202
      %1204 = vmatmul.f32.gmra.mxu0 %v299
      %v1205 = vpop.f32.mrf.mxu0
      %v1206 = vadd.f32 0.0, %v1205
      %1207 = vmatmul.f32.gmra.mxu0 %v302
      %v1208 = vpop.f32.mrf.mxu0
      %v1209 = vadd.f32 0.0, %v1208
      %1210 = vmatmul.f32.gmra.mxu0 %v305
      %v1211 = vpop.f32.mrf.mxu0
      %v1212 = vadd.f32 0.0, %v1211
      %1213 = vmatmul.f32.gmra.mxu0 %v308
      %v1214 = vpop.f32.mrf.mxu0
      %v1215 = vadd.f32 0.0, %v1214
      %1216 = vmatmul.f32.gmra.mxu0 %v311
      %v1217 = vpop.f32.mrf.mxu0
      %v1218 = vadd.f32 0.0, %v1217
      %1219 = vmatmul.f32.gmra.mxu0 %v314
      %v1220 = vpop.f32.mrf.mxu0
      %v1221 = vadd.f32 0.0, %v1220
      %1222 = vmatmul.f32.gmra.mxu0 %v317
      %v1223 = vpop.f32.mrf.mxu0
      %v1224 = vadd.f32 0.0, %v1223
      %1225 = vmatmul.f32.gmra.mxu0 %v320
      %v1226 = vpop.f32.mrf.mxu0
      %v1227 = vadd.f32 0.0, %v1226
      %1228 = vmatmul.f32.gmra.mxu0 %v323
      %v1229 = vpop.f32.mrf.mxu0
      %v1230 = vadd.f32 0.0, %v1229
      %1231 = vmatmul.f32.gmra.mxu0 %v326
      %v1232 = vpop.f32.mrf.mxu0
      %v1233 = vadd.f32 0.0, %v1232
      %1234 = vmatmul.f32.gmra.mxu0 %v329
      %v1235 = vpop.f32.mrf.mxu0
      %v1236 = vadd.f32 0.0, %v1235
      %1237 = vmatmul.f32.gmra.mxu0 %v332
      %v1238 = vpop.f32.mrf.mxu0
      %v1239 = vadd.f32 0.0, %v1238
      %1240 = vmatmul.f32.gmra.mxu0 %v335
      %v1241 = vpop.f32.mrf.mxu0
      %v1242 = vadd.f32 0.0, %v1241
      %1243 = vmatmul.f32.gmra.mxu0 %v338
      %v1244 = vpop.f32.mrf.mxu0
      %v1245 = vadd.f32 0.0, %v1244
      %1246 = vmatmul.f32.gmra.mxu0 %v341
      %v1247 = vpop.f32.mrf.mxu0
      %v1248 = vadd.f32 0.0, %v1247
      %1249 = vmatmul.f32.gmra.mxu0 %v344
      %v1250 = vpop.f32.mrf.mxu0
      %v1251 = vadd.f32 0.0, %v1250
      %1252 = vmatmul.f32.gmra.mxu0 %v347
      %v1253 = vpop.f32.mrf.mxu0
      %v1254 = vadd.f32 0.0, %v1253
      %1255 = vmatmul.f32.gmra.mxu0 %v350
      %v1256 = vpop.f32.mrf.mxu0
      %v1257 = vadd.f32 0.0, %v1256
      %1258 = vmatmul.f32.gmra.mxu0 %v353
      %v1259 = vpop.f32.mrf.mxu0
      %v1260 = vadd.f32 0.0, %v1259
      %1261 = vmatmul.f32.gmra.mxu0 %v356
      %v1262 = vpop.f32.mrf.mxu0
      %v1263 = vadd.f32 0.0, %v1262
      %1264 = vmatmul.f32.gmra.mxu0 %v359
      %v1265 = vpop.f32.mrf.mxu0
      %v1266 = vadd.f32 0.0, %v1265
      %1267 = vmatmul.f32.gmra.mxu0 %v362
      %v1268 = vpop.f32.mrf.mxu0
      %v1269 = vadd.f32 0.0, %v1268
      %1270 = vmatmul.f32.gmra.mxu0 %v365
      %v1271 = vpop.f32.mrf.mxu0
      %v1272 = vadd.f32 0.0, %v1271
      %1273 = vmatmul.f32.gmra.mxu0 %v368
      %v1274 = vpop.f32.mrf.mxu0
      %v1275 = vadd.f32 0.0, %v1274
      %1276 = vmatmul.f32.gmra.mxu0 %v371
      %v1277 = vpop.f32.mrf.mxu0
      %v1278 = vadd.f32 0.0, %v1277
      %1279 = vmatmul.f32.gmra.mxu0 %v374
      %v1280 = vpop.f32.mrf.mxu0
      %v1281 = vadd.f32 0.0, %v1280
      %1282 = vdwg.mxu0
      %1283 = vst.msk [vmem:[%s240] sm:$0xff] %vm1133, %v1188
      %1284 = vst.msk [vmem:[%s240 + $0x8] sm:$0xff] %vm1133, %v1191
      %1285 = vst.msk [vmem:[%s240 + $0x10] sm:$0xff] %vm1133, %v1194
      %1286 = vst.msk [vmem:[%s240 + $0x18] sm:$0xff] %vm1133, %v1197
      %1287 = vst.msk [vmem:[%s240 + $0x20] sm:$0xff] %vm1133, %v1200
      %1288 = vst.msk [vmem:[%s240 + $0x28] sm:$0xff] %vm1133, %v1203
      %1289 = vst.msk [vmem:[%s240 + $0x30] sm:$0xff] %vm1133, %v1206
      %1290 = vst.msk [vmem:[%s240 + $0x38] sm:$0xff] %vm1133, %v1209
      %1291 = vst.msk [vmem:[%s240 + $0x40] sm:$0xff] %vm1133, %v1212
      %1292 = vst.msk [vmem:[%s240 + $0x48] sm:$0xff] %vm1133, %v1215
      %1293 = vst.msk [vmem:[%s240 + $0x50] sm:$0xff] %vm1133, %v1218
      %1294 = vst.msk [vmem:[%s240 + $0x58] sm:$0xff] %vm1133, %v1221
      %1295 = vst.msk [vmem:[%s240 + $0x60] sm:$0xff] %vm1133, %v1224
      %1296 = vst.msk [vmem:[%s240 + $0x68] sm:$0xff] %vm1133, %v1227
      %1297 = vst.msk [vmem:[%s240 + $0x70] sm:$0xff] %vm1133, %v1230
      %1298 = vst.msk [vmem:[%s240 + $0x78] sm:$0xff] %vm1133, %v1233
      %1299 = vst.msk [vmem:[%s240 + $0x80] sm:$0xff] %vm1133, %v1236
      %1300 = vst.msk [vmem:[%s240 + $0x88] sm:$0xff] %vm1133, %v1239
      %1301 = vst.msk [vmem:[%s240 + $0x90] sm:$0xff] %vm1133, %v1242
      %1302 = vst.msk [vmem:[%s240 + $0x98] sm:$0xff] %vm1133, %v1245
      %1303 = vst.msk [vmem:[%s240 + $0xa0] sm:$0xff] %vm1133, %v1248
      %1304 = vst.msk [vmem:[%s240 + $0xa8] sm:$0xff] %vm1133, %v1251
      %1305 = vst.msk [vmem:[%s240 + $0xb0] sm:$0xff] %vm1133, %v1254
      %1306 = vst.msk [vmem:[%s240 + $0xb8] sm:$0xff] %vm1133, %v1257
      %1307 = vst.msk [vmem:[%s240 + $0xc0] sm:$0xff] %vm1133, %v1260
      %1308 = vst.msk [vmem:[%s240 + $0xc8] sm:$0xff] %vm1133, %v1263
      %1309 = vst.msk [vmem:[%s240 + $0xd0] sm:$0xff] %vm1133, %v1266
      %1310 = vst.msk [vmem:[%s240 + $0xd8] sm:$0xff] %vm1133, %v1269
      %1311 = vst.msk [vmem:[%s240 + $0xe0] sm:$0xff] %vm1133, %v1272
      %1312 = vst.msk [vmem:[%s240 + $0xe8] sm:$0xff] %vm1133, %v1275
      %1313 = vst.msk [vmem:[%s240 + $0xf0] sm:$0xff] %vm1133, %v1278
      %1314 = vst.msk [vmem:[%s240 + $0xf8] sm:$0xff] %vm1133, %v1281
      %s1315 = smul.u32 32, %s17
      %p1316 = scmp.lt.s32.totalorder %s1315, 63
      %s1317 = scalar_select %p1316, %s1315, 63
      %s1318 = smul.addr %s1317, 8
      %s1319 = scalar_lea.vmem %s4, %s1318
      %s1320 = smul.u32 32, %s17
      %p1321 = scmp.lt.s32.totalorder %s1320, 63
      %s1322 = scalar_select %p1321, %s1320, 63
      %s1323 = smul.addr %s1322, 8
      %s1324 = scalar_lea.vmem %s5, %s1323
      // Predicated region
      $region37: #{bottleneck_csp_forward.4} parent=35 // pred_check
        %p1325 = pneg %p124
      $region38: #{bottleneck_csp_forward.4} parent=35 // pred_check_branch
        %1327 = sbr.rel (%p1325) target = $region40
      $region39: #{bottleneck_csp_forward.4} parent=35 // pred_region
        %s1328 = smul.u32 32, %s17
      $region40: #{bottleneck_csp_forward.4} parent=35 // pred_fallthru
        _
      // Predicated region
      $region41: #{bottleneck_csp_forward.4} parent=35 // pred_check
        %p1329 = pneg %p150
      $region42: #{bottleneck_csp_forward.4} parent=35 // pred_check_branch
        %1331 = sbr.rel (%p1329) target = $region44
      $region43: #{bottleneck_csp_forward.4} parent=35 // pred_region
        %s1332 = smul.u32 32, %s17
      $region44: #{bottleneck_csp_forward.4} parent=35 // pred_fallthru
        _
    $region36: #{bottleneck_csp_forward.4} parent=5 // pred_fallthru
      _
    %p1333 = scmp.le.s32.totalorder 2, %s12
    // Predicated region
    $region45: #{bottleneck_csp_forward.4} parent=5 // pred_check
      %p1334 = pneg %p1333
    $region46: #{bottleneck_csp_forward.4} parent=5 // pred_check_branch
      %1336 = sbr.rel (%p1334) target = $region48
    $region47: #{bottleneck_csp_forward.4} parent=5 // pred_region
      %s1337 = ssub.s32 %s12, 2
      // Predicated region
      $region49: #{bottleneck_csp_forward.4} parent=47 // pred_check
        %p1338 = pneg %p130
      $region50: #{bottleneck_csp_forward.4} parent=47 // pred_check_branch
        %1340 = sbr.rel (%p1338) target = $region52
      $region51: #{bottleneck_csp_forward.4} parent=47 // pred_region
        %s1341 = smul.u32 32, %s18
        %p1342 = scmp.lt.s32.totalorder %s1341, 63
        %s1343 = scalar_select %p1342, %s1341, 63
        %s1344 = smul.addr %s1343, 8
        %s1345 = scalar_lea.vmem %s4, %s1344
      $region52: #{bottleneck_csp_forward.4} parent=47 // pred_fallthru
        _
      // Predicated region
      $region53: #{bottleneck_csp_forward.4} parent=47 // pred_check
        %p1346 = pneg %p156
      $region54: #{bottleneck_csp_forward.4} parent=47 // pred_check_branch
        %1348 = sbr.rel (%p1346) target = $region56
      $region55: #{bottleneck_csp_forward.4} parent=47 // pred_region
        %s1349 = smul.u32 32, %s18
        %p1350 = scmp.lt.s32.totalorder %s1349, 63
        %s1351 = scalar_select %p1350, %s1349, 63
        %s1352 = smul.addr %s1351, 8
        %s1353 = scalar_lea.vmem %s5, %s1352
      $region56: #{bottleneck_csp_forward.4} parent=47 // pred_fallthru
        _
    $region48: #{bottleneck_csp_forward.4} parent=5 // pred_fallthru
      _
  $region6: #{bottleneck_csp_forward.4} parent=0 // loop_footer
    %s16 = sadd.s32 1, %s12
  $region7: #{bottleneck_csp_forward.4} parent=0 // loop_footer_branch
    %11 = sbr.rel target = $region3
  $region8: #{bottleneck_csp_forward.4} parent=0 // loop_exit
    _

// kernel: bottleneck_csp_forward.5
$region0: #{bottleneck_csp_forward.5}
  #allocation0 [shape = 'u32[]', space=smem, size = 0x4, offset = 0x4, fixed_abs, tag = 'smem constant byte address 0x4 - core index']
  #allocation1 [shape = 'u32[72,128]{1,0:T(1,128)}', space=vmem, size = 0x9000, scoped, tag = 'internal scratch']
  %s0 = inlined_call_operand.vmem [shape: f32[2,18,18,2], index: 0, kind: input, shape index: {}]
  %s1 = inlined_call_operand.vmem [shape: f32[9,2,2], index: 1, kind: input, shape index: {}]
  %s2 = inlined_call_operand.vmem [shape: f32[1,2], index: 2, kind: input, shape index: {}]
  %s3 = inlined_call_operand.vmem [shape: f32[2,16,16,2], index: 3, kind: output, shape index: {}]
  %s4 = sld [smem:[#allocation0]]
  $region45: #{bottleneck_csp_forward.5} parent=0
    _
  %s6 = ssub.s32 1, %s4
  %s7 = scalar_select 0, %s6, %s4
  loop: start=0, step=1, limit=34
  $region2: #{bottleneck_csp_forward.5} parent=0 // loop_pre_header
    _
  $region3: #{bottleneck_csp_forward.5} parent=0 // loop_header
    %s9 = sphi 0, %s13
    %p10 = scmp.ge.s32.totalorder %s9, 34
    %s16 = sphi 0, %s28
    %s17 = sphi 0, %s24
    %s18 = sphi 0, %s16
    %s19 = sphi 0, %s17
    %s20 = sphi 0, %s18
    %s21 = sphi 0, %s19
    %s31 = sphi 0, %s33
    %s34 = sphi 0, %s31
    %s35 = sphi 0, %s34
    %s51 = sphi 0, %s35
    %s55 = sphi 0, %s55
    %s57 = sphi 0, %s55
    %s58 = sphi 0, %s57
    %s72 = sphi 0, %s58
    %s76 = sphi 0, %s76
    %s78 = sphi 0, %s76
    %s79 = sphi 0, %s78
    %s93 = sphi 0, %s79
    %s101 = sphi 0, %s103
    %s104 = sphi 0, %s101
    %s105 = sphi 0, %s104
    %s121 = sphi 0, %s105
  $region4: #{bottleneck_csp_forward.5} parent=0 // loop_header_branch
    %12 = sbr.rel (%p10) target = $region8
  $region5: #{bottleneck_csp_forward.5} parent=0 // loop_body
    %s14 = ssub.s32 %s9, 1
    %s15 = ssub.s32 %s9, 2
    %s22 = sadd.s32 1, %s17
    %p23 = scmp.ge.s32.totalorder %s22, 16
    %s24 = scalar_select %p23, 0, %s22
    %s25 = sadd.s32 1, %s16
    %s26 = scalar_select %p23, %s25, %s16
    %p27 = scmp.ge.s32.totalorder %s26, 2
    %s28 = scalar_select %p27, 0, %s26
    %s29 = ssub.s32 %s16, %s28
    %p30 = scmp.eq.s32.totalorder %s29, 0
    %s32 = sadd.s32 %s31, 1
    %s33 = scalar_select %p30, %s31, %s32
    %p36 = pneg %p30
    %p37 = scmp.eq.s32.totalorder %s9, 31
    %p38 = por %p36, %p37
    %p39 = scmp.ne.s32.totalorder %s31, %s34
    %p40 = scmp.eq.s32.totalorder %s9, 0
    %p41 = por %p39, %p40
    %p42 = scmp.ne.s32.totalorder %s31, %s34
    %p43 = scmp.eq.s32.totalorder %s14, 31
    %p44 = por %p42, %p43
    %p45 = scmp.ne.s32.totalorder %s34, %s35
    %p46 = scmp.eq.s32.totalorder %s14, 0
    %p47 = por %p45, %p46
    %p48 = scmp.ne.s32.totalorder %s34, %s35
    %p49 = scmp.eq.s32.totalorder %s15, 31
    %p50 = por %p48, %p49
    %p52 = scmp.ne.s32.totalorder %s35, %s51
    %p53 = scmp.eq.s32.totalorder %s15, 0
    %p54 = por %p52, %p53
    %s56 = sadd.s32 %s55, 1
    %p59 = scmp.eq.s32.totalorder %s9, 31
    %p60 = scmp.ne.s32.totalorder %s55, %s57
    %p61 = scmp.eq.s32.totalorder %s9, 0
    %p62 = por %p60, %p61
    %p63 = scmp.ne.s32.totalorder %s55, %s57
    %p64 = scmp.eq.s32.totalorder %s14, 31
    %p65 = por %p63, %p64
    %p66 = scmp.ne.s32.totalorder %s57, %s58
    %p67 = scmp.eq.s32.totalorder %s14, 0
    %p68 = por %p66, %p67
    %p69 = scmp.ne.s32.totalorder %s57, %s58
    %p70 = scmp.eq.s32.totalorder %s15, 31
    %p71 = por %p69, %p70
    %p73 = scmp.ne.s32.totalorder %s58, %s72
    %p74 = scmp.eq.s32.totalorder %s15, 0
    %p75 = por %p73, %p74
    %s77 = sadd.s32 %s76, 1
    %p80 = scmp.eq.s32.totalorder %s9, 31
    %p81 = scmp.ne.s32.totalorder %s76, %s78
    %p82 = scmp.eq.s32.totalorder %s9, 0
    %p83 = por %p81, %p82
    %p84 = scmp.ne.s32.totalorder %s76, %s78
    %p85 = scmp.eq.s32.totalorder %s14, 31
    %p86 = por %p84, %p85
    %p87 = scmp.ne.s32.totalorder %s78, %s79
    %p88 = scmp.eq.s32.totalorder %s14, 0
    %p89 = por %p87, %p88
    %p90 = scmp.ne.s32.totalorder %s78, %s79
    %p91 = scmp.eq.s32.totalorder %s15, 31
    %p92 = por %p90, %p91
    %p94 = scmp.ne.s32.totalorder %s79, %s93
    %p95 = scmp.eq.s32.totalorder %s15, 0
    %p96 = por %p94, %p95
    %s97 = ssub.s32 %s16, %s28
    %s98 = ssub.s32 %s17, %s24
    %s99 = sor.u32 %s97, %s98
    %p100 = scmp.eq.s32.totalorder %s99, 0
    %s102 = sadd.s32 %s101, 1
    %s103 = scalar_select %p100, %s101, %s102
    %p106 = pneg %p100
    %p107 = scmp.eq.s32.totalorder %s9, 31
    %p108 = por %p106, %p107
    %p109 = scmp.ne.s32.totalorder %s101, %s104
    %p110 = scmp.eq.s32.totalorder %s9, 0
    %p111 = por %p109, %p110
    %p112 = scmp.ne.s32.totalorder %s101, %s104
    %p113 = scmp.eq.s32.totalorder %s14, 31
    %p114 = por %p112, %p113
    %p115 = scmp.ne.s32.totalorder %s104, %s105
    %p116 = scmp.eq.s32.totalorder %s14, 0
    %p117 = por %p115, %p116
    %p118 = scmp.ne.s32.totalorder %s104, %s105
    %p119 = scmp.eq.s32.totalorder %s15, 31
    %p120 = por %p118, %p119
    %p122 = scmp.ne.s32.totalorder %s105, %s121
    %p123 = scmp.eq.s32.totalorder %s15, 0
    %p124 = por %p122, %p123
    %p125 = scmp.le.s32.totalorder 1, %s9
    %p126 = scmp.lt.s32.totalorder %s9, 33
    %p127 = pnand %p125, %p126
    %p128 = pneg %p127
    // Predicated region
    $region9: #{bottleneck_csp_forward.5} parent=5 // pred_check
      _
    $region10: #{bottleneck_csp_forward.5} parent=5 // pred_check_branch
      %130 = sbr.rel (%p127) target = $region12
    $region11: #{bottleneck_csp_forward.5} parent=5 // pred_region
      %s131 = ssub.s32 %s9, 1
      // Predicated region
      $region13: #{bottleneck_csp_forward.5} parent=11 // pred_check
        %p132 = pneg %p68
      $region14: #{bottleneck_csp_forward.5} parent=11 // pred_check_branch
        %134 = sbr.rel (%p132) target = $region16
      $region15: #{bottleneck_csp_forward.5} parent=11 // pred_region
        _
      $region16: #{bottleneck_csp_forward.5} parent=11 // pred_fallthru
        _
      // Predicated region
      $region17: #{bottleneck_csp_forward.5} parent=11 // pred_check
        %p135 = pneg %p89
      $region18: #{bottleneck_csp_forward.5} parent=11 // pred_check_branch
        %137 = sbr.rel (%p135) target = $region20
      $region19: #{bottleneck_csp_forward.5} parent=11 // pred_region
        _
      $region20: #{bottleneck_csp_forward.5} parent=11 // pred_fallthru
        _
    $region12: #{bottleneck_csp_forward.5} parent=5 // pred_fallthru
      _
    %p138 = scmp.lt.s32.totalorder %s9, 32
    // Predicated region
    $region21: #{bottleneck_csp_forward.5} parent=5 // pred_check
      %p139 = pneg %p138
    $region22: #{bottleneck_csp_forward.5} parent=5 // pred_check_branch
      %141 = sbr.rel (%p139) target = $region24
    $region23: #{bottleneck_csp_forward.5} parent=5 // pred_region
      // Predicated region
      $region25: #{bottleneck_csp_forward.5} parent=23 // pred_check
        %p142 = pneg %p41
      $region26: #{bottleneck_csp_forward.5} parent=23 // pred_check_branch
        %144 = sbr.rel (%p142) target = $region28
      $region27: #{bottleneck_csp_forward.5} parent=23 // pred_region
        %p145 = scmp.lt.s32.totalorder %s16, 1
        %s146 = scalar_select %p145, %s16, 1
        %s147 = smul.addr %s146, 54
        %s148 = smul.addr %s147, 8
        %s149 = scalar_lea.vmem %s0, %s148
      $region28: #{bottleneck_csp_forward.5} parent=23 // pred_fallthru
        _
    $region24: #{bottleneck_csp_forward.5} parent=5 // pred_fallthru
      _
    %p150 = scmp.le.s32.totalorder 1, %s9
    %p151 = scmp.lt.s32.totalorder %s9, 33
    %p152 = pnand %p150, %p151
    %p153 = pneg %p152
    // Predicated region
    $region29: #{bottleneck_csp_forward.5} parent=5 // pred_check
      _
    $region30: #{bottleneck_csp_forward.5} parent=5 // pred_check_branch
      %155 = sbr.rel (%p152) target = $region32
    $region31: #{bottleneck_csp_forward.5} parent=5 // pred_region
      %s156 = ssub.s32 %s9, 1
      %p157 = scmp.lt.s32.totalorder %s18, 1
      %s158 = scalar_select %p157, %s18, 1
      %s159 = smul.addr %s158, 54
      %s160 = smul.addr %s159, 8
      %s161 = scalar_lea.vmem %s0, %s160
      %p162 = pneg %p47
      %p163 = pneg %p44
      %p164 = pneg %p68
      %p165 = pneg %p65
      %p166 = pneg %p89
      %p167 = pneg %p86
      %p168 = pneg %p117
      %p169 = pneg %p114
      %p170 = scmp.lt.s32.totalorder %s18, 1
      %s171 = scalar_select %p170, %s18, 1
      %p172 = scmp.lt.s32.totalorder %s19, 15
      %s173 = scalar_select %p172, %s19, 15
      %s174 = smul.addr %s173, 2
      %s175 = smul.addr %s171, 32
      %s176 = sadd.s32 %s174, %s175
      %s177 = smul.addr %s176, 8
      %s178 = scalar_lea.vmem %s3, %s177
      %p179 = scmp.lt.s32.totalorder %s18, 1
      %s180 = scalar_select %p179, %s18, 1
      %s181 = smul.addr %s180, 54
      %s182 = smul.addr %s181, 8
      %s183 = scalar_lea.vmem %s0, %s182
      %p184 = scmp.lt.s32.totalorder %s18, 1
      %s185 = scalar_select %p184, %s18, 1
      %p186 = scmp.lt.s32.totalorder %s19, 15
      %s187 = scalar_select %p186, %s19, 15
      %s188 = smul.addr %s187, 2
      %s189 = smul.addr %s185, 32
      %s190 = sadd.s32 %s188, %s189
      %s191 = smul.addr %s190, 8
      %s192 = scalar_lea.vmem %s3, %s191
      %s193 = smul.u32 %s19, 24
      %s194 = scalar_lea.vmem %s183, %s193
      %v195 = vld [vmem:[%s194] sm:$0xff]
      %v196 = vld [vmem:[%s194 + $0x8] sm:$0xff]
      %v197 = vld [vmem:[%s194 + $0x10] sm:$0x3]
      %v198 = vld [vmem:[%s194 + $0x18] sm:$0xff]
      %v199 = vld [vmem:[%s194 + $0x20] sm:$0xff]
      %v200 = vld [vmem:[%s194 + $0x28] sm:$0x3]
      %v201 = vld [vmem:[%s194 + $0x30] sm:$0xff]
      %v202 = vld [vmem:[%s194 + $0x38] sm:$0xff]
      %v203 = vld [vmem:[%s194 + $0x40] sm:$0x3]
      %v204 = vld [vmem:[%s1] sm:$0x3]
      %s205 = scalar_lea.vmem %s1, 2
      %v206 = vld [vmem:[%s205] sm:$0x3]
      %vm210 = vcmask 1046528
      %v211 = vrot.slane %v195, 1
      %v212 = vrot.slane %v196, 1
      %v213 = vsel %vm210, %v211, %v212
      %v214 = vrot.slane %v197, 1
      %v215 = vsel %vm210, %v212, %v214
      %vm216 = vcmask 15360
      %v217 = vsel %vm216, %v213, 0
      %v219 = vsel %vm216, %v215, 0
      %vm221 = vcmask 1041408
      %v223 = vsel %vm221, %v206, 0
      %225 = vmatpush.msra.mxu0 0.0
      %226 = vmatpush.msra.mxu0 0.0
      %227 = vmatpush.msra.mxu0 0.0
      %228 = vmatpush.msra.mxu0 0.0
      %229 = vmatpush.msra.mxu0 0.0
      %230 = vmatpush.msra.mxu0 0.0
      %231 = vmatpush.msra.mxu0 0.0
      %232 = vmatpush.msra.mxu0 0.0
      %233 = vmatpush.msra.mxu0 0.0
      %234 = vmatpush.msra.mxu0 0.0
      %235 = vmatpush.msra.mxu0 0.0
      %236 = vmatpush.msra.mxu0 0.0
      %237 = vmatpush.msra.mxu0 0.0
      %238 = vmatpush.msra.mxu0 0.0
      %239 = vmatpush.msra.mxu0 0.0
      %240 = vmatpush.msra.mxu0 %v223
      %241 = vmatmul.f32.gmra.mxu0 %v217
      %v242 = vpop.f32.mrf.mxu0
      %v243 = vadd.f32 0.0, %v242
      %244 = vmatmul.f32.gmra.mxu0 %v219
      %v245 = vpop.f32.mrf.mxu0
      %v246 = vadd.f32 0.0, %v245
      %247 = vdwg.mxu0
      %v248 = vsel %vm216, %v195, 0
      %v250 = vsel %vm216, %v196, 0
      %v253 = vsel %vm221, %v204, 0
      %255 = vmatpush.msra.mxu0 0.0
      %256 = vmatpush.msra.mxu0 0.0
      %257 = vmatpush.msra.mxu0 0.0
      %258 = vmatpush.msra.mxu0 0.0
      %259 = vmatpush.msra.mxu0 0.0
      %260 = vmatpush.msra.mxu0 0.0
      %261 = vmatpush.msra.mxu0 0.0
      %262 = vmatpush.msra.mxu0 0.0
      %263 = vmatpush.msra.mxu0 0.0
      %264 = vmatpush.msra.mxu0 0.0
      %265 = vmatpush.msra.mxu0 0.0
      %266 = vmatpush.msra.mxu0 0.0
      %267 = vmatpush.msra.mxu0 0.0
      %268 = vmatpush.msra.mxu0 0.0
      %269 = vmatpush.msra.mxu0 0.0
      %270 = vmatpush.msra.mxu0 %v253
      %271 = vmatmul.f32.gmra.mxu0 %v248
      %v272 = vpop.f32.mrf.mxu0
      %v273 = vadd.f32 %v243, %v272
      %274 = vmatmul.f32.gmra.mxu0 %v250
      %v275 = vpop.f32.mrf.mxu0
      %v276 = vadd.f32 %v246, %v275
      %277 = vdwg.mxu0
      %s278 = scalar_lea.vmem %s1, 4
      %v279 = vld [vmem:[%s278] sm:$0x3]
      %vm280 = vcmask 1045504
      %v281 = vrot.slane %v195, 2
      %v282 = vrot.slane %v196, 2
      %v283 = vsel %vm280, %v281, %v282
      %v284 = vrot.slane %v197, 2
      %v285 = vsel %vm280, %v282, %v284
      %v286 = vsel %vm216, %v283, 0
      %v288 = vsel %vm216, %v285, 0
      %v291 = vsel %vm221, %v279, 0
      %293 = vmatpush.msra.mxu0 0.0
      %294 = vmatpush.msra.mxu0 0.0
      %295 = vmatpush.msra.mxu0 0.0
      %296 = vmatpush.msra.mxu0 0.0
      %297 = vmatpush.msra.mxu0 0.0
      %298 = vmatpush.msra.mxu0 0.0
      %299 = vmatpush.msra.mxu0 0.0
      %300 = vmatpush.msra.mxu0 0.0
      %301 = vmatpush.msra.mxu0 0.0
      %302 = vmatpush.msra.mxu0 0.0
      %303 = vmatpush.msra.mxu0 0.0
      %304 = vmatpush.msra.mxu0 0.0
      %305 = vmatpush.msra.mxu0 0.0
      %306 = vmatpush.msra.mxu0 0.0
      %307 = vmatpush.msra.mxu0 0.0
      %308 = vmatpush.msra.mxu0 %v291
      %309 = vmatmul.f32.gmra.mxu0 %v286
      %v310 = vpop.f32.mrf.mxu0
      %v311 = vadd.f32 0.0, %v310
      %312 = vmatmul.f32.gmra.mxu0 %v288
      %v313 = vpop.f32.mrf.mxu0
      %v314 = vadd.f32 0.0, %v313
      %315 = vdwg.mxu0
      %v316 = vadd.f32 %v273, %v311
      %v317 = vadd.f32 %v276, %v314
      %s318 = scalar_lea.vmem %s1, 6
      %v319 = vld [vmem:[%s318] sm:$0x3]
      %v321 = vsel %vm216, %v198, 0
      %v324 = vsel %vm216, %v199, 0
      %v327 = vsel %vm221, %v319, 0
      %329 = vmatpush.msra.mxu0 0.0
      %330 = vmatpush.msra.mxu0 0.0
      %331 = vmatpush.msra.mxu0 0.0
      %332 = vmatpush.msra.mxu0 0.0
      %333 = vmatpush.msra.mxu0 0.0
      %334 = vmatpush.msra.mxu0 0.0
      %335 = vmatpush.msra.mxu0 0.0
      %336 = vmatpush.msra.mxu0 0.0
      %337 = vmatpush.msra.mxu0 0.0
      %338 = vmatpush.msra.mxu0 0.0
      %339 = vmatpush.msra.mxu0 0.0
      %340 = vmatpush.msra.mxu0 0.0
      %341 = vmatpush.msra.mxu0 0.0
      %342 = vmatpush.msra.mxu0 0.0
      %343 = vmatpush.msra.mxu0 0.0
      %344 = vmatpush.msra.mxu0 %v327
      %345 = vmatmul.f32.gmra.mxu0 %v321
      %v346 = vpop.f32.mrf.mxu0
      %v347 = vadd.f32 0.0, %v346
      %348 = vmatmul.f32.gmra.mxu0 %v324
      %v349 = vpop.f32.mrf.mxu0
      %v350 = vadd.f32 0.0, %v349
      %351 = vdwg.mxu0
      %v352 = vadd.f32 %v316, %v347
      %v353 = vadd.f32 %v317, %v350
      %s354 = scalar_lea.vmem %s1, 8
      %v355 = vld [vmem:[%s354] sm:$0x3]
      %v357 = vrot.slane %v198, 1
      %v358 = vrot.slane %v199, 1
      %v359 = vsel %vm210, %v357, %v358
      %v360 = vrot.slane %v200, 1
      %v361 = vsel %vm210, %v358, %v360
      %v362 = vsel %vm216, %v359, 0
      %v364 = vsel %vm216, %v361, 0
      %v367 = vsel %vm221, %v355, 0
      %369 = vmatpush.msra.mxu0 0.0
      %370 = vmatpush.msra.mxu0 0.0
      %371 = vmatpush.msra.mxu0 0.0
      %372 = vmatpush.msra.mxu0 0.0
      %373 = vmatpush.msra.mxu0 0.0
      %374 = vmatpush.msra.mxu0 0.0
      %375 = vmatpush.msra.mxu0 0.0
      %376 = vmatpush.msra.mxu0 0.0
      %377 = vmatpush.msra.mxu0 0.0
      %378 = vmatpush.msra.mxu0 0.0
      %379 = vmatpush.msra.mxu0 0.0
      %380 = vmatpush.msra.mxu0 0.0
      %381 = vmatpush.msra.mxu0 0.0
      %382 = vmatpush.msra.mxu0 0.0
      %383 = vmatpush.msra.mxu0 0.0
      %384 = vmatpush.msra.mxu0 %v367
      %385 = vmatmul.f32.gmra.mxu0 %v362
      %v386 = vpop.f32.mrf.mxu0
      %v387 = vadd.f32 0.0, %v386
      %388 = vmatmul.f32.gmra.mxu0 %v364
      %v389 = vpop.f32.mrf.mxu0
      %v390 = vadd.f32 0.0, %v389
      %391 = vdwg.mxu0
      %v392 = vadd.f32 %v352, %v387
      %v393 = vadd.f32 %v353, %v390
      %s394 = scalar_lea.vmem %s1, 10
      %v395 = vld [vmem:[%s394] sm:$0x3]
      %v396 = vrot.slane %v198, 2
      %v397 = vrot.slane %v199, 2
      %v398 = vsel %vm280, %v396, %v397
      %v399 = vrot.slane %v200, 2
      %v400 = vsel %vm280, %v397, %v399
      %v401 = vsel %vm216, %v398, 0
      %v403 = vsel %vm216, %v400, 0
      %v406 = vsel %vm221, %v395, 0
      %408 = vmatpush.msra.mxu0 0.0
      %409 = vmatpush.msra.mxu0 0.0
      %410 = vmatpush.msra.mxu0 0.0
      %411 = vmatpush.msra.mxu0 0.0
      %412 = vmatpush.msra.mxu0 0.0
      %413 = vmatpush.msra.mxu0 0.0
      %414 = vmatpush.msra.mxu0 0.0
      %415 = vmatpush.msra.mxu0 0.0
      %416 = vmatpush.msra.mxu0 0.0
      %417 = vmatpush.msra.mxu0 0.0
      %418 = vmatpush.msra.mxu0 0.0
      %419 = vmatpush.msra.mxu0 0.0
      %420 = vmatpush.msra.mxu0 0.0
      %421 = vmatpush.msra.mxu0 0.0
      %422 = vmatpush.msra.mxu0 0.0
      %423 = vmatpush.msra.mxu0 %v406
      %424 = vmatmul.f32.gmra.mxu0 %v401
      %v425 = vpop.f32.mrf.mxu0
      %v426 = vadd.f32 0.0, %v425
      %427 = vmatmul.f32.gmra.mxu0 %v403
      %v428 = vpop.f32.mrf.mxu0
      %v429 = vadd.f32 0.0, %v428
      %430 = vdwg.mxu0
      %v431 = vadd.f32 %v392, %v426
      %v432 = vadd.f32 %v393, %v429
      %s433 = scalar_lea.vmem %s1, 12
      %v434 = vld [vmem:[%s433] sm:$0x3]
      %v436 = vsel %vm216, %v201, 0
      %v439 = vsel %vm216, %v202, 0
      %v442 = vsel %vm221, %v434, 0
      %444 = vmatpush.msra.mxu0 0.0
      %445 = vmatpush.msra.mxu0 0.0
      %446 = vmatpush.msra.mxu0 0.0
      %447 = vmatpush.msra.mxu0 0.0
      %448 = vmatpush.msra.mxu0 0.0
      %449 = vmatpush.msra.mxu0 0.0
      %450 = vmatpush.msra.mxu0 0.0
      %451 = vmatpush.msra.mxu0 0.0
      %452 = vmatpush.msra.mxu0 0.0
      %453 = vmatpush.msra.mxu0 0.0
      %454 = vmatpush.msra.mxu0 0.0
      %455 = vmatpush.msra.mxu0 0.0
      %456 = vmatpush.msra.mxu0 0.0
      %457 = vmatpush.msra.mxu0 0.0
      %458 = vmatpush.msra.mxu0 0.0
      %459 = vmatpush.msra.mxu0 %v442
      %460 = vmatmul.f32.gmra.mxu0 %v436
      %v461 = vpop.f32.mrf.mxu0
      %v462 = vadd.f32 0.0, %v461
      %463 = vmatmul.f32.gmra.mxu0 %v439
      %v464 = vpop.f32.mrf.mxu0
      %v465 = vadd.f32 0.0, %v464
      %466 = vdwg.mxu0
      %v467 = vadd.f32 %v431, %v462
      %v468 = vadd.f32 %v432, %v465
      %s469 = scalar_lea.vmem %s1, 14
      %v470 = vld [vmem:[%s469] sm:$0x3]
      %v472 = vrot.slane %v201, 1
      %v473 = vrot.slane %v202, 1
      %v474 = vsel %vm210, %v472, %v473
      %v475 = vrot.slane %v203, 1
      %v476 = vsel %vm210, %v473, %v475
      %v477 = vsel %vm216, %v474, 0
      %v479 = vsel %vm216, %v476, 0
      %v482 = vsel %vm221, %v470, 0
      %484 = vmatpush.msra.mxu0 0.0
      %485 = vmatpush.msra.mxu0 0.0
      %486 = vmatpush.msra.mxu0 0.0
      %487 = vmatpush.msra.mxu0 0.0
      %488 = vmatpush.msra.mxu0 0.0
      %489 = vmatpush.msra.mxu0 0.0
      %490 = vmatpush.msra.mxu0 0.0
      %491 = vmatpush.msra.mxu0 0.0
      %492 = vmatpush.msra.mxu0 0.0
      %493 = vmatpush.msra.mxu0 0.0
      %494 = vmatpush.msra.mxu0 0.0
      %495 = vmatpush.msra.mxu0 0.0
      %496 = vmatpush.msra.mxu0 0.0
      %497 = vmatpush.msra.mxu0 0.0
      %498 = vmatpush.msra.mxu0 0.0
      %499 = vmatpush.msra.mxu0 %v482
      %500 = vmatmul.f32.gmra.mxu0 %v477
      %v501 = vpop.f32.mrf.mxu0
      %v502 = vadd.f32 0.0, %v501
      %503 = vmatmul.f32.gmra.mxu0 %v479
      %v504 = vpop.f32.mrf.mxu0
      %v505 = vadd.f32 0.0, %v504
      %506 = vdwg.mxu0
      %v507 = vadd.f32 %v467, %v502
      %v508 = vadd.f32 %v468, %v505
      %s509 = scalar_lea.vmem %s1, 16
      %v510 = vld [vmem:[%s509] sm:$0x3]
      %v511 = vrot.slane %v201, 2
      %v512 = vrot.slane %v202, 2
      %v513 = vsel %vm280, %v511, %v512
      %v514 = vrot.slane %v203, 2
      %v515 = vsel %vm280, %v512, %v514
      %v516 = vsel %vm216, %v513, 0
      %v518 = vsel %vm216, %v515, 0
      %v521 = vsel %vm221, %v510, 0
      %523 = vmatpush.msra.mxu0 0.0
      %524 = vmatpush.msra.mxu0 0.0
      %525 = vmatpush.msra.mxu0 0.0
      %526 = vmatpush.msra.mxu0 0.0
      %527 = vmatpush.msra.mxu0 0.0
      %528 = vmatpush.msra.mxu0 0.0
      %529 = vmatpush.msra.mxu0 0.0
      %530 = vmatpush.msra.mxu0 0.0
      %531 = vmatpush.msra.mxu0 0.0
      %532 = vmatpush.msra.mxu0 0.0
      %533 = vmatpush.msra.mxu0 0.0
      %534 = vmatpush.msra.mxu0 0.0
      %535 = vmatpush.msra.mxu0 0.0
      %536 = vmatpush.msra.mxu0 0.0
      %537 = vmatpush.msra.mxu0 0.0
      %538 = vmatpush.msra.mxu0 %v521
      %539 = vmatmul.f32.gmra.mxu0 %v516
      %v540 = vpop.f32.mrf.mxu0
      %v541 = vadd.f32 0.0, %v540
      %542 = vmatmul.f32.gmra.mxu0 %v518
      %v543 = vpop.f32.mrf.mxu0
      %v544 = vadd.f32 0.0, %v543
      %545 = vdwg.mxu0
      %v546 = vadd.f32 %v507, %v541
      %v547 = vadd.f32 %v508, %v544
      %v548 = vld [vmem:[%s2] sm:$0x1]
      %v550 = vperm.slane %v548, 0
      %v552 = vadd.f32 %v546, %v550
      %v553 = vadd.f32 %v547, %v550
      %v554 = vxor.u32 %v552, 2147483648
      %v555 = vxor.u32 %v553, 2147483648
      %v556 = vmul.f32 %v554, 1.442695
      %v557 = vpow.pop %v556
      %v558 = vmul.f32 %v555, 1.442695
      %v559 = vpow.pop %v558
      %v560 = vadd.f32 %v557, 1.0
      %v561 = vadd.f32 %v559, 1.0
      %v562 = vrcp.pop %v560
      %v563 = vmul.f32 %v560, %v562
      %v564 = vsub.f32 1.0, %v563
      %v565 = vmul.f32 %v562, %v564
      %v566 = vadd.f32 %v562, %v565
      %vm567 = vweird.f32 %v560
      %vm568 = vweird.f32 %v562
      %vm569 = vmor %vm567, %vm568
      %v570 = vsel %vm569, %v562, %v566
      %v571 = vand.u32 2147483647, %v560
      %vm572 = vcmp.eq.f32.partialorder %v571, 8.507059e+37
      %v573 = vand.u32 %v560, 2147483648
      %v574 = vor.u32 1.1754944e-38, %v573
      %v575 = vsel %vm572, %v574, %v570
      %v576 = vmul.f32 1.0, %v575
      %v577 = vrcp.pop %v561
      %v578 = vmul.f32 %v561, %v577
      %v579 = vsub.f32 1.0, %v578
      %v580 = vmul.f32 %v577, %v579
      %v581 = vadd.f32 %v577, %v580
      %vm582 = vweird.f32 %v561
      %vm583 = vweird.f32 %v577
      %vm584 = vmor %vm582, %vm583
      %v585 = vsel %vm584, %v577, %v581
      %v586 = vand.u32 2147483647, %v561
      %vm587 = vcmp.eq.f32.partialorder %v586, 8.507059e+37
      %v588 = vand.u32 %v561, 2147483648
      %v589 = vor.u32 1.1754944e-38, %v588
      %v590 = vsel %vm587, %v589, %v585
      %v591 = vmul.f32 1.0, %v590
      %v592 = vmul.f32 %v552, %v576
      %v593 = vmul.f32 %v553, %v591
      %594 = vst.msk [vmem:[%s192] sm:$0xff] %vm216, %v592
      %595 = vst.msk [vmem:[%s192 + $0x8] sm:$0xff] %vm216, %v593
      %p596 = scmp.lt.s32.totalorder %s18, 1
      %s597 = scalar_select %p596, %s18, 1
      %p598 = scmp.lt.s32.totalorder %s19, 15
      %s599 = scalar_select %p598, %s19, 15
      %s600 = smul.addr %s599, 2
      %s601 = smul.addr %s597, 32
      %s602 = sadd.s32 %s600, %s601
      %s603 = smul.addr %s602, 8
      %s604 = scalar_lea.vmem %s3, %s603
      // Predicated region
      $region33: #{bottleneck_csp_forward.5} parent=31 // pred_check
        %p605 = pneg %p114
      $region34: #{bottleneck_csp_forward.5} parent=31 // pred_check_branch
        %607 = sbr.rel (%p605) target = $region36
      $region35: #{bottleneck_csp_forward.5} parent=31 // pred_region
        _
      $region36: #{bottleneck_csp_forward.5} parent=31 // pred_fallthru
        _
    $region32: #{bottleneck_csp_forward.5} parent=5 // pred_fallthru
      _
    %p608 = scmp.le.s32.totalorder 2, %s9
    // Predicated region
    $region37: #{bottleneck_csp_forward.5} parent=5 // pred_check
      %p609 = pneg %p608
    $region38: #{bottleneck_csp_forward.5} parent=5 // pred_check_branch
      %611 = sbr.rel (%p609) target = $region40
    $region39: #{bottleneck_csp_forward.5} parent=5 // pred_region
      %s612 = ssub.s32 %s9, 2
      // Predicated region
      $region41: #{bottleneck_csp_forward.5} parent=39 // pred_check
        %p613 = pneg %p120
      $region42: #{bottleneck_csp_forward.5} parent=39 // pred_check_branch
        %615 = sbr.rel (%p613) target = $region44
      $region43: #{bottleneck_csp_forward.5} parent=39 // pred_region
        %p616 = scmp.lt.s32.totalorder %s20, 1
        %s617 = scalar_select %p616, %s20, 1
        %p618 = scmp.lt.s32.totalorder %s21, 15
        %s619 = scalar_select %p618, %s21, 15
        %s620 = smul.addr %s619, 2
        %s621 = smul.addr %s617, 32
        %s622 = sadd.s32 %s620, %s621
        %s623 = smul.addr %s622, 8
        %s624 = scalar_lea.vmem %s3, %s623
      $region44: #{bottleneck_csp_forward.5} parent=39 // pred_fallthru
        _
    $region40: #{bottleneck_csp_forward.5} parent=5 // pred_fallthru
      _
  $region6: #{bottleneck_csp_forward.5} parent=0 // loop_footer
    %s13 = sadd.s32 1, %s9
  $region7: #{bottleneck_csp_forward.5} parent=0 // loop_footer_branch
    %8 = sbr.rel target = $region3
  $region8: #{bottleneck_csp_forward.5} parent=0 // loop_exit
    _

// kernel: bottleneck_csp_forward.6
$region0: #{bottleneck_csp_forward.6}
  #allocation0 [shape = 'u32[]', space=smem, size = 0x4, offset = 0x4, fixed_abs, tag = 'smem constant byte address 0x4 - core index']
  #allocation1 [shape = 'u32[72,128]{1,0:T(1,128)}', space=vmem, size = 0x9000, scoped, tag = 'internal scratch']
  %s0 = inlined_call_operand.vmem [shape: f32[2,18,18,2], index: 0, kind: input, shape index: {}]
  %s1 = inlined_call_operand.vmem [shape: f32[2,16,16,2], index: 1, kind: input, shape index: {}]
  %s2 = inlined_call_operand.vmem [shape: f32[9,2,2], index: 2, kind: input, shape index: {}]
  %s3 = inlined_call_operand.vmem [shape: f32[1,2], index: 3, kind: input, shape index: {}]
  %s4 = inlined_call_operand.vmem [shape: f32[2,16,16,2], index: 4, kind: output, shape index: {}]
  %s5 = sld [smem:[#allocation0]]
  $region49: #{bottleneck_csp_forward.6} parent=0
    _
  %s7 = ssub.s32 1, %s5
  %s8 = scalar_select 0, %s7, %s5
  loop: start=0, step=1, limit=34
  $region2: #{bottleneck_csp_forward.6} parent=0 // loop_pre_header
    _
  $region3: #{bottleneck_csp_forward.6} parent=0 // loop_header
    %s10 = sphi 0, %s14
    %p11 = scmp.ge.s32.totalorder %s10, 34
    %s17 = sphi 0, %s29
    %s18 = sphi 0, %s25
    %s19 = sphi 0, %s17
    %s20 = sphi 0, %s18
    %s21 = sphi 0, %s19
    %s22 = sphi 0, %s20
    %s32 = sphi 0, %s34
    %s35 = sphi 0, %s32
    %s36 = sphi 0, %s35
    %s52 = sphi 0, %s36
    %s60 = sphi 0, %s62
    %s63 = sphi 0, %s60
    %s64 = sphi 0, %s63
    %s80 = sphi 0, %s64
    %s84 = sphi 0, %s84
    %s86 = sphi 0, %s84
    %s87 = sphi 0, %s86
    %s101 = sphi 0, %s87
    %s105 = sphi 0, %s105
    %s107 = sphi 0, %s105
    %s108 = sphi 0, %s107
    %s122 = sphi 0, %s108
    %s130 = sphi 0, %s132
    %s133 = sphi 0, %s130
    %s134 = sphi 0, %s133
    %s150 = sphi 0, %s134
  $region4: #{bottleneck_csp_forward.6} parent=0 // loop_header_branch
    %13 = sbr.rel (%p11) target = $region8
  $region5: #{bottleneck_csp_forward.6} parent=0 // loop_body
    %s15 = ssub.s32 %s10, 1
    %s16 = ssub.s32 %s10, 2
    %s23 = sadd.s32 1, %s18
    %p24 = scmp.ge.s32.totalorder %s23, 16
    %s25 = scalar_select %p24, 0, %s23
    %s26 = sadd.s32 1, %s17
    %s27 = scalar_select %p24, %s26, %s17
    %p28 = scmp.ge.s32.totalorder %s27, 2
    %s29 = scalar_select %p28, 0, %s27
    %s30 = ssub.s32 %s17, %s29
    %p31 = scmp.eq.s32.totalorder %s30, 0
    %s33 = sadd.s32 %s32, 1
    %s34 = scalar_select %p31, %s32, %s33
    %p37 = pneg %p31
    %p38 = scmp.eq.s32.totalorder %s10, 31
    %p39 = por %p37, %p38
    %p40 = scmp.ne.s32.totalorder %s32, %s35
    %p41 = scmp.eq.s32.totalorder %s10, 0
    %p42 = por %p40, %p41
    %p43 = scmp.ne.s32.totalorder %s32, %s35
    %p44 = scmp.eq.s32.totalorder %s15, 31
    %p45 = por %p43, %p44
    %p46 = scmp.ne.s32.totalorder %s35, %s36
    %p47 = scmp.eq.s32.totalorder %s15, 0
    %p48 = por %p46, %p47
    %p49 = scmp.ne.s32.totalorder %s35, %s36
    %p50 = scmp.eq.s32.totalorder %s16, 31
    %p51 = por %p49, %p50
    %p53 = scmp.ne.s32.totalorder %s36, %s52
    %p54 = scmp.eq.s32.totalorder %s16, 0
    %p55 = por %p53, %p54
    %s56 = ssub.s32 %s17, %s29
    %s57 = ssub.s32 %s18, %s25
    %s58 = sor.u32 %s56, %s57
    %p59 = scmp.eq.s32.totalorder %s58, 0
    %s61 = sadd.s32 %s60, 1
    %s62 = scalar_select %p59, %s60, %s61
    %p65 = pneg %p59
    %p66 = scmp.eq.s32.totalorder %s10, 31
    %p67 = por %p65, %p66
    %p68 = scmp.ne.s32.totalorder %s60, %s63
    %p69 = scmp.eq.s32.totalorder %s10, 0
    %p70 = por %p68, %p69
    %p71 = scmp.ne.s32.totalorder %s60, %s63
    %p72 = scmp.eq.s32.totalorder %s15, 31
    %p73 = por %p71, %p72
    %p74 = scmp.ne.s32.totalorder %s63, %s64
    %p75 = scmp.eq.s32.totalorder %s15, 0
    %p76 = por %p74, %p75
    %p77 = scmp.ne.s32.totalorder %s63, %s64
    %p78 = scmp.eq.s32.totalorder %s16, 31
    %p79 = por %p77, %p78
    %p81 = scmp.ne.s32.totalorder %s64, %s80
    %p82 = scmp.eq.s32.totalorder %s16, 0
    %p83 = por %p81, %p82
    %s85 = sadd.s32 %s84, 1
    %p88 = scmp.eq.s32.totalorder %s10, 31
    %p89 = scmp.ne.s32.totalorder %s84, %s86
    %p90 = scmp.eq.s32.totalorder %s10, 0
    %p91 = por %p89, %p90
    %p92 = scmp.ne.s32.totalorder %s84, %s86
    %p93 = scmp.eq.s32.totalorder %s15, 31
    %p94 = por %p92, %p93
    %p95 = scmp.ne.s32.totalorder %s86, %s87
    %p96 = scmp.eq.s32.totalorder %s15, 0
    %p97 = por %p95, %p96
    %p98 = scmp.ne.s32.totalorder %s86, %s87
    %p99 = scmp.eq.s32.totalorder %s16, 31
    %p100 = por %p98, %p99
    %p102 = scmp.ne.s32.totalorder %s87, %s101
    %p103 = scmp.eq.s32.totalorder %s16, 0
    %p104 = por %p102, %p103
    %s106 = sadd.s32 %s105, 1
    %p109 = scmp.eq.s32.totalorder %s10, 31
    %p110 = scmp.ne.s32.totalorder %s105, %s107
    %p111 = scmp.eq.s32.totalorder %s10, 0
    %p112 = por %p110, %p111
    %p113 = scmp.ne.s32.totalorder %s105, %s107
    %p114 = scmp.eq.s32.totalorder %s15, 31
    %p115 = por %p113, %p114
    %p116 = scmp.ne.s32.totalorder %s107, %s108
    %p117 = scmp.eq.s32.totalorder %s15, 0
    %p118 = por %p116, %p117
    %p119 = scmp.ne.s32.totalorder %s107, %s108
    %p120 = scmp.eq.s32.totalorder %s16, 31
    %p121 = por %p119, %p120
    %p123 = scmp.ne.s32.totalorder %s108, %s122
    %p124 = scmp.eq.s32.totalorder %s16, 0
    %p125 = por %p123, %p124
    %s126 = ssub.s32 %s17, %s29
    %s127 = ssub.s32 %s18, %s25
    %s128 = sor.u32 %s126, %s127
    %p129 = scmp.eq.s32.totalorder %s128, 0
    %s131 = sadd.s32 %s130, 1
    %s132 = scalar_select %p129, %s130, %s131
    %p135 = pneg %p129
    %p136 = scmp.eq.s32.totalorder %s10, 31
    %p137 = por %p135, %p136
    %p138 = scmp.ne.s32.totalorder %s130, %s133
    %p139 = scmp.eq.s32.totalorder %s10, 0
    %p140 = por %p138, %p139
    %p141 = scmp.ne.s32.totalorder %s130, %s133
    %p142 = scmp.eq.s32.totalorder %s15, 31
    %p143 = por %p141, %p142
    %p144 = scmp.ne.s32.totalorder %s133, %s134
    %p145 = scmp.eq.s32.totalorder %s15, 0
    %p146 = por %p144, %p145
    %p147 = scmp.ne.s32.totalorder %s133, %s134
    %p148 = scmp.eq.s32.totalorder %s16, 31
    %p149 = por %p147, %p148
    %p151 = scmp.ne.s32.totalorder %s134, %s150
    %p152 = scmp.eq.s32.totalorder %s16, 0
    %p153 = por %p151, %p152
    %p154 = scmp.le.s32.totalorder 1, %s10
    %p155 = scmp.lt.s32.totalorder %s10, 33
    %p156 = pnand %p154, %p155
    %p157 = pneg %p156
    // Predicated region
    $region9: #{bottleneck_csp_forward.6} parent=5 // pred_check
      _
    $region10: #{bottleneck_csp_forward.6} parent=5 // pred_check_branch
      %159 = sbr.rel (%p156) target = $region12
    $region11: #{bottleneck_csp_forward.6} parent=5 // pred_region
      %s160 = ssub.s32 %s10, 1
      // Predicated region
      $region13: #{bottleneck_csp_forward.6} parent=11 // pred_check
        %p161 = pneg %p97
      $region14: #{bottleneck_csp_forward.6} parent=11 // pred_check_branch
        %163 = sbr.rel (%p161) target = $region16
      $region15: #{bottleneck_csp_forward.6} parent=11 // pred_region
        _
      $region16: #{bottleneck_csp_forward.6} parent=11 // pred_fallthru
        _
      // Predicated region
      $region17: #{bottleneck_csp_forward.6} parent=11 // pred_check
        %p164 = pneg %p118
      $region18: #{bottleneck_csp_forward.6} parent=11 // pred_check_branch
        %166 = sbr.rel (%p164) target = $region20
      $region19: #{bottleneck_csp_forward.6} parent=11 // pred_region
        _
      $region20: #{bottleneck_csp_forward.6} parent=11 // pred_fallthru
        _
    $region12: #{bottleneck_csp_forward.6} parent=5 // pred_fallthru
      _
    %p167 = scmp.lt.s32.totalorder %s10, 32
    // Predicated region
    $region21: #{bottleneck_csp_forward.6} parent=5 // pred_check
      %p168 = pneg %p167
    $region22: #{bottleneck_csp_forward.6} parent=5 // pred_check_branch
      %170 = sbr.rel (%p168) target = $region24
    $region23: #{bottleneck_csp_forward.6} parent=5 // pred_region
      // Predicated region
      $region25: #{bottleneck_csp_forward.6} parent=23 // pred_check
        %p171 = pneg %p42
      $region26: #{bottleneck_csp_forward.6} parent=23 // pred_check_branch
        %173 = sbr.rel (%p171) target = $region28
      $region27: #{bottleneck_csp_forward.6} parent=23 // pred_region
        %p174 = scmp.lt.s32.totalorder %s17, 1
        %s175 = scalar_select %p174, %s17, 1
        %s176 = smul.addr %s175, 54
        %s177 = smul.addr %s176, 8
        %s178 = scalar_lea.vmem %s0, %s177
      $region28: #{bottleneck_csp_forward.6} parent=23 // pred_fallthru
        _
      // Predicated region
      $region29: #{bottleneck_csp_forward.6} parent=23 // pred_check
        %p179 = pneg %p70
      $region30: #{bottleneck_csp_forward.6} parent=23 // pred_check_branch
        %181 = sbr.rel (%p179) target = $region32
      $region31: #{bottleneck_csp_forward.6} parent=23 // pred_region
        %p182 = scmp.lt.s32.totalorder %s17, 1
        %s183 = scalar_select %p182, %s17, 1
        %p184 = scmp.lt.s32.totalorder %s18, 15
        %s185 = scalar_select %p184, %s18, 15
        %s186 = smul.addr %s185, 2
        %s187 = smul.addr %s183, 32
        %s188 = sadd.s32 %s186, %s187
        %s189 = smul.addr %s188, 8
        %s190 = scalar_lea.vmem %s1, %s189
      $region32: #{bottleneck_csp_forward.6} parent=23 // pred_fallthru
        _
    $region24: #{bottleneck_csp_forward.6} parent=5 // pred_fallthru
      _
    %p191 = scmp.le.s32.totalorder 1, %s10
    %p192 = scmp.lt.s32.totalorder %s10, 33
    %p193 = pnand %p191, %p192
    %p194 = pneg %p193
    // Predicated region
    $region33: #{bottleneck_csp_forward.6} parent=5 // pred_check
      _
    $region34: #{bottleneck_csp_forward.6} parent=5 // pred_check_branch
      %196 = sbr.rel (%p193) target = $region36
    $region35: #{bottleneck_csp_forward.6} parent=5 // pred_region
      %s197 = ssub.s32 %s10, 1
      %p198 = scmp.lt.s32.totalorder %s19, 1
      %s199 = scalar_select %p198, %s19, 1
      %s200 = smul.addr %s199, 54
      %s201 = smul.addr %s200, 8
      %s202 = scalar_lea.vmem %s0, %s201
      %p203 = pneg %p48
      %p204 = pneg %p45
      %p205 = scmp.lt.s32.totalorder %s19, 1
      %s206 = scalar_select %p205, %s19, 1
      %p207 = scmp.lt.s32.totalorder %s20, 15
      %s208 = scalar_select %p207, %s20, 15
      %s209 = smul.addr %s208, 2
      %s210 = smul.addr %s206, 32
      %s211 = sadd.s32 %s209, %s210
      %s212 = smul.addr %s211, 8
      %s213 = scalar_lea.vmem %s1, %s212
      %p214 = pneg %p76
      %p215 = pneg %p73
      %p216 = pneg %p97
      %p217 = pneg %p94
      %p218 = pneg %p118
      %p219 = pneg %p115
      %p220 = pneg %p146
      %p221 = pneg %p143
      %p222 = scmp.lt.s32.totalorder %s19, 1
      %s223 = scalar_select %p222, %s19, 1
      %p224 = scmp.lt.s32.totalorder %s20, 15
      %s225 = scalar_select %p224, %s20, 15
      %s226 = smul.addr %s225, 2
      %s227 = smul.addr %s223, 32
      %s228 = sadd.s32 %s226, %s227
      %s229 = smul.addr %s228, 8
      %s230 = scalar_lea.vmem %s4, %s229
      %p231 = scmp.lt.s32.totalorder %s19, 1
      %s232 = scalar_select %p231, %s19, 1
      %s233 = smul.addr %s232, 54
      %s234 = smul.addr %s233, 8
      %s235 = scalar_lea.vmem %s0, %s234
      %p236 = scmp.lt.s32.totalorder %s19, 1
      %s237 = scalar_select %p236, %s19, 1
      %p238 = scmp.lt.s32.totalorder %s20, 15
      %s239 = scalar_select %p238, %s20, 15
      %s240 = smul.addr %s239, 2
      %s241 = smul.addr %s237, 32
      %s242 = sadd.s32 %s240, %s241
      %s243 = smul.addr %s242, 8
      %s244 = scalar_lea.vmem %s1, %s243
      %p245 = scmp.lt.s32.totalorder %s19, 1
      %s246 = scalar_select %p245, %s19, 1
      %p247 = scmp.lt.s32.totalorder %s20, 15
      %s248 = scalar_select %p247, %s20, 15
      %s249 = smul.addr %s248, 2
      %s250 = smul.addr %s246, 32
      %s251 = sadd.s32 %s249, %s250
      %s252 = smul.addr %s251, 8
      %s253 = scalar_lea.vmem %s4, %s252
      %s254 = smul.u32 %s20, 24
      %s255 = scalar_lea.vmem %s235, %s254
      %v256 = vld [vmem:[%s255] sm:$0xff]
      %v257 = vld [vmem:[%s255 + $0x8] sm:$0xff]
      %v258 = vld [vmem:[%s255 + $0x10] sm:$0x3]
      %v259 = vld [vmem:[%s255 + $0x18] sm:$0xff]
      %v260 = vld [vmem:[%s255 + $0x20] sm:$0xff]
      %v261 = vld [vmem:[%s255 + $0x28] sm:$0x3]
      %v262 = vld [vmem:[%s255 + $0x30] sm:$0xff]
      %v263 = vld [vmem:[%s255 + $0x38] sm:$0xff]
      %v264 = vld [vmem:[%s255 + $0x40] sm:$0x3]
      %v265 = vld [vmem:[%s2] sm:$0x3]
      %s266 = scalar_lea.vmem %s2, 2
      %v267 = vld [vmem:[%s266] sm:$0x3]
      %vm271 = vcmask 1046528
      %v272 = vrot.slane %v256, 1
      %v273 = vrot.slane %v257, 1
      %v274 = vsel %vm271, %v272, %v273
      %v275 = vrot.slane %v258, 1
      %v276 = vsel %vm271, %v273, %v275
      %vm277 = vcmask 15360
      %v278 = vsel %vm277, %v274, 0
      %v280 = vsel %vm277, %v276, 0
      %vm282 = vcmask 1041408
      %v284 = vsel %vm282, %v267, 0
      %286 = vmatpush.msra.mxu0 0.0
      %287 = vmatpush.msra.mxu0 0.0
      %288 = vmatpush.msra.mxu0 0.0
      %289 = vmatpush.msra.mxu0 0.0
      %290 = vmatpush.msra.mxu0 0.0
      %291 = vmatpush.msra.mxu0 0.0
      %292 = vmatpush.msra.mxu0 0.0
      %293 = vmatpush.msra.mxu0 0.0
      %294 = vmatpush.msra.mxu0 0.0
      %295 = vmatpush.msra.mxu0 0.0
      %296 = vmatpush.msra.mxu0 0.0
      %297 = vmatpush.msra.mxu0 0.0
      %298 = vmatpush.msra.mxu0 0.0
      %299 = vmatpush.msra.mxu0 0.0
      %300 = vmatpush.msra.mxu0 0.0
      %301 = vmatpush.msra.mxu0 %v284
      %302 = vmatmul.f32.gmra.mxu0 %v278
      %v303 = vpop.f32.mrf.mxu0
      %v304 = vadd.f32 0.0, %v303
      %305 = vmatmul.f32.gmra.mxu0 %v280
      %v306 = vpop.f32.mrf.mxu0
      %v307 = vadd.f32 0.0, %v306
      %308 = vdwg.mxu0
      %v309 = vsel %vm277, %v256, 0
      %v311 = vsel %vm277, %v257, 0
      %v314 = vsel %vm282, %v265, 0
      %316 = vmatpush.msra.mxu0 0.0
      %317 = vmatpush.msra.mxu0 0.0
      %318 = vmatpush.msra.mxu0 0.0
      %319 = vmatpush.msra.mxu0 0.0
      %320 = vmatpush.msra.mxu0 0.0
      %321 = vmatpush.msra.mxu0 0.0
      %322 = vmatpush.msra.mxu0 0.0
      %323 = vmatpush.msra.mxu0 0.0
      %324 = vmatpush.msra.mxu0 0.0
      %325 = vmatpush.msra.mxu0 0.0
      %326 = vmatpush.msra.mxu0 0.0
      %327 = vmatpush.msra.mxu0 0.0
      %328 = vmatpush.msra.mxu0 0.0
      %329 = vmatpush.msra.mxu0 0.0
      %330 = vmatpush.msra.mxu0 0.0
      %331 = vmatpush.msra.mxu0 %v314
      %332 = vmatmul.f32.gmra.mxu0 %v309
      %v333 = vpop.f32.mrf.mxu0
      %v334 = vadd.f32 %v304, %v333
      %335 = vmatmul.f32.gmra.mxu0 %v311
      %v336 = vpop.f32.mrf.mxu0
      %v337 = vadd.f32 %v307, %v336
      %338 = vdwg.mxu0
      %s339 = scalar_lea.vmem %s2, 4
      %v340 = vld [vmem:[%s339] sm:$0x3]
      %vm341 = vcmask 1045504
      %v342 = vrot.slane %v256, 2
      %v343 = vrot.slane %v257, 2
      %v344 = vsel %vm341, %v342, %v343
      %v345 = vrot.slane %v258, 2
      %v346 = vsel %vm341, %v343, %v345
      %v347 = vsel %vm277, %v344, 0
      %v349 = vsel %vm277, %v346, 0
      %v352 = vsel %vm282, %v340, 0
      %354 = vmatpush.msra.mxu0 0.0
      %355 = vmatpush.msra.mxu0 0.0
      %356 = vmatpush.msra.mxu0 0.0
      %357 = vmatpush.msra.mxu0 0.0
      %358 = vmatpush.msra.mxu0 0.0
      %359 = vmatpush.msra.mxu0 0.0
      %360 = vmatpush.msra.mxu0 0.0
      %361 = vmatpush.msra.mxu0 0.0
      %362 = vmatpush.msra.mxu0 0.0
      %363 = vmatpush.msra.mxu0 0.0
      %364 = vmatpush.msra.mxu0 0.0
      %365 = vmatpush.msra.mxu0 0.0
      %366 = vmatpush.msra.mxu0 0.0
      %367 = vmatpush.msra.mxu0 0.0
      %368 = vmatpush.msra.mxu0 0.0
      %369 = vmatpush.msra.mxu0 %v352
      %370 = vmatmul.f32.gmra.mxu0 %v347
      %v371 = vpop.f32.mrf.mxu0
      %v372 = vadd.f32 0.0, %v371
      %373 = vmatmul.f32.gmra.mxu0 %v349
      %v374 = vpop.f32.mrf.mxu0
      %v375 = vadd.f32 0.0, %v374
      %376 = vdwg.mxu0
      %v377 = vadd.f32 %v334, %v372
      %v378 = vadd.f32 %v337, %v375
      %s379 = scalar_lea.vmem %s2, 6
      %v380 = vld [vmem:[%s379] sm:$0x3]
      %v382 = vsel %vm277, %v259, 0
      %v385 = vsel %vm277, %v260, 0
      %v388 = vsel %vm282, %v380, 0
      %390 = vmatpush.msra.mxu0 0.0
      %391 = vmatpush.msra.mxu0 0.0
      %392 = vmatpush.msra.mxu0 0.0
      %393 = vmatpush.msra.mxu0 0.0
      %394 = vmatpush.msra.mxu0 0.0
      %395 = vmatpush.msra.mxu0 0.0
      %396 = vmatpush.msra.mxu0 0.0
      %397 = vmatpush.msra.mxu0 0.0
      %398 = vmatpush.msra.mxu0 0.0
      %399 = vmatpush.msra.mxu0 0.0
      %400 = vmatpush.msra.mxu0 0.0
      %401 = vmatpush.msra.mxu0 0.0
      %402 = vmatpush.msra.mxu0 0.0
      %403 = vmatpush.msra.mxu0 0.0
      %404 = vmatpush.msra.mxu0 0.0
      %405 = vmatpush.msra.mxu0 %v388
      %406 = vmatmul.f32.gmra.mxu0 %v382
      %v407 = vpop.f32.mrf.mxu0
      %v408 = vadd.f32 0.0, %v407
      %409 = vmatmul.f32.gmra.mxu0 %v385
      %v410 = vpop.f32.mrf.mxu0
      %v411 = vadd.f32 0.0, %v410
      %412 = vdwg.mxu0
      %v413 = vadd.f32 %v377, %v408
      %v414 = vadd.f32 %v378, %v411
      %s415 = scalar_lea.vmem %s2, 8
      %v416 = vld [vmem:[%s415] sm:$0x3]
      %v418 = vrot.slane %v259, 1
      %v419 = vrot.slane %v260, 1
      %v420 = vsel %vm271, %v418, %v419
      %v421 = vrot.slane %v261, 1
      %v422 = vsel %vm271, %v419, %v421
      %v423 = vsel %vm277, %v420, 0
      %v425 = vsel %vm277, %v422, 0
      %v428 = vsel %vm282, %v416, 0
      %430 = vmatpush.msra.mxu0 0.0
      %431 = vmatpush.msra.mxu0 0.0
      %432 = vmatpush.msra.mxu0 0.0
      %433 = vmatpush.msra.mxu0 0.0
      %434 = vmatpush.msra.mxu0 0.0
      %435 = vmatpush.msra.mxu0 0.0
      %436 = vmatpush.msra.mxu0 0.0
      %437 = vmatpush.msra.mxu0 0.0
      %438 = vmatpush.msra.mxu0 0.0
      %439 = vmatpush.msra.mxu0 0.0
      %440 = vmatpush.msra.mxu0 0.0
      %441 = vmatpush.msra.mxu0 0.0
      %442 = vmatpush.msra.mxu0 0.0
      %443 = vmatpush.msra.mxu0 0.0
      %444 = vmatpush.msra.mxu0 0.0
      %445 = vmatpush.msra.mxu0 %v428
      %446 = vmatmul.f32.gmra.mxu0 %v423
      %v447 = vpop.f32.mrf.mxu0
      %v448 = vadd.f32 0.0, %v447
      %449 = vmatmul.f32.gmra.mxu0 %v425
      %v450 = vpop.f32.mrf.mxu0
      %v451 = vadd.f32 0.0, %v450
      %452 = vdwg.mxu0
      %v453 = vadd.f32 %v413, %v448
      %v454 = vadd.f32 %v414, %v451
      %s455 = scalar_lea.vmem %s2, 10
      %v456 = vld [vmem:[%s455] sm:$0x3]
      %v457 = vrot.slane %v259, 2
      %v458 = vrot.slane %v260, 2
      %v459 = vsel %vm341, %v457, %v458
      %v460 = vrot.slane %v261, 2
      %v461 = vsel %vm341, %v458, %v460
      %v462 = vsel %vm277, %v459, 0
      %v464 = vsel %vm277, %v461, 0
      %v467 = vsel %vm282, %v456, 0
      %469 = vmatpush.msra.mxu0 0.0
      %470 = vmatpush.msra.mxu0 0.0
      %471 = vmatpush.msra.mxu0 0.0
      %472 = vmatpush.msra.mxu0 0.0
      %473 = vmatpush.msra.mxu0 0.0
      %474 = vmatpush.msra.mxu0 0.0
      %475 = vmatpush.msra.mxu0 0.0
      %476 = vmatpush.msra.mxu0 0.0
      %477 = vmatpush.msra.mxu0 0.0
      %478 = vmatpush.msra.mxu0 0.0
      %479 = vmatpush.msra.mxu0 0.0
      %480 = vmatpush.msra.mxu0 0.0
      %481 = vmatpush.msra.mxu0 0.0
      %482 = vmatpush.msra.mxu0 0.0
      %483 = vmatpush.msra.mxu0 0.0
      %484 = vmatpush.msra.mxu0 %v467
      %485 = vmatmul.f32.gmra.mxu0 %v462
      %v486 = vpop.f32.mrf.mxu0
      %v487 = vadd.f32 0.0, %v486
      %488 = vmatmul.f32.gmra.mxu0 %v464
      %v489 = vpop.f32.mrf.mxu0
      %v490 = vadd.f32 0.0, %v489
      %491 = vdwg.mxu0
      %v492 = vadd.f32 %v453, %v487
      %v493 = vadd.f32 %v454, %v490
      %s494 = scalar_lea.vmem %s2, 12
      %v495 = vld [vmem:[%s494] sm:$0x3]
      %v497 = vsel %vm277, %v262, 0
      %v500 = vsel %vm277, %v263, 0
      %v503 = vsel %vm282, %v495, 0
      %505 = vmatpush.msra.mxu0 0.0
      %506 = vmatpush.msra.mxu0 0.0
      %507 = vmatpush.msra.mxu0 0.0
      %508 = vmatpush.msra.mxu0 0.0
      %509 = vmatpush.msra.mxu0 0.0
      %510 = vmatpush.msra.mxu0 0.0
      %511 = vmatpush.msra.mxu0 0.0
      %512 = vmatpush.msra.mxu0 0.0
      %513 = vmatpush.msra.mxu0 0.0
      %514 = vmatpush.msra.mxu0 0.0
      %515 = vmatpush.msra.mxu0 0.0
      %516 = vmatpush.msra.mxu0 0.0
      %517 = vmatpush.msra.mxu0 0.0
      %518 = vmatpush.msra.mxu0 0.0
      %519 = vmatpush.msra.mxu0 0.0
      %520 = vmatpush.msra.mxu0 %v503
      %521 = vmatmul.f32.gmra.mxu0 %v497
      %v522 = vpop.f32.mrf.mxu0
      %v523 = vadd.f32 0.0, %v522
      %524 = vmatmul.f32.gmra.mxu0 %v500
      %v525 = vpop.f32.mrf.mxu0
      %v526 = vadd.f32 0.0, %v525
      %527 = vdwg.mxu0
      %v528 = vadd.f32 %v492, %v523
      %v529 = vadd.f32 %v493, %v526
      %s530 = scalar_lea.vmem %s2, 14
      %v531 = vld [vmem:[%s530] sm:$0x3]
      %v533 = vrot.slane %v262, 1
      %v534 = vrot.slane %v263, 1
      %v535 = vsel %vm271, %v533, %v534
      %v536 = vrot.slane %v264, 1
      %v537 = vsel %vm271, %v534, %v536
      %v538 = vsel %vm277, %v535, 0
      %v540 = vsel %vm277, %v537, 0
      %v543 = vsel %vm282, %v531, 0
      %545 = vmatpush.msra.mxu0 0.0
      %546 = vmatpush.msra.mxu0 0.0
      %547 = vmatpush.msra.mxu0 0.0
      %548 = vmatpush.msra.mxu0 0.0
      %549 = vmatpush.msra.mxu0 0.0
      %550 = vmatpush.msra.mxu0 0.0
      %551 = vmatpush.msra.mxu0 0.0
      %552 = vmatpush.msra.mxu0 0.0
      %553 = vmatpush.msra.mxu0 0.0
      %554 = vmatpush.msra.mxu0 0.0
      %555 = vmatpush.msra.mxu0 0.0
      %556 = vmatpush.msra.mxu0 0.0
      %557 = vmatpush.msra.mxu0 0.0
      %558 = vmatpush.msra.mxu0 0.0
      %559 = vmatpush.msra.mxu0 0.0
      %560 = vmatpush.msra.mxu0 %v543
      %561 = vmatmul.f32.gmra.mxu0 %v538
      %v562 = vpop.f32.mrf.mxu0
      %v563 = vadd.f32 0.0, %v562
      %564 = vmatmul.f32.gmra.mxu0 %v540
      %v565 = vpop.f32.mrf.mxu0
      %v566 = vadd.f32 0.0, %v565
      %567 = vdwg.mxu0
      %v568 = vadd.f32 %v528, %v563
      %v569 = vadd.f32 %v529, %v566
      %s570 = scalar_lea.vmem %s2, 16
      %v571 = vld [vmem:[%s570] sm:$0x3]
      %v572 = vrot.slane %v262, 2
      %v573 = vrot.slane %v263, 2
      %v574 = vsel %vm341, %v572, %v573
      %v575 = vrot.slane %v264, 2
      %v576 = vsel %vm341, %v573, %v575
      %v577 = vsel %vm277, %v574, 0
      %v579 = vsel %vm277, %v576, 0
      %v582 = vsel %vm282, %v571, 0
      %584 = vmatpush.msra.mxu0 0.0
      %585 = vmatpush.msra.mxu0 0.0
      %586 = vmatpush.msra.mxu0 0.0
      %587 = vmatpush.msra.mxu0 0.0
      %588 = vmatpush.msra.mxu0 0.0
      %589 = vmatpush.msra.mxu0 0.0
      %590 = vmatpush.msra.mxu0 0.0
      %591 = vmatpush.msra.mxu0 0.0
      %592 = vmatpush.msra.mxu0 0.0
      %593 = vmatpush.msra.mxu0 0.0
      %594 = vmatpush.msra.mxu0 0.0
      %595 = vmatpush.msra.mxu0 0.0
      %596 = vmatpush.msra.mxu0 0.0
      %597 = vmatpush.msra.mxu0 0.0
      %598 = vmatpush.msra.mxu0 0.0
      %599 = vmatpush.msra.mxu0 %v582
      %600 = vmatmul.f32.gmra.mxu0 %v577
      %v601 = vpop.f32.mrf.mxu0
      %v602 = vadd.f32 0.0, %v601
      %603 = vmatmul.f32.gmra.mxu0 %v579
      %v604 = vpop.f32.mrf.mxu0
      %v605 = vadd.f32 0.0, %v604
      %606 = vdwg.mxu0
      %v607 = vadd.f32 %v568, %v602
      %v608 = vadd.f32 %v569, %v605
      %v609 = vld [vmem:[%s3] sm:$0x1]
      %v611 = vperm.slane %v609, 0
      %v613 = vadd.f32 %v607, %v611
      %v614 = vadd.f32 %v608, %v611
      %v615 = vxor.u32 %v613, 2147483648
      %v616 = vxor.u32 %v614, 2147483648
      %v617 = vmul.f32 %v615, 1.442695
      %v618 = vpow.pop %v617
      %v619 = vmul.f32 %v616, 1.442695
      %v620 = vpow.pop %v619
      %v621 = vadd.f32 %v618, 1.0
      %v622 = vadd.f32 %v620, 1.0
      %v623 = vrcp.pop %v621
      %v624 = vmul.f32 %v621, %v623
      %v625 = vsub.f32 1.0, %v624
      %v626 = vmul.f32 %v623, %v625
      %v627 = vadd.f32 %v623, %v626
      %vm628 = vweird.f32 %v621
      %vm629 = vweird.f32 %v623
      %vm630 = vmor %vm628, %vm629
      %v631 = vsel %vm630, %v623, %v627
      %v632 = vand.u32 2147483647, %v621
      %vm633 = vcmp.eq.f32.partialorder %v632, 8.507059e+37
      %v634 = vand.u32 %v621, 2147483648
      %v635 = vor.u32 1.1754944e-38, %v634
      %v636 = vsel %vm633, %v635, %v631
      %v637 = vmul.f32 1.0, %v636
      %v638 = vrcp.pop %v622
      %v639 = vmul.f32 %v622, %v638
      %v640 = vsub.f32 1.0, %v639
      %v641 = vmul.f32 %v638, %v640
      %v642 = vadd.f32 %v638, %v641
      %vm643 = vweird.f32 %v622
      %vm644 = vweird.f32 %v638
      %vm645 = vmor %vm643, %vm644
      %v646 = vsel %vm645, %v638, %v642
      %v647 = vand.u32 2147483647, %v622
      %vm648 = vcmp.eq.f32.partialorder %v647, 8.507059e+37
      %v649 = vand.u32 %v622, 2147483648
      %v650 = vor.u32 1.1754944e-38, %v649
      %v651 = vsel %vm648, %v650, %v646
      %v652 = vmul.f32 1.0, %v651
      %v653 = vmul.f32 %v613, %v637
      %v654 = vmul.f32 %v614, %v652
      %v655 = vld [vmem:[%s244] sm:$0xff]
      %v656 = vld [vmem:[%s244 + $0x8] sm:$0xff]
      %v657 = vadd.f32 %v653, %v655
      %v658 = vadd.f32 %v654, %v656
      %659 = vst.msk [vmem:[%s253] sm:$0xff] %vm277, %v657
      %660 = vst.msk [vmem:[%s253 + $0x8] sm:$0xff] %vm277, %v658
      %p661 = scmp.lt.s32.totalorder %s19, 1
      %s662 = scalar_select %p661, %s19, 1
      %p663 = scmp.lt.s32.totalorder %s20, 15
      %s664 = scalar_select %p663, %s20, 15
      %s665 = smul.addr %s664, 2
      %s666 = smul.addr %s662, 32
      %s667 = sadd.s32 %s665, %s666
      %s668 = smul.addr %s667, 8
      %s669 = scalar_lea.vmem %s4, %s668
      // Predicated region
      $region37: #{bottleneck_csp_forward.6} parent=35 // pred_check
        %p670 = pneg %p143
      $region38: #{bottleneck_csp_forward.6} parent=35 // pred_check_branch
        %672 = sbr.rel (%p670) target = $region40
      $region39: #{bottleneck_csp_forward.6} parent=35 // pred_region
        _
      $region40: #{bottleneck_csp_forward.6} parent=35 // pred_fallthru
        _
    $region36: #{bottleneck_csp_forward.6} parent=5 // pred_fallthru
      _
    %p673 = scmp.le.s32.totalorder 2, %s10
    // Predicated region
    $region41: #{bottleneck_csp_forward.6} parent=5 // pred_check
      %p674 = pneg %p673
    $region42: #{bottleneck_csp_forward.6} parent=5 // pred_check_branch
      %676 = sbr.rel (%p674) target = $region44
    $region43: #{bottleneck_csp_forward.6} parent=5 // pred_region
      %s677 = ssub.s32 %s10, 2
      // Predicated region
      $region45: #{bottleneck_csp_forward.6} parent=43 // pred_check
        %p678 = pneg %p149
      $region46: #{bottleneck_csp_forward.6} parent=43 // pred_check_branch
        %680 = sbr.rel (%p678) target = $region48
      $region47: #{bottleneck_csp_forward.6} parent=43 // pred_region
        %p681 = scmp.lt.s32.totalorder %s21, 1
        %s682 = scalar_select %p681, %s21, 1
        %p683 = scmp.lt.s32.totalorder %s22, 15
        %s684 = scalar_select %p683, %s22, 15
        %s685 = smul.addr %s684, 2
        %s686 = smul.addr %s682, 32
        %s687 = sadd.s32 %s685, %s686
        %s688 = smul.addr %s687, 8
        %s689 = scalar_lea.vmem %s4, %s688
      $region48: #{bottleneck_csp_forward.6} parent=43 // pred_fallthru
        _
    $region44: #{bottleneck_csp_forward.6} parent=5 // pred_fallthru
      _
  $region6: #{bottleneck_csp_forward.6} parent=0 // loop_footer
    %s14 = sadd.s32 1, %s10
  $region7: #{bottleneck_csp_forward.6} parent=0 // loop_footer_branch
    %9 = sbr.rel target = $region3
  $region8: #{bottleneck_csp_forward.6} parent=0 // loop_exit
    _

// kernel: bottleneck_csp_forward.7
$region0: #{bottleneck_csp_forward.7}
  #allocation0 [shape = 'u32[]', space=smem, size = 0x4, offset = 0x4, fixed_abs, tag = 'smem constant byte address 0x4 - core index']
  #allocation1 [shape = 'u32[72,128]{1,0:T(1,128)}', space=vmem, size = 0x9000, scoped, tag = 'internal scratch']
  %s0 = inlined_call_operand.vmem [shape: f32[512,2], index: 0, kind: input, shape index: {}]
  %s1 = inlined_call_operand.vmem [shape: f32[512,2], index: 1, kind: input, shape index: {}]
  %s2 = inlined_call_operand.vmem [shape: f32[2,2], index: 2, kind: input, shape index: {}]
  %s3 = inlined_call_operand.vmem [shape: f32[1,2], index: 3, kind: input, shape index: {}]
  %s4 = inlined_call_operand.vmem [shape: f32[1,2], index: 4, kind: input, shape index: {}]
  %s5 = inlined_call_operand.vmem [shape: f32[1,2], index: 5, kind: input, shape index: {}]
  %s6 = inlined_call_operand.vmem [shape: f32[2,4], index: 6, kind: input, shape index: {}]
  %s7 = inlined_call_operand.vmem [shape: f32[2,4], index: 7, kind: input, shape index: {}]
  %s8 = inlined_call_operand.vmem [shape: f32[1,4], index: 8, kind: input, shape index: {}]
  %s9 = inlined_call_operand.vmem [shape: f32[512,4], index: 9, kind: output, shape index: {}]
  %s10 = sld [smem:[#allocation0]]
  $region69: #{bottleneck_csp_forward.7} parent=0
    _
  %s12 = ssub.s32 1, %s10
  %s13 = scalar_select 0, %s12, %s10
  loop: start=0, step=1, limit=4
  $region2: #{bottleneck_csp_forward.7} parent=0 // loop_pre_header
    _
  $region3: #{bottleneck_csp_forward.7} parent=0 // loop_header
    %s15 = sphi 0, %s19
    %p16 = scmp.ge.s32.totalorder %s15, 4
    %s25 = sphi 0, %s27
    %s28 = sphi 0, %s25
    %s29 = sphi 0, %s28
    %s45 = sphi 0, %s29
    %s51 = sphi 0, %s53
    %s54 = sphi 0, %s51
    %s55 = sphi 0, %s54
    %s71 = sphi 0, %s55
    %s75 = sphi 0, %s75
    %s77 = sphi 0, %s75
    %s78 = sphi 0, %s77
    %s92 = sphi 0, %s78
    %s96 = sphi 0, %s96
    %s98 = sphi 0, %s96
    %s99 = sphi 0, %s98
    %s113 = sphi 0, %s99
    %s117 = sphi 0, %s117
    %s119 = sphi 0, %s117
    %s120 = sphi 0, %s119
    %s134 = sphi 0, %s120
    %s138 = sphi 0, %s138
    %s140 = sphi 0, %s138
    %s141 = sphi 0, %s140
    %s155 = sphi 0, %s141
    %s159 = sphi 0, %s159
    %s161 = sphi 0, %s159
    %s162 = sphi 0, %s161
    %s176 = sphi 0, %s162
    %s180 = sphi 0, %s180
    %s182 = sphi 0, %s180
    %s183 = sphi 0, %s182
    %s197 = sphi 0, %s183
    %s201 = sphi 0, %s201
    %s203 = sphi 0, %s201
    %s204 = sphi 0, %s203
    %s218 = sphi 0, %s204
    %s224 = sphi 0, %s226
    %s227 = sphi 0, %s224
    %s228 = sphi 0, %s227
    %s244 = sphi 0, %s228
  $region4: #{bottleneck_csp_forward.7} parent=0 // loop_header_branch
    %18 = sbr.rel (%p16) target = $region8
  $region5: #{bottleneck_csp_forward.7} parent=0 // loop_body
    %s20 = ssub.s32 %s15, 1
    %s21 = ssub.s32 %s15, 2
    %s22 = sadd.s32 %s15, 1
    %s23 = ssub.s32 %s15, %s22
    %p24 = scmp.eq.s32.totalorder %s23, 0
    %s26 = sadd.s32 %s25, 1
    %s27 = scalar_select %p24, %s25, %s26
    %p30 = pneg %p24
    %p31 = scmp.eq.s32.totalorder %s15, 1
    %p32 = por %p30, %p31
    %p33 = scmp.ne.s32.totalorder %s25, %s28
    %p34 = scmp.eq.s32.totalorder %s15, 0
    %p35 = por %p33, %p34
    %p36 = scmp.ne.s32.totalorder %s25, %s28
    %p37 = scmp.eq.s32.totalorder %s20, 1
    %p38 = por %p36, %p37
    %p39 = scmp.ne.s32.totalorder %s28, %s29
    %p40 = scmp.eq.s32.totalorder %s20, 0
    %p41 = por %p39, %p40
    %p42 = scmp.ne.s32.totalorder %s28, %s29
    %p43 = scmp.eq.s32.totalorder %s21, 1
    %p44 = por %p42, %p43
    %p46 = scmp.ne.s32.totalorder %s29, %s45
    %p47 = scmp.eq.s32.totalorder %s21, 0
    %p48 = por %p46, %p47
    %s49 = ssub.s32 %s15, %s22
    %p50 = scmp.eq.s32.totalorder %s49, 0
    %s52 = sadd.s32 %s51, 1
    %s53 = scalar_select %p50, %s51, %s52
    %p56 = pneg %p50
    %p57 = scmp.eq.s32.totalorder %s15, 1
    %p58 = por %p56, %p57
    %p59 = scmp.ne.s32.totalorder %s51, %s54
    %p60 = scmp.eq.s32.totalorder %s15, 0
    %p61 = por %p59, %p60
    %p62 = scmp.ne.s32.totalorder %s51, %s54
    %p63 = scmp.eq.s32.totalorder %s20, 1
    %p64 = por %p62, %p63
    %p65 = scmp.ne.s32.totalorder %s54, %s55
    %p66 = scmp.eq.s32.totalorder %s20, 0
    %p67 = por %p65, %p66
    %p68 = scmp.ne.s32.totalorder %s54, %s55
    %p69 = scmp.eq.s32.totalorder %s21, 1
    %p70 = por %p68, %p69
    %p72 = scmp.ne.s32.totalorder %s55, %s71
    %p73 = scmp.eq.s32.totalorder %s21, 0
    %p74 = por %p72, %p73
    %s76 = sadd.s32 %s75, 1
    %p79 = scmp.eq.s32.totalorder %s15, 1
    %p80 = scmp.ne.s32.totalorder %s75, %s77
    %p81 = scmp.eq.s32.totalorder %s15, 0
    %p82 = por %p80, %p81
    %p83 = scmp.ne.s32.totalorder %s75, %s77
    %p84 = scmp.eq.s32.totalorder %s20, 1
    %p85 = por %p83, %p84
    %p86 = scmp.ne.s32.totalorder %s77, %s78
    %p87 = scmp.eq.s32.totalorder %s20, 0
    %p88 = por %p86, %p87
    %p89 = scmp.ne.s32.totalorder %s77, %s78
    %p90 = scmp.eq.s32.totalorder %s21, 1
    %p91 = por %p89, %p90
    %p93 = scmp.ne.s32.totalorder %s78, %s92
    %p94 = scmp.eq.s32.totalorder %s21, 0
    %p95 = por %p93, %p94
    %s97 = sadd.s32 %s96, 1
    %p100 = scmp.eq.s32.totalorder %s15, 1
    %p101 = scmp.ne.s32.totalorder %s96, %s98
    %p102 = scmp.eq.s32.totalorder %s15, 0
    %p103 = por %p101, %p102
    %p104 = scmp.ne.s32.totalorder %s96, %s98
    %p105 = scmp.eq.s32.totalorder %s20, 1
    %p106 = por %p104, %p105
    %p107 = scmp.ne.s32.totalorder %s98, %s99
    %p108 = scmp.eq.s32.totalorder %s20, 0
    %p109 = por %p107, %p108
    %p110 = scmp.ne.s32.totalorder %s98, %s99
    %p111 = scmp.eq.s32.totalorder %s21, 1
    %p112 = por %p110, %p111
    %p114 = scmp.ne.s32.totalorder %s99, %s113
    %p115 = scmp.eq.s32.totalorder %s21, 0
    %p116 = por %p114, %p115
    %s118 = sadd.s32 %s117, 1
    %p121 = scmp.eq.s32.totalorder %s15, 1
    %p122 = scmp.ne.s32.totalorder %s117, %s119
    %p123 = scmp.eq.s32.totalorder %s15, 0
    %p124 = por %p122, %p123
    %p125 = scmp.ne.s32.totalorder %s117, %s119
    %p126 = scmp.eq.s32.totalorder %s20, 1
    %p127 = por %p125, %p126
    %p128 = scmp.ne.s32.totalorder %s119, %s120
    %p129 = scmp.eq.s32.totalorder %s20, 0
    %p130 = por %p128, %p129
    %p131 = scmp.ne.s32.totalorder %s119, %s120
    %p132 = scmp.eq.s32.totalorder %s21, 1
    %p133 = por %p131, %p132
    %p135 = scmp.ne.s32.totalorder %s120, %s134
    %p136 = scmp.eq.s32.totalorder %s21, 0
    %p137 = por %p135, %p136
    %s139 = sadd.s32 %s138, 1
    %p142 = scmp.eq.s32.totalorder %s15, 1
    %p143 = scmp.ne.s32.totalorder %s138, %s140
    %p144 = scmp.eq.s32.totalorder %s15, 0
    %p145 = por %p143, %p144
    %p146 = scmp.ne.s32.totalorder %s138, %s140
    %p147 = scmp.eq.s32.totalorder %s20, 1
    %p148 = por %p146, %p147
    %p149 = scmp.ne.s32.totalorder %s140, %s141
    %p150 = scmp.eq.s32.totalorder %s20, 0
    %p151 = por %p149, %p150
    %p152 = scmp.ne.s32.totalorder %s140, %s141
    %p153 = scmp.eq.s32.totalorder %s21, 1
    %p154 = por %p152, %p153
    %p156 = scmp.ne.s32.totalorder %s141, %s155
    %p157 = scmp.eq.s32.totalorder %s21, 0
    %p158 = por %p156, %p157
    %s160 = sadd.s32 %s159, 1
    %p163 = scmp.eq.s32.totalorder %s15, 1
    %p164 = scmp.ne.s32.totalorder %s159, %s161
    %p165 = scmp.eq.s32.totalorder %s15, 0
    %p166 = por %p164, %p165
    %p167 = scmp.ne.s32.totalorder %s159, %s161
    %p168 = scmp.eq.s32.totalorder %s20, 1
    %p169 = por %p167, %p168
    %p170 = scmp.ne.s32.totalorder %s161, %s162
    %p171 = scmp.eq.s32.totalorder %s20, 0
    %p172 = por %p170, %p171
    %p173 = scmp.ne.s32.totalorder %s161, %s162
    %p174 = scmp.eq.s32.totalorder %s21, 1
    %p175 = por %p173, %p174
    %p177 = scmp.ne.s32.totalorder %s162, %s176
    %p178 = scmp.eq.s32.totalorder %s21, 0
    %p179 = por %p177, %p178
    %s181 = sadd.s32 %s180, 1
    %p184 = scmp.eq.s32.totalorder %s15, 1
    %p185 = scmp.ne.s32.totalorder %s180, %s182
    %p186 = scmp.eq.s32.totalorder %s15, 0
    %p187 = por %p185, %p186
    %p188 = scmp.ne.s32.totalorder %s180, %s182
    %p189 = scmp.eq.s32.totalorder %s20, 1
    %p190 = por %p188, %p189
    %p191 = scmp.ne.s32.totalorder %s182, %s183
    %p192 = scmp.eq.s32.totalorder %s20, 0
    %p193 = por %p191, %p192
    %p194 = scmp.ne.s32.totalorder %s182, %s183
    %p195 = scmp.eq.s32.totalorder %s21, 1
    %p196 = por %p194, %p195
    %p198 = scmp.ne.s32.totalorder %s183, %s197
    %p199 = scmp.eq.s32.totalorder %s21, 0
    %p200 = por %p198, %p199
    %s202 = sadd.s32 %s201, 1
    %p205 = scmp.eq.s32.totalorder %s15, 1
    %p206 = scmp.ne.s32.totalorder %s201, %s203
    %p207 = scmp.eq.s32.totalorder %s15, 0
    %p208 = por %p206, %p207
    %p209 = scmp.ne.s32.totalorder %s201, %s203
    %p210 = scmp.eq.s32.totalorder %s20, 1
    %p211 = por %p209, %p210
    %p212 = scmp.ne.s32.totalorder %s203, %s204
    %p213 = scmp.eq.s32.totalorder %s20, 0
    %p214 = por %p212, %p213
    %p215 = scmp.ne.s32.totalorder %s203, %s204
    %p216 = scmp.eq.s32.totalorder %s21, 1
    %p217 = por %p215, %p216
    %p219 = scmp.ne.s32.totalorder %s204, %s218
    %p220 = scmp.eq.s32.totalorder %s21, 0
    %p221 = por %p219, %p220
    %s222 = ssub.s32 %s15, %s22
    %p223 = scmp.eq.s32.totalorder %s222, 0
    %s225 = sadd.s32 %s224, 1
    %s226 = scalar_select %p223, %s224, %s225
    %p229 = pneg %p223
    %p230 = scmp.eq.s32.totalorder %s15, 1
    %p231 = por %p229, %p230
    %p232 = scmp.ne.s32.totalorder %s224, %s227
    %p233 = scmp.eq.s32.totalorder %s15, 0
    %p234 = por %p232, %p233
    %p235 = scmp.ne.s32.totalorder %s224, %s227
    %p236 = scmp.eq.s32.totalorder %s20, 1
    %p237 = por %p235, %p236
    %p238 = scmp.ne.s32.totalorder %s227, %s228
    %p239 = scmp.eq.s32.totalorder %s20, 0
    %p240 = por %p238, %p239
    %p241 = scmp.ne.s32.totalorder %s227, %s228
    %p242 = scmp.eq.s32.totalorder %s21, 1
    %p243 = por %p241, %p242
    %p245 = scmp.ne.s32.totalorder %s228, %s244
    %p246 = scmp.eq.s32.totalorder %s21, 0
    %p247 = por %p245, %p246
    %p248 = scmp.le.s32.totalorder 1, %s15
    %p249 = scmp.lt.s32.totalorder %s15, 3
    %p250 = pnand %p248, %p249
    %p251 = pneg %p250
    // Predicated region
    $region9: #{bottleneck_csp_forward.7} parent=5 // pred_check
      _
    $region10: #{bottleneck_csp_forward.7} parent=5 // pred_check_branch
      %253 = sbr.rel (%p250) target = $region12
    $region11: #{bottleneck_csp_forward.7} parent=5 // pred_region
      %s254 = ssub.s32 %s15, 1
      // Predicated region
      $region13: #{bottleneck_csp_forward.7} parent=11 // pred_check
        %p255 = pneg %p88
      $region14: #{bottleneck_csp_forward.7} parent=11 // pred_check_branch
        %257 = sbr.rel (%p255) target = $region16
      $region15: #{bottleneck_csp_forward.7} parent=11 // pred_region
        _
      $region16: #{bottleneck_csp_forward.7} parent=11 // pred_fallthru
        _
      // Predicated region
      $region17: #{bottleneck_csp_forward.7} parent=11 // pred_check
        %p258 = pneg %p109
      $region18: #{bottleneck_csp_forward.7} parent=11 // pred_check_branch
        %260 = sbr.rel (%p258) target = $region20
      $region19: #{bottleneck_csp_forward.7} parent=11 // pred_region
        _
      $region20: #{bottleneck_csp_forward.7} parent=11 // pred_fallthru
        _
      // Predicated region
      $region21: #{bottleneck_csp_forward.7} parent=11 // pred_check
        %p261 = pneg %p130
      $region22: #{bottleneck_csp_forward.7} parent=11 // pred_check_branch
        %263 = sbr.rel (%p261) target = $region24
      $region23: #{bottleneck_csp_forward.7} parent=11 // pred_region
        _
      $region24: #{bottleneck_csp_forward.7} parent=11 // pred_fallthru
        _
      // Predicated region
      $region25: #{bottleneck_csp_forward.7} parent=11 // pred_check
        %p264 = pneg %p151
      $region26: #{bottleneck_csp_forward.7} parent=11 // pred_check_branch
        %266 = sbr.rel (%p264) target = $region28
      $region27: #{bottleneck_csp_forward.7} parent=11 // pred_region
        _
      $region28: #{bottleneck_csp_forward.7} parent=11 // pred_fallthru
        _
      // Predicated region
      $region29: #{bottleneck_csp_forward.7} parent=11 // pred_check
        %p267 = pneg %p172
      $region30: #{bottleneck_csp_forward.7} parent=11 // pred_check_branch
        %269 = sbr.rel (%p267) target = $region32
      $region31: #{bottleneck_csp_forward.7} parent=11 // pred_region
        _
      $region32: #{bottleneck_csp_forward.7} parent=11 // pred_fallthru
        _
      // Predicated region
      $region33: #{bottleneck_csp_forward.7} parent=11 // pred_check
        %p270 = pneg %p193
      $region34: #{bottleneck_csp_forward.7} parent=11 // pred_check_branch
        %272 = sbr.rel (%p270) target = $region36
      $region35: #{bottleneck_csp_forward.7} parent=11 // pred_region
        _
      $region36: #{bottleneck_csp_forward.7} parent=11 // pred_fallthru
        _
      // Predicated region
      $region37: #{bottleneck_csp_forward.7} parent=11 // pred_check
        %p273 = pneg %p214
      $region38: #{bottleneck_csp_forward.7} parent=11 // pred_check_branch
        %275 = sbr.rel (%p273) target = $region40
      $region39: #{bottleneck_csp_forward.7} parent=11 // pred_region
        _
      $region40: #{bottleneck_csp_forward.7} parent=11 // pred_fallthru
        _
    $region12: #{bottleneck_csp_forward.7} parent=5 // pred_fallthru
      _
    %p276 = scmp.lt.s32.totalorder %s15, 2
    // Predicated region
    $region41: #{bottleneck_csp_forward.7} parent=5 // pred_check
      %p277 = pneg %p276
    $region42: #{bottleneck_csp_forward.7} parent=5 // pred_check_branch
      %279 = sbr.rel (%p277) target = $region44
    $region43: #{bottleneck_csp_forward.7} parent=5 // pred_region
      // Predicated region
      $region45: #{bottleneck_csp_forward.7} parent=43 // pred_check
        %p280 = pneg %p35
      $region46: #{bottleneck_csp_forward.7} parent=43 // pred_check_branch
        %282 = sbr.rel (%p280) target = $region48
      $region47: #{bottleneck_csp_forward.7} parent=43 // pred_region
        %s283 = smul.u32 32, %s15
        %p284 = scmp.lt.s32.totalorder %s283, 63
        %s285 = scalar_select %p284, %s283, 63
        %s286 = smul.addr %s285, 8
        %s287 = scalar_lea.vmem %s0, %s286
        %s288 = smul.u32 32, %s15
      $region48: #{bottleneck_csp_forward.7} parent=43 // pred_fallthru
        _
      // Predicated region
      $region49: #{bottleneck_csp_forward.7} parent=43 // pred_check
        %p289 = pneg %p61
      $region50: #{bottleneck_csp_forward.7} parent=43 // pred_check_branch
        %291 = sbr.rel (%p289) target = $region52
      $region51: #{bottleneck_csp_forward.7} parent=43 // pred_region
        %s292 = smul.u32 32, %s15
        %p293 = scmp.lt.s32.totalorder %s292, 63
        %s294 = scalar_select %p293, %s292, 63
        %s295 = smul.addr %s294, 8
        %s296 = scalar_lea.vmem %s1, %s295
        %s297 = smul.u32 32, %s15
      $region52: #{bottleneck_csp_forward.7} parent=43 // pred_fallthru
        _
    $region44: #{bottleneck_csp_forward.7} parent=5 // pred_fallthru
      _
    %p298 = scmp.le.s32.totalorder 1, %s15
    %p299 = scmp.lt.s32.totalorder %s15, 3
    %p300 = pnand %p298, %p299
    %p301 = pneg %p300
    // Predicated region
    $region53: #{bottleneck_csp_forward.7} parent=5 // pred_check
      _
    $region54: #{bottleneck_csp_forward.7} parent=5 // pred_check_branch
      %303 = sbr.rel (%p300) target = $region56
    $region55: #{bottleneck_csp_forward.7} parent=5 // pred_region
      %s304 = ssub.s32 %s15, 1
      %s305 = smul.u32 32, %s20
      %p306 = scmp.lt.s32.totalorder %s305, 63
      %s307 = scalar_select %p306, %s305, 63
      %s308 = smul.addr %s307, 8
      %s309 = scalar_lea.vmem %s0, %s308
      %p310 = pneg %p41
      %p311 = pneg %p38
      %s312 = smul.u32 32, %s20
      %p313 = scmp.lt.s32.totalorder %s312, 63
      %s314 = scalar_select %p313, %s312, 63
      %s315 = smul.addr %s314, 8
      %s316 = scalar_lea.vmem %s1, %s315
      %p317 = pneg %p67
      %p318 = pneg %p64
      %p319 = pneg %p88
      %p320 = pneg %p85
      %p321 = pneg %p109
      %p322 = pneg %p106
      %p323 = pneg %p130
      %p324 = pneg %p127
      %p325 = pneg %p151
      %p326 = pneg %p148
      %p327 = pneg %p172
      %p328 = pneg %p169
      %p329 = pneg %p193
      %p330 = pneg %p190
      %p331 = pneg %p214
      %p332 = pneg %p211
      %p333 = pneg %p240
      %p334 = pneg %p237
      %s335 = smul.u32 32, %s20
      %p336 = scmp.lt.s32.totalorder %s335, 63
      %s337 = scalar_select %p336, %s335, 63
      %s338 = smul.addr %s337, 8
      %s339 = scalar_lea.vmem %s9, %s338
      %s340 = smul.u32 32, %s20
      %p341 = scmp.lt.s32.totalorder %s340, 63
      %s342 = scalar_select %p341, %s340, 63
      %s343 = smul.addr %s342, 8
      %s344 = scalar_lea.vmem %s0, %s343
      %s345 = smul.u32 32, %s20
      %s346 = smul.u32 32, %s20
      %p347 = scmp.lt.s32.totalorder %s346, 63
      %s348 = scalar_select %p347, %s346, 63
      %s349 = smul.addr %s348, 8
      %s350 = scalar_lea.vmem %s1, %s349
      %s351 = smul.u32 32, %s20
      %s352 = smul.u32 32, %s20
      %p353 = scmp.lt.s32.totalorder %s352, 63
      %s354 = scalar_select %p353, %s352, 63
      %s355 = smul.addr %s354, 8
      %s356 = scalar_lea.vmem %s9, %s355
      %s357 = smul.u32 32, %s20
      %v358 = vld [vmem:[%s344] sm:$0xff]
      %v359 = vld [vmem:[%s344 + $0x8] sm:$0xff]
      %v360 = vld [vmem:[%s344 + $0x10] sm:$0xff]
      %v361 = vld [vmem:[%s344 + $0x18] sm:$0xff]
      %v362 = vld [vmem:[%s344 + $0x20] sm:$0xff]
      %v363 = vld [vmem:[%s344 + $0x28] sm:$0xff]
      %v364 = vld [vmem:[%s344 + $0x30] sm:$0xff]
      %v365 = vld [vmem:[%s344 + $0x38] sm:$0xff]
      %v366 = vld [vmem:[%s344 + $0x40] sm:$0xff]
      %v367 = vld [vmem:[%s344 + $0x48] sm:$0xff]
      %v368 = vld [vmem:[%s344 + $0x50] sm:$0xff]
      %v369 = vld [vmem:[%s344 + $0x58] sm:$0xff]
      %v370 = vld [vmem:[%s344 + $0x60] sm:$0xff]
      %v371 = vld [vmem:[%s344 + $0x68] sm:$0xff]
      %v372 = vld [vmem:[%s344 + $0x70] sm:$0xff]
      %v373 = vld [vmem:[%s344 + $0x78] sm:$0xff]
      %v374 = vld [vmem:[%s344 + $0x80] sm:$0xff]
      %v375 = vld [vmem:[%s344 + $0x88] sm:$0xff]
      %v376 = vld [vmem:[%s344 + $0x90] sm:$0xff]
      %v377 = vld [vmem:[%s344 + $0x98] sm:$0xff]
      %v378 = vld [vmem:[%s344 + $0xa0] sm:$0xff]
      %v379 = vld [vmem:[%s344 + $0xa8] sm:$0xff]
      %v380 = vld [vmem:[%s344 + $0xb0] sm:$0xff]
      %v381 = vld [vmem:[%s344 + $0xb8] sm:$0xff]
      %v382 = vld [vmem:[%s344 + $0xc0] sm:$0xff]
      %v383 = vld [vmem:[%s344 + $0xc8] sm:$0xff]
      %v384 = vld [vmem:[%s344 + $0xd0] sm:$0xff]
      %v385 = vld [vmem:[%s344 + $0xd8] sm:$0xff]
      %v386 = vld [vmem:[%s344 + $0xe0] sm:$0xff]
      %v387 = vld [vmem:[%s344 + $0xe8] sm:$0xff]
      %v388 = vld [vmem:[%s344 + $0xf0] sm:$0xff]
      %v389 = vld [vmem:[%s344 + $0xf8] sm:$0xff]
      %v390 = vld [vmem:[%s2] sm:$0x3]
      %v391 = vld [vmem:[%s3] sm:$0x1]
      %v393 = vperm.slane %v391, 0
      %vm395 = vcmask 15360
      %v397 = vsel %vm395, %v358, 0
      %v400 = vsel %vm395, %v359, 0
      %v403 = vsel %vm395, %v360, 0
      %v406 = vsel %vm395, %v361, 0
      %v409 = vsel %vm395, %v362, 0
      %v412 = vsel %vm395, %v363, 0
      %v415 = vsel %vm395, %v364, 0
      %v418 = vsel %vm395, %v365, 0
      %v421 = vsel %vm395, %v366, 0
      %v424 = vsel %vm395, %v367, 0
      %v427 = vsel %vm395, %v368, 0
      %v430 = vsel %vm395, %v369, 0
      %v433 = vsel %vm395, %v370, 0
      %v436 = vsel %vm395, %v371, 0
      %v439 = vsel %vm395, %v372, 0
      %v442 = vsel %vm395, %v373, 0
      %v445 = vsel %vm395, %v374, 0
      %v448 = vsel %vm395, %v375, 0
      %v451 = vsel %vm395, %v376, 0
      %v454 = vsel %vm395, %v377, 0
      %v457 = vsel %vm395, %v378, 0
      %v460 = vsel %vm395, %v379, 0
      %v463 = vsel %vm395, %v380, 0
      %v466 = vsel %vm395, %v381, 0
      %v469 = vsel %vm395, %v382, 0
      %v472 = vsel %vm395, %v383, 0
      %v475 = vsel %vm395, %v384, 0
      %v478 = vsel %vm395, %v385, 0
      %v481 = vsel %vm395, %v386, 0
      %v484 = vsel %vm395, %v387, 0
      %v487 = vsel %vm395, %v388, 0
      %v490 = vsel %vm395, %v389, 0
      %vm492 = vcmask 1041408
      %v494 = vsel %vm492, %v390, 0
      %496 = vmatpush.msra.mxu0 0.0
      %497 = vmatpush.msra.mxu0 0.0
      %498 = vmatpush.msra.mxu0 0.0
      %499 = vmatpush.msra.mxu0 0.0
      %500 = vmatpush.msra.mxu0 0.0
      %501 = vmatpush.msra.mxu0 0.0
      %502 = vmatpush.msra.mxu0 0.0
      %503 = vmatpush.msra.mxu0 0.0
      %504 = vmatpush.msra.mxu0 0.0
      %505 = vmatpush.msra.mxu0 0.0
      %506 = vmatpush.msra.mxu0 0.0
      %507 = vmatpush.msra.mxu0 0.0
      %508 = vmatpush.msra.mxu0 0.0
      %509 = vmatpush.msra.mxu0 0.0
      %510 = vmatpush.msra.mxu0 0.0
      %511 = vmatpush.msra.mxu0 %v494
      %512 = vmatmul.f32.gmra.mxu0 %v397
      %v513 = vpop.f32.mrf.mxu0
      %v514 = vadd.f32 %v393, %v513
      %515 = vmatmul.f32.gmra.mxu0 %v400
      %v516 = vpop.f32.mrf.mxu0
      %v517 = vadd.f32 %v393, %v516
      %518 = vmatmul.f32.gmra.mxu0 %v403
      %v519 = vpop.f32.mrf.mxu0
      %v520 = vadd.f32 %v393, %v519
      %521 = vmatmul.f32.gmra.mxu0 %v406
      %v522 = vpop.f32.mrf.mxu0
      %v523 = vadd.f32 %v393, %v522
      %524 = vmatmul.f32.gmra.mxu0 %v409
      %v525 = vpop.f32.mrf.mxu0
      %v526 = vadd.f32 %v393, %v525
      %527 = vmatmul.f32.gmra.mxu0 %v412
      %v528 = vpop.f32.mrf.mxu0
      %v529 = vadd.f32 %v393, %v528
      %530 = vmatmul.f32.gmra.mxu0 %v415
      %v531 = vpop.f32.mrf.mxu0
      %v532 = vadd.f32 %v393, %v531
      %533 = vmatmul.f32.gmra.mxu0 %v418
      %v534 = vpop.f32.mrf.mxu0
      %v535 = vadd.f32 %v393, %v534
      %536 = vmatmul.f32.gmra.mxu0 %v421
      %v537 = vpop.f32.mrf.mxu0
      %v538 = vadd.f32 %v393, %v537
      %539 = vmatmul.f32.gmra.mxu0 %v424
      %v540 = vpop.f32.mrf.mxu0
      %v541 = vadd.f32 %v393, %v540
      %542 = vmatmul.f32.gmra.mxu0 %v427
      %v543 = vpop.f32.mrf.mxu0
      %v544 = vadd.f32 %v393, %v543
      %545 = vmatmul.f32.gmra.mxu0 %v430
      %v546 = vpop.f32.mrf.mxu0
      %v547 = vadd.f32 %v393, %v546
      %548 = vmatmul.f32.gmra.mxu0 %v433
      %v549 = vpop.f32.mrf.mxu0
      %v550 = vadd.f32 %v393, %v549
      %551 = vmatmul.f32.gmra.mxu0 %v436
      %v552 = vpop.f32.mrf.mxu0
      %v553 = vadd.f32 %v393, %v552
      %554 = vmatmul.f32.gmra.mxu0 %v439
      %v555 = vpop.f32.mrf.mxu0
      %v556 = vadd.f32 %v393, %v555
      %557 = vmatmul.f32.gmra.mxu0 %v442
      %v558 = vpop.f32.mrf.mxu0
      %v559 = vadd.f32 %v393, %v558
      %560 = vmatmul.f32.gmra.mxu0 %v445
      %v561 = vpop.f32.mrf.mxu0
      %v562 = vadd.f32 %v393, %v561
      %563 = vmatmul.f32.gmra.mxu0 %v448
      %v564 = vpop.f32.mrf.mxu0
      %v565 = vadd.f32 %v393, %v564
      %566 = vmatmul.f32.gmra.mxu0 %v451
      %v567 = vpop.f32.mrf.mxu0
      %v568 = vadd.f32 %v393, %v567
      %569 = vmatmul.f32.gmra.mxu0 %v454
      %v570 = vpop.f32.mrf.mxu0
      %v571 = vadd.f32 %v393, %v570
      %572 = vmatmul.f32.gmra.mxu0 %v457
      %v573 = vpop.f32.mrf.mxu0
      %v574 = vadd.f32 %v393, %v573
      %575 = vmatmul.f32.gmra.mxu0 %v460
      %v576 = vpop.f32.mrf.mxu0
      %v577 = vadd.f32 %v393, %v576
      %578 = vmatmul.f32.gmra.mxu0 %v463
      %v579 = vpop.f32.mrf.mxu0
      %v580 = vadd.f32 %v393, %v579
      %581 = vmatmul.f32.gmra.mxu0 %v466
      %v582 = vpop.f32.mrf.mxu0
      %v583 = vadd.f32 %v393, %v582
      %584 = vmatmul.f32.gmra.mxu0 %v469
      %v585 = vpop.f32.mrf.mxu0
      %v586 = vadd.f32 %v393, %v585
      %587 = vmatmul.f32.gmra.mxu0 %v472
      %v588 = vpop.f32.mrf.mxu0
      %v589 = vadd.f32 %v393, %v588
      %590 = vmatmul.f32.gmra.mxu0 %v475
      %v591 = vpop.f32.mrf.mxu0
      %v592 = vadd.f32 %v393, %v591
      %593 = vmatmul.f32.gmra.mxu0 %v478
      %v594 = vpop.f32.mrf.mxu0
      %v595 = vadd.f32 %v393, %v594
      %596 = vmatmul.f32.gmra.mxu0 %v481
      %v597 = vpop.f32.mrf.mxu0
      %v598 = vadd.f32 %v393, %v597
      %599 = vmatmul.f32.gmra.mxu0 %v484
      %v600 = vpop.f32.mrf.mxu0
      %v601 = vadd.f32 %v393, %v600
      %602 = vmatmul.f32.gmra.mxu0 %v487
      %v603 = vpop.f32.mrf.mxu0
      %v604 = vadd.f32 %v393, %v603
      %605 = vmatmul.f32.gmra.mxu0 %v490
      %v606 = vpop.f32.mrf.mxu0
      %v607 = vadd.f32 %v393, %v606
      %608 = vdwg.mxu0
      %v609 = vxor.u32 %v514, 2147483648
      %v610 = vxor.u32 %v517, 2147483648
      %v611 = vxor.u32 %v520, 2147483648
      %v612 = vxor.u32 %v523, 2147483648
      %v613 = vxor.u32 %v526, 2147483648
      %v614 = vxor.u32 %v529, 2147483648
      %v615 = vxor.u32 %v532, 2147483648
      %v616 = vxor.u32 %v535, 2147483648
      %v617 = vxor.u32 %v538, 2147483648
      %v618 = vxor.u32 %v541, 2147483648
      %v619 = vxor.u32 %v544, 2147483648
      %v620 = vxor.u32 %v547, 2147483648
      %v621 = vxor.u32 %v550, 2147483648
      %v622 = vxor.u32 %v553, 2147483648
      %v623 = vxor.u32 %v556, 2147483648
      %v624 = vxor.u32 %v559, 2147483648
      %v625 = vxor.u32 %v562, 2147483648
      %v626 = vxor.u32 %v565, 2147483648
      %v627 = vxor.u32 %v568, 2147483648
      %v628 = vxor.u32 %v571, 2147483648
      %v629 = vxor.u32 %v574, 2147483648
      %v630 = vxor.u32 %v577, 2147483648
      %v631 = vxor.u32 %v580, 2147483648
      %v632 = vxor.u32 %v583, 2147483648
      %v633 = vxor.u32 %v586, 2147483648
      %v634 = vxor.u32 %v589, 2147483648
      %v635 = vxor.u32 %v592, 2147483648
      %v636 = vxor.u32 %v595, 2147483648
      %v637 = vxor.u32 %v598, 2147483648
      %v638 = vxor.u32 %v601, 2147483648
      %v639 = vxor.u32 %v604, 2147483648
      %v640 = vxor.u32 %v607, 2147483648
      %v641 = vmul.f32 %v609, 1.442695
      %v642 = vpow.pop %v641
      %v643 = vmul.f32 %v610, 1.442695
      %v644 = vpow.pop %v643
      %v645 = vmul.f32 %v611, 1.442695
      %v646 = vpow.pop %v645
      %v647 = vmul.f32 %v612, 1.442695
      %v648 = vpow.pop %v647
      %v649 = vmul.f32 %v613, 1.442695
      %v650 = vpow.pop %v649
      %v651 = vmul.f32 %v614, 1.442695
      %v652 = vpow.pop %v651
      %v653 = vmul.f32 %v615, 1.442695
      %v654 = vpow.pop %v653
      %v655 = vmul.f32 %v616, 1.442695
      %v656 = vpow.pop %v655
      %v657 = vmul.f32 %v617, 1.442695
      %v658 = vpow.pop %v657
      %v659 = vmul.f32 %v618, 1.442695
      %v660 = vpow.pop %v659
      %v661 = vmul.f32 %v619, 1.442695
      %v662 = vpow.pop %v661
      %v663 = vmul.f32 %v620, 1.442695
      %v664 = vpow.pop %v663
      %v665 = vmul.f32 %v621, 1.442695
      %v666 = vpow.pop %v665
      %v667 = vmul.f32 %v622, 1.442695
      %v668 = vpow.pop %v667
      %v669 = vmul.f32 %v623, 1.442695
      %v670 = vpow.pop %v669
      %v671 = vmul.f32 %v624, 1.442695
      %v672 = vpow.pop %v671
      %v673 = vmul.f32 %v625, 1.442695
      %v674 = vpow.pop %v673
      %v675 = vmul.f32 %v626, 1.442695
      %v676 = vpow.pop %v675
      %v677 = vmul.f32 %v627, 1.442695
      %v678 = vpow.pop %v677
      %v679 = vmul.f32 %v628, 1.442695
      %v680 = vpow.pop %v679
      %v681 = vmul.f32 %v629, 1.442695
      %v682 = vpow.pop %v681
      %v683 = vmul.f32 %v630, 1.442695
      %v684 = vpow.pop %v683
      %v685 = vmul.f32 %v631, 1.442695
      %v686 = vpow.pop %v685
      %v687 = vmul.f32 %v632, 1.442695
      %v688 = vpow.pop %v687
      %v689 = vmul.f32 %v633, 1.442695
      %v690 = vpow.pop %v689
      %v691 = vmul.f32 %v634, 1.442695
      %v692 = vpow.pop %v691
      %v693 = vmul.f32 %v635, 1.442695
      %v694 = vpow.pop %v693
      %v695 = vmul.f32 %v636, 1.442695
      %v696 = vpow.pop %v695
      %v697 = vmul.f32 %v637, 1.442695
      %v698 = vpow.pop %v697
      %v699 = vmul.f32 %v638, 1.442695
      %v700 = vpow.pop %v699
      %v701 = vmul.f32 %v639, 1.442695
      %v702 = vpow.pop %v701
      %v703 = vmul.f32 %v640, 1.442695
      %v704 = vpow.pop %v703
      %v705 = vadd.f32 %v642, 1.0
      %v706 = vadd.f32 %v644, 1.0
      %v707 = vadd.f32 %v646, 1.0
      %v708 = vadd.f32 %v648, 1.0
      %v709 = vadd.f32 %v650, 1.0
      %v710 = vadd.f32 %v652, 1.0
      %v711 = vadd.f32 %v654, 1.0
      %v712 = vadd.f32 %v656, 1.0
      %v713 = vadd.f32 %v658, 1.0
      %v714 = vadd.f32 %v660, 1.0
      %v715 = vadd.f32 %v662, 1.0
      %v716 = vadd.f32 %v664, 1.0
      %v717 = vadd.f32 %v666, 1.0
      %v718 = vadd.f32 %v668, 1.0
      %v719 = vadd.f32 %v670, 1.0
      %v720 = vadd.f32 %v672, 1.0
      %v721 = vadd.f32 %v674, 1.0
      %v722 = vadd.f32 %v676, 1.0
      %v723 = vadd.f32 %v678, 1.0
      %v724 = vadd.f32 %v680, 1.0
      %v725 = vadd.f32 %v682, 1.0
      %v726 = vadd.f32 %v684, 1.0
      %v727 = vadd.f32 %v686, 1.0
      %v728 = vadd.f32 %v688, 1.0
      %v729 = vadd.f32 %v690, 1.0
      %v730 = vadd.f32 %v692, 1.0
      %v731 = vadd.f32 %v694, 1.0
      %v732 = vadd.f32 %v696, 1.0
      %v733 = vadd.f32 %v698, 1.0
      %v734 = vadd.f32 %v700, 1.0
      %v735 = vadd.f32 %v702, 1.0
      %v736 = vadd.f32 %v704, 1.0
      %v737 = vrcp.pop %v705
      %v738 = vmul.f32 %v705, %v737
      %v739 = vsub.f32 1.0, %v738
      %v740 = vmul.f32 %v737, %v739
      %v741 = vadd.f32 %v737, %v740
      %vm742 = vweird.f32 %v705
      %vm743 = vweird.f32 %v737
      %vm744 = vmor %vm742, %vm743
      %v745 = vsel %vm744, %v737, %v741
      %v746 = vand.u32 2147483647, %v705
      %vm747 = vcmp.eq.f32.partialorder %v746, 8.507059e+37
      %v748 = vand.u32 %v705, 2147483648
      %v749 = vor.u32 1.1754944e-38, %v748
      %v750 = vsel %vm747, %v749, %v745
      %v751 = vmul.f32 1.0, %v750
      %v752 = vrcp.pop %v706
      %v753 = vmul.f32 %v706, %v752
      %v754 = vsub.f32 1.0, %v753
      %v755 = vmul.f32 %v752, %v754
      %v756 = vadd.f32 %v752, %v755
      %vm757 = vweird.f32 %v706
      %vm758 = vweird.f32 %v752
      %vm759 = vmor %vm757, %vm758
      %v760 = vsel %vm759, %v752, %v756
      %v761 = vand.u32 2147483647, %v706
      %vm762 = vcmp.eq.f32.partialorder %v761, 8.507059e+37
      %v763 = vand.u32 %v706, 2147483648
      %v764 = vor.u32 1.1754944e-38, %v763
      %v765 = vsel %vm762, %v764, %v760
      %v766 = vmul.f32 1.0, %v765
      %v767 = vrcp.pop %v707
      %v768 = vmul.f32 %v707, %v767
      %v769 = vsub.f32 1.0, %v768
      %v770 = vmul.f32 %v767, %v769
      %v771 = vadd.f32 %v767, %v770
      %vm772 = vweird.f32 %v707
      %vm773 = vweird.f32 %v767
      %vm774 = vmor %vm772, %vm773
      %v775 = vsel %vm774, %v767, %v771
      %v776 = vand.u32 2147483647, %v707
      %vm777 = vcmp.eq.f32.partialorder %v776, 8.507059e+37
      %v778 = vand.u32 %v707, 2147483648
      %v779 = vor.u32 1.1754944e-38, %v778
      %v780 = vsel %vm777, %v779, %v775
      %v781 = vmul.f32 1.0, %v780
      %v782 = vrcp.pop %v708
      %v783 = vmul.f32 %v708, %v782
      %v784 = vsub.f32 1.0, %v783
      %v785 = vmul.f32 %v782, %v784
      %v786 = vadd.f32 %v782, %v785
      %vm787 = vweird.f32 %v708
      %vm788 = vweird.f32 %v782
      %vm789 = vmor %vm787, %vm788
      %v790 = vsel %vm789, %v782, %v786
      %v791 = vand.u32 2147483647, %v708
      %vm792 = vcmp.eq.f32.partialorder %v791, 8.507059e+37
      %v793 = vand.u32 %v708, 2147483648
      %v794 = vor.u32 1.1754944e-38, %v793
      %v795 = vsel %vm792, %v794, %v790
      %v796 = vmul.f32 1.0, %v795
      %v797 = vrcp.pop %v709
      %v798 = vmul.f32 %v709, %v797
      %v799 = vsub.f32 1.0, %v798
      %v800 = vmul.f32 %v797, %v799
      %v801 = vadd.f32 %v797, %v800
      %vm802 = vweird.f32 %v709
      %vm803 = vweird.f32 %v797
      %vm804 = vmor %vm802, %vm803
      %v805 = vsel %vm804, %v797, %v801
      %v806 = vand.u32 2147483647, %v709
      %vm807 = vcmp.eq.f32.partialorder %v806, 8.507059e+37
      %v808 = vand.u32 %v709, 2147483648
      %v809 = vor.u32 1.1754944e-38, %v808
      %v810 = vsel %vm807, %v809, %v805
      %v811 = vmul.f32 1.0, %v810
      %v812 = vrcp.pop %v710
      %v813 = vmul.f32 %v710, %v812
      %v814 = vsub.f32 1.0, %v813
      %v815 = vmul.f32 %v812, %v814
      %v816 = vadd.f32 %v812, %v815
      %vm817 = vweird.f32 %v710
      %vm818 = vweird.f32 %v812
      %vm819 = vmor %vm817, %vm818
      %v820 = vsel %vm819, %v812, %v816
      %v821 = vand.u32 2147483647, %v710
      %vm822 = vcmp.eq.f32.partialorder %v821, 8.507059e+37
      %v823 = vand.u32 %v710, 2147483648
      %v824 = vor.u32 1.1754944e-38, %v823
      %v825 = vsel %vm822, %v824, %v820
      %v826 = vmul.f32 1.0, %v825
      %v827 = vrcp.pop %v711
      %v828 = vmul.f32 %v711, %v827
      %v829 = vsub.f32 1.0, %v828
      %v830 = vmul.f32 %v827, %v829
      %v831 = vadd.f32 %v827, %v830
      %vm832 = vweird.f32 %v711
      %vm833 = vweird.f32 %v827
      %vm834 = vmor %vm832, %vm833
      %v835 = vsel %vm834, %v827, %v831
      %v836 = vand.u32 2147483647, %v711
      %vm837 = vcmp.eq.f32.partialorder %v836, 8.507059e+37
      %v838 = vand.u32 %v711, 2147483648
      %v839 = vor.u32 1.1754944e-38, %v838
      %v840 = vsel %vm837, %v839, %v835
      %v841 = vmul.f32 1.0, %v840
      %v842 = vrcp.pop %v712
      %v843 = vmul.f32 %v712, %v842
      %v844 = vsub.f32 1.0, %v843
      %v845 = vmul.f32 %v842, %v844
      %v846 = vadd.f32 %v842, %v845
      %vm847 = vweird.f32 %v712
      %vm848 = vweird.f32 %v842
      %vm849 = vmor %vm847, %vm848
      %v850 = vsel %vm849, %v842, %v846
      %v851 = vand.u32 2147483647, %v712
      %vm852 = vcmp.eq.f32.partialorder %v851, 8.507059e+37
      %v853 = vand.u32 %v712, 2147483648
      %v854 = vor.u32 1.1754944e-38, %v853
      %v855 = vsel %vm852, %v854, %v850
      %v856 = vmul.f32 1.0, %v855
      %v857 = vrcp.pop %v713
      %v858 = vmul.f32 %v713, %v857
      %v859 = vsub.f32 1.0, %v858
      %v860 = vmul.f32 %v857, %v859
      %v861 = vadd.f32 %v857, %v860
      %vm862 = vweird.f32 %v713
      %vm863 = vweird.f32 %v857
      %vm864 = vmor %vm862, %vm863
      %v865 = vsel %vm864, %v857, %v861
      %v866 = vand.u32 2147483647, %v713
      %vm867 = vcmp.eq.f32.partialorder %v866, 8.507059e+37
      %v868 = vand.u32 %v713, 2147483648
      %v869 = vor.u32 1.1754944e-38, %v868
      %v870 = vsel %vm867, %v869, %v865
      %v871 = vmul.f32 1.0, %v870
      %v872 = vrcp.pop %v714
      %v873 = vmul.f32 %v714, %v872
      %v874 = vsub.f32 1.0, %v873
      %v875 = vmul.f32 %v872, %v874
      %v876 = vadd.f32 %v872, %v875
      %vm877 = vweird.f32 %v714
      %vm878 = vweird.f32 %v872
      %vm879 = vmor %vm877, %vm878
      %v880 = vsel %vm879, %v872, %v876
      %v881 = vand.u32 2147483647, %v714
      %vm882 = vcmp.eq.f32.partialorder %v881, 8.507059e+37
      %v883 = vand.u32 %v714, 2147483648
      %v884 = vor.u32 1.1754944e-38, %v883
      %v885 = vsel %vm882, %v884, %v880
      %v886 = vmul.f32 1.0, %v885
      %v887 = vrcp.pop %v715
      %v888 = vmul.f32 %v715, %v887
      %v889 = vsub.f32 1.0, %v888
      %v890 = vmul.f32 %v887, %v889
      %v891 = vadd.f32 %v887, %v890
      %vm892 = vweird.f32 %v715
      %vm893 = vweird.f32 %v887
      %vm894 = vmor %vm892, %vm893
      %v895 = vsel %vm894, %v887, %v891
      %v896 = vand.u32 2147483647, %v715
      %vm897 = vcmp.eq.f32.partialorder %v896, 8.507059e+37
      %v898 = vand.u32 %v715, 2147483648
      %v899 = vor.u32 1.1754944e-38, %v898
      %v900 = vsel %vm897, %v899, %v895
      %v901 = vmul.f32 1.0, %v900
      %v902 = vrcp.pop %v716
      %v903 = vmul.f32 %v716, %v902
      %v904 = vsub.f32 1.0, %v903
      %v905 = vmul.f32 %v902, %v904
      %v906 = vadd.f32 %v902, %v905
      %vm907 = vweird.f32 %v716
      %vm908 = vweird.f32 %v902
      %vm909 = vmor %vm907, %vm908
      %v910 = vsel %vm909, %v902, %v906
      %v911 = vand.u32 2147483647, %v716
      %vm912 = vcmp.eq.f32.partialorder %v911, 8.507059e+37
      %v913 = vand.u32 %v716, 2147483648
      %v914 = vor.u32 1.1754944e-38, %v913
      %v915 = vsel %vm912, %v914, %v910
      %v916 = vmul.f32 1.0, %v915
      %v917 = vrcp.pop %v717
      %v918 = vmul.f32 %v717, %v917
      %v919 = vsub.f32 1.0, %v918
      %v920 = vmul.f32 %v917, %v919
      %v921 = vadd.f32 %v917, %v920
      %vm922 = vweird.f32 %v717
      %vm923 = vweird.f32 %v917
      %vm924 = vmor %vm922, %vm923
      %v925 = vsel %vm924, %v917, %v921
      %v926 = vand.u32 2147483647, %v717
      %vm927 = vcmp.eq.f32.partialorder %v926, 8.507059e+37
      %v928 = vand.u32 %v717, 2147483648
      %v929 = vor.u32 1.1754944e-38, %v928
      %v930 = vsel %vm927, %v929, %v925
      %v931 = vmul.f32 1.0, %v930
      %v932 = vrcp.pop %v718
      %v933 = vmul.f32 %v718, %v932
      %v934 = vsub.f32 1.0, %v933
      %v935 = vmul.f32 %v932, %v934
      %v936 = vadd.f32 %v932, %v935
      %vm937 = vweird.f32 %v718
      %vm938 = vweird.f32 %v932
      %vm939 = vmor %vm937, %vm938
      %v940 = vsel %vm939, %v932, %v936
      %v941 = vand.u32 2147483647, %v718
      %vm942 = vcmp.eq.f32.partialorder %v941, 8.507059e+37
      %v943 = vand.u32 %v718, 2147483648
      %v944 = vor.u32 1.1754944e-38, %v943
      %v945 = vsel %vm942, %v944, %v940
      %v946 = vmul.f32 1.0, %v945
      %v947 = vrcp.pop %v719
      %v948 = vmul.f32 %v719, %v947
      %v949 = vsub.f32 1.0, %v948
      %v950 = vmul.f32 %v947, %v949
      %v951 = vadd.f32 %v947, %v950
      %vm952 = vweird.f32 %v719
      %vm953 = vweird.f32 %v947
      %vm954 = vmor %vm952, %vm953
      %v955 = vsel %vm954, %v947, %v951
      %v956 = vand.u32 2147483647, %v719
      %vm957 = vcmp.eq.f32.partialorder %v956, 8.507059e+37
      %v958 = vand.u32 %v719, 2147483648
      %v959 = vor.u32 1.1754944e-38, %v958
      %v960 = vsel %vm957, %v959, %v955
      %v961 = vmul.f32 1.0, %v960
      %v962 = vrcp.pop %v720
      %v963 = vmul.f32 %v720, %v962
      %v964 = vsub.f32 1.0, %v963
      %v965 = vmul.f32 %v962, %v964
      %v966 = vadd.f32 %v962, %v965
      %vm967 = vweird.f32 %v720
      %vm968 = vweird.f32 %v962
      %vm969 = vmor %vm967, %vm968
      %v970 = vsel %vm969, %v962, %v966
      %v971 = vand.u32 2147483647, %v720
      %vm972 = vcmp.eq.f32.partialorder %v971, 8.507059e+37
      %v973 = vand.u32 %v720, 2147483648
      %v974 = vor.u32 1.1754944e-38, %v973
      %v975 = vsel %vm972, %v974, %v970
      %v976 = vmul.f32 1.0, %v975
      %v977 = vrcp.pop %v721
      %v978 = vmul.f32 %v721, %v977
      %v979 = vsub.f32 1.0, %v978
      %v980 = vmul.f32 %v977, %v979
      %v981 = vadd.f32 %v977, %v980
      %vm982 = vweird.f32 %v721
      %vm983 = vweird.f32 %v977
      %vm984 = vmor %vm982, %vm983
      %v985 = vsel %vm984, %v977, %v981
      %v986 = vand.u32 2147483647, %v721
      %vm987 = vcmp.eq.f32.partialorder %v986, 8.507059e+37
      %v988 = vand.u32 %v721, 2147483648
      %v989 = vor.u32 1.1754944e-38, %v988
      %v990 = vsel %vm987, %v989, %v985
      %v991 = vmul.f32 1.0, %v990
      %v992 = vrcp.pop %v722
      %v993 = vmul.f32 %v722, %v992
      %v994 = vsub.f32 1.0, %v993
      %v995 = vmul.f32 %v992, %v994
      %v996 = vadd.f32 %v992, %v995
      %vm997 = vweird.f32 %v722
      %vm998 = vweird.f32 %v992
      %vm999 = vmor %vm997, %vm998
      %v1000 = vsel %vm999, %v992, %v996
      %v1001 = vand.u32 2147483647, %v722
      %vm1002 = vcmp.eq.f32.partialorder %v1001, 8.507059e+37
      %v1003 = vand.u32 %v722, 2147483648
      %v1004 = vor.u32 1.1754944e-38, %v1003
      %v1005 = vsel %vm1002, %v1004, %v1000
      %v1006 = vmul.f32 1.0, %v1005
      %v1007 = vrcp.pop %v723
      %v1008 = vmul.f32 %v723, %v1007
      %v1009 = vsub.f32 1.0, %v1008
      %v1010 = vmul.f32 %v1007, %v1009
      %v1011 = vadd.f32 %v1007, %v1010
      %vm1012 = vweird.f32 %v723
      %vm1013 = vweird.f32 %v1007
      %vm1014 = vmor %vm1012, %vm1013
      %v1015 = vsel %vm1014, %v1007, %v1011
      %v1016 = vand.u32 2147483647, %v723
      %vm1017 = vcmp.eq.f32.partialorder %v1016, 8.507059e+37
      %v1018 = vand.u32 %v723, 2147483648
      %v1019 = vor.u32 1.1754944e-38, %v1018
      %v1020 = vsel %vm1017, %v1019, %v1015
      %v1021 = vmul.f32 1.0, %v1020
      %v1022 = vrcp.pop %v724
      %v1023 = vmul.f32 %v724, %v1022
      %v1024 = vsub.f32 1.0, %v1023
      %v1025 = vmul.f32 %v1022, %v1024
      %v1026 = vadd.f32 %v1022, %v1025
      %vm1027 = vweird.f32 %v724
      %vm1028 = vweird.f32 %v1022
      %vm1029 = vmor %vm1027, %vm1028
      %v1030 = vsel %vm1029, %v1022, %v1026
      %v1031 = vand.u32 2147483647, %v724
      %vm1032 = vcmp.eq.f32.partialorder %v1031, 8.507059e+37
      %v1033 = vand.u32 %v724, 2147483648
      %v1034 = vor.u32 1.1754944e-38, %v1033
      %v1035 = vsel %vm1032, %v1034, %v1030
      %v1036 = vmul.f32 1.0, %v1035
      %v1037 = vrcp.pop %v725
      %v1038 = vmul.f32 %v725, %v1037
      %v1039 = vsub.f32 1.0, %v1038
      %v1040 = vmul.f32 %v1037, %v1039
      %v1041 = vadd.f32 %v1037, %v1040
      %vm1042 = vweird.f32 %v725
      %vm1043 = vweird.f32 %v1037
      %vm1044 = vmor %vm1042, %vm1043
      %v1045 = vsel %vm1044, %v1037, %v1041
      %v1046 = vand.u32 2147483647, %v725
      %vm1047 = vcmp.eq.f32.partialorder %v1046, 8.507059e+37
      %v1048 = vand.u32 %v725, 2147483648
      %v1049 = vor.u32 1.1754944e-38, %v1048
      %v1050 = vsel %vm1047, %v1049, %v1045
      %v1051 = vmul.f32 1.0, %v1050
      %v1052 = vrcp.pop %v726
      %v1053 = vmul.f32 %v726, %v1052
      %v1054 = vsub.f32 1.0, %v1053
      %v1055 = vmul.f32 %v1052, %v1054
      %v1056 = vadd.f32 %v1052, %v1055
      %vm1057 = vweird.f32 %v726
      %vm1058 = vweird.f32 %v1052
      %vm1059 = vmor %vm1057, %vm1058
      %v1060 = vsel %vm1059, %v1052, %v1056
      %v1061 = vand.u32 2147483647, %v726
      %vm1062 = vcmp.eq.f32.partialorder %v1061, 8.507059e+37
      %v1063 = vand.u32 %v726, 2147483648
      %v1064 = vor.u32 1.1754944e-38, %v1063
      %v1065 = vsel %vm1062, %v1064, %v1060
      %v1066 = vmul.f32 1.0, %v1065
      %v1067 = vrcp.pop %v727
      %v1068 = vmul.f32 %v727, %v1067
      %v1069 = vsub.f32 1.0, %v1068
      %v1070 = vmul.f32 %v1067, %v1069
      %v1071 = vadd.f32 %v1067, %v1070
      %vm1072 = vweird.f32 %v727
      %vm1073 = vweird.f32 %v1067
      %vm1074 = vmor %vm1072, %vm1073
      %v1075 = vsel %vm1074, %v1067, %v1071
      %v1076 = vand.u32 2147483647, %v727
      %vm1077 = vcmp.eq.f32.partialorder %v1076, 8.507059e+37
      %v1078 = vand.u32 %v727, 2147483648
      %v1079 = vor.u32 1.1754944e-38, %v1078
      %v1080 = vsel %vm1077, %v1079, %v1075
      %v1081 = vmul.f32 1.0, %v1080
      %v1082 = vrcp.pop %v728
      %v1083 = vmul.f32 %v728, %v1082
      %v1084 = vsub.f32 1.0, %v1083
      %v1085 = vmul.f32 %v1082, %v1084
      %v1086 = vadd.f32 %v1082, %v1085
      %vm1087 = vweird.f32 %v728
      %vm1088 = vweird.f32 %v1082
      %vm1089 = vmor %vm1087, %vm1088
      %v1090 = vsel %vm1089, %v1082, %v1086
      %v1091 = vand.u32 2147483647, %v728
      %vm1092 = vcmp.eq.f32.partialorder %v1091, 8.507059e+37
      %v1093 = vand.u32 %v728, 2147483648
      %v1094 = vor.u32 1.1754944e-38, %v1093
      %v1095 = vsel %vm1092, %v1094, %v1090
      %v1096 = vmul.f32 1.0, %v1095
      %v1097 = vrcp.pop %v729
      %v1098 = vmul.f32 %v729, %v1097
      %v1099 = vsub.f32 1.0, %v1098
      %v1100 = vmul.f32 %v1097, %v1099
      %v1101 = vadd.f32 %v1097, %v1100
      %vm1102 = vweird.f32 %v729
      %vm1103 = vweird.f32 %v1097
      %vm1104 = vmor %vm1102, %vm1103
      %v1105 = vsel %vm1104, %v1097, %v1101
      %v1106 = vand.u32 2147483647, %v729
      %vm1107 = vcmp.eq.f32.partialorder %v1106, 8.507059e+37
      %v1108 = vand.u32 %v729, 2147483648
      %v1109 = vor.u32 1.1754944e-38, %v1108
      %v1110 = vsel %vm1107, %v1109, %v1105
      %v1111 = vmul.f32 1.0, %v1110
      %v1112 = vrcp.pop %v730
      %v1113 = vmul.f32 %v730, %v1112
      %v1114 = vsub.f32 1.0, %v1113
      %v1115 = vmul.f32 %v1112, %v1114
      %v1116 = vadd.f32 %v1112, %v1115
      %vm1117 = vweird.f32 %v730
      %vm1118 = vweird.f32 %v1112
      %vm1119 = vmor %vm1117, %vm1118
      %v1120 = vsel %vm1119, %v1112, %v1116
      %v1121 = vand.u32 2147483647, %v730
      %vm1122 = vcmp.eq.f32.partialorder %v1121, 8.507059e+37
      %v1123 = vand.u32 %v730, 2147483648
      %v1124 = vor.u32 1.1754944e-38, %v1123
      %v1125 = vsel %vm1122, %v1124, %v1120
      %v1126 = vmul.f32 1.0, %v1125
      %v1127 = vrcp.pop %v731
      %v1128 = vmul.f32 %v731, %v1127
      %v1129 = vsub.f32 1.0, %v1128
      %v1130 = vmul.f32 %v1127, %v1129
      %v1131 = vadd.f32 %v1127, %v1130
      %vm1132 = vweird.f32 %v731
      %vm1133 = vweird.f32 %v1127
      %vm1134 = vmor %vm1132, %vm1133
      %v1135 = vsel %vm1134, %v1127, %v1131
      %v1136 = vand.u32 2147483647, %v731
      %vm1137 = vcmp.eq.f32.partialorder %v1136, 8.507059e+37
      %v1138 = vand.u32 %v731, 2147483648
      %v1139 = vor.u32 1.1754944e-38, %v1138
      %v1140 = vsel %vm1137, %v1139, %v1135
      %v1141 = vmul.f32 1.0, %v1140
      %v1142 = vrcp.pop %v732
      %v1143 = vmul.f32 %v732, %v1142
      %v1144 = vsub.f32 1.0, %v1143
      %v1145 = vmul.f32 %v1142, %v1144
      %v1146 = vadd.f32 %v1142, %v1145
      %vm1147 = vweird.f32 %v732
      %vm1148 = vweird.f32 %v1142
      %vm1149 = vmor %vm1147, %vm1148
      %v1150 = vsel %vm1149, %v1142, %v1146
      %v1151 = vand.u32 2147483647, %v732
      %vm1152 = vcmp.eq.f32.partialorder %v1151, 8.507059e+37
      %v1153 = vand.u32 %v732, 2147483648
      %v1154 = vor.u32 1.1754944e-38, %v1153
      %v1155 = vsel %vm1152, %v1154, %v1150
      %v1156 = vmul.f32 1.0, %v1155
      %v1157 = vrcp.pop %v733
      %v1158 = vmul.f32 %v733, %v1157
      %v1159 = vsub.f32 1.0, %v1158
      %v1160 = vmul.f32 %v1157, %v1159
      %v1161 = vadd.f32 %v1157, %v1160
      %vm1162 = vweird.f32 %v733
      %vm1163 = vweird.f32 %v1157
      %vm1164 = vmor %vm1162, %vm1163
      %v1165 = vsel %vm1164, %v1157, %v1161
      %v1166 = vand.u32 2147483647, %v733
      %vm1167 = vcmp.eq.f32.partialorder %v1166, 8.507059e+37
      %v1168 = vand.u32 %v733, 2147483648
      %v1169 = vor.u32 1.1754944e-38, %v1168
      %v1170 = vsel %vm1167, %v1169, %v1165
      %v1171 = vmul.f32 1.0, %v1170
      %v1172 = vrcp.pop %v734
      %v1173 = vmul.f32 %v734, %v1172
      %v1174 = vsub.f32 1.0, %v1173
      %v1175 = vmul.f32 %v1172, %v1174
      %v1176 = vadd.f32 %v1172, %v1175
      %vm1177 = vweird.f32 %v734
      %vm1178 = vweird.f32 %v1172
      %vm1179 = vmor %vm1177, %vm1178
      %v1180 = vsel %vm1179, %v1172, %v1176
      %v1181 = vand.u32 2147483647, %v734
      %vm1182 = vcmp.eq.f32.partialorder %v1181, 8.507059e+37
      %v1183 = vand.u32 %v734, 2147483648
      %v1184 = vor.u32 1.1754944e-38, %v1183
      %v1185 = vsel %vm1182, %v1184, %v1180
      %v1186 = vmul.f32 1.0, %v1185
      %v1187 = vrcp.pop %v735
      %v1188 = vmul.f32 %v735, %v1187
      %v1189 = vsub.f32 1.0, %v1188
      %v1190 = vmul.f32 %v1187, %v1189
      %v1191 = vadd.f32 %v1187, %v1190
      %vm1192 = vweird.f32 %v735
      %vm1193 = vweird.f32 %v1187
      %vm1194 = vmor %vm1192, %vm1193
      %v1195 = vsel %vm1194, %v1187, %v1191
      %v1196 = vand.u32 2147483647, %v735
      %vm1197 = vcmp.eq.f32.partialorder %v1196, 8.507059e+37
      %v1198 = vand.u32 %v735, 2147483648
      %v1199 = vor.u32 1.1754944e-38, %v1198
      %v1200 = vsel %vm1197, %v1199, %v1195
      %v1201 = vmul.f32 1.0, %v1200
      %v1202 = vrcp.pop %v736
      %v1203 = vmul.f32 %v736, %v1202
      %v1204 = vsub.f32 1.0, %v1203
      %v1205 = vmul.f32 %v1202, %v1204
      %v1206 = vadd.f32 %v1202, %v1205
      %vm1207 = vweird.f32 %v736
      %vm1208 = vweird.f32 %v1202
      %vm1209 = vmor %vm1207, %vm1208
      %v1210 = vsel %vm1209, %v1202, %v1206
      %v1211 = vand.u32 2147483647, %v736
      %vm1212 = vcmp.eq.f32.partialorder %v1211, 8.507059e+37
      %v1213 = vand.u32 %v736, 2147483648
      %v1214 = vor.u32 1.1754944e-38, %v1213
      %v1215 = vsel %vm1212, %v1214, %v1210
      %v1216 = vmul.f32 1.0, %v1215
      %v1217 = vmul.f32 %v514, %v751
      %v1218 = vmul.f32 %v517, %v766
      %v1219 = vmul.f32 %v520, %v781
      %v1220 = vmul.f32 %v523, %v796
      %v1221 = vmul.f32 %v526, %v811
      %v1222 = vmul.f32 %v529, %v826
      %v1223 = vmul.f32 %v532, %v841
      %v1224 = vmul.f32 %v535, %v856
      %v1225 = vmul.f32 %v538, %v871
      %v1226 = vmul.f32 %v541, %v886
      %v1227 = vmul.f32 %v544, %v901
      %v1228 = vmul.f32 %v547, %v916
      %v1229 = vmul.f32 %v550, %v931
      %v1230 = vmul.f32 %v553, %v946
      %v1231 = vmul.f32 %v556, %v961
      %v1232 = vmul.f32 %v559, %v976
      %v1233 = vmul.f32 %v562, %v991
      %v1234 = vmul.f32 %v565, %v1006
      %v1235 = vmul.f32 %v568, %v1021
      %v1236 = vmul.f32 %v571, %v1036
      %v1237 = vmul.f32 %v574, %v1051
      %v1238 = vmul.f32 %v577, %v1066
      %v1239 = vmul.f32 %v580, %v1081
      %v1240 = vmul.f32 %v583, %v1096
      %v1241 = vmul.f32 %v586, %v1111
      %v1242 = vmul.f32 %v589, %v1126
      %v1243 = vmul.f32 %v592, %v1141
      %v1244 = vmul.f32 %v595, %v1156
      %v1245 = vmul.f32 %v598, %v1171
      %v1246 = vmul.f32 %v601, %v1186
      %v1247 = vmul.f32 %v604, %v1201
      %v1248 = vmul.f32 %v607, %v1216
      %v1249 = vld [vmem:[%s350] sm:$0xff]
      %v1250 = vld [vmem:[%s350 + $0x8] sm:$0xff]
      %v1251 = vld [vmem:[%s350 + $0x10] sm:$0xff]
      %v1252 = vld [vmem:[%s350 + $0x18] sm:$0xff]
      %v1253 = vld [vmem:[%s350 + $0x20] sm:$0xff]
      %v1254 = vld [vmem:[%s350 + $0x28] sm:$0xff]
      %v1255 = vld [vmem:[%s350 + $0x30] sm:$0xff]
      %v1256 = vld [vmem:[%s350 + $0x38] sm:$0xff]
      %v1257 = vld [vmem:[%s350 + $0x40] sm:$0xff]
      %v1258 = vld [vmem:[%s350 + $0x48] sm:$0xff]
      %v1259 = vld [vmem:[%s350 + $0x50] sm:$0xff]
      %v1260 = vld [vmem:[%s350 + $0x58] sm:$0xff]
      %v1261 = vld [vmem:[%s350 + $0x60] sm:$0xff]
      %v1262 = vld [vmem:[%s350 + $0x68] sm:$0xff]
      %v1263 = vld [vmem:[%s350 + $0x70] sm:$0xff]
      %v1264 = vld [vmem:[%s350 + $0x78] sm:$0xff]
      %v1265 = vld [vmem:[%s350 + $0x80] sm:$0xff]
      %v1266 = vld [vmem:[%s350 + $0x88] sm:$0xff]
      %v1267 = vld [vmem:[%s350 + $0x90] sm:$0xff]
      %v1268 = vld [vmem:[%s350 + $0x98] sm:$0xff]
      %v1269 = vld [vmem:[%s350 + $0xa0] sm:$0xff]
      %v1270 = vld [vmem:[%s350 + $0xa8] sm:$0xff]
      %v1271 = vld [vmem:[%s350 + $0xb0] sm:$0xff]
      %v1272 = vld [vmem:[%s350 + $0xb8] sm:$0xff]
      %v1273 = vld [vmem:[%s350 + $0xc0] sm:$0xff]
      %v1274 = vld [vmem:[%s350 + $0xc8] sm:$0xff]
      %v1275 = vld [vmem:[%s350 + $0xd0] sm:$0xff]
      %v1276 = vld [vmem:[%s350 + $0xd8] sm:$0xff]
      %v1277 = vld [vmem:[%s350 + $0xe0] sm:$0xff]
      %v1278 = vld [vmem:[%s350 + $0xe8] sm:$0xff]
      %v1279 = vld [vmem:[%s350 + $0xf0] sm:$0xff]
      %v1280 = vld [vmem:[%s350 + $0xf8] sm:$0xff]
      %v1281 = vld [vmem:[%s4] sm:$0x1]
      %v1283 = vperm.slane %v1281, 0
      %v1285 = vmul.f32 %v1249, %v1283
      %v1286 = vmul.f32 %v1250, %v1283
      %v1287 = vmul.f32 %v1251, %v1283
      %v1288 = vmul.f32 %v1252, %v1283
      %v1289 = vmul.f32 %v1253, %v1283
      %v1290 = vmul.f32 %v1254, %v1283
      %v1291 = vmul.f32 %v1255, %v1283
      %v1292 = vmul.f32 %v1256, %v1283
      %v1293 = vmul.f32 %v1257, %v1283
      %v1294 = vmul.f32 %v1258, %v1283
      %v1295 = vmul.f32 %v1259, %v1283
      %v1296 = vmul.f32 %v1260, %v1283
      %v1297 = vmul.f32 %v1261, %v1283
      %v1298 = vmul.f32 %v1262, %v1283
      %v1299 = vmul.f32 %v1263, %v1283
      %v1300 = vmul.f32 %v1264, %v1283
      %v1301 = vmul.f32 %v1265, %v1283
      %v1302 = vmul.f32 %v1266, %v1283
      %v1303 = vmul.f32 %v1267, %v1283
      %v1304 = vmul.f32 %v1268, %v1283
      %v1305 = vmul.f32 %v1269, %v1283
      %v1306 = vmul.f32 %v1270, %v1283
      %v1307 = vmul.f32 %v1271, %v1283
      %v1308 = vmul.f32 %v1272, %v1283
      %v1309 = vmul.f32 %v1273, %v1283
      %v1310 = vmul.f32 %v1274, %v1283
      %v1311 = vmul.f32 %v1275, %v1283
      %v1312 = vmul.f32 %v1276, %v1283
      %v1313 = vmul.f32 %v1277, %v1283
      %v1314 = vmul.f32 %v1278, %v1283
      %v1315 = vmul.f32 %v1279, %v1283
      %v1316 = vmul.f32 %v1280, %v1283
      %v1317 = vld [vmem:[%s5] sm:$0x1]
      %v1319 = vperm.slane %v1317, 0
      %v1321 = vadd.f32 %v1285, %v1319
      %v1322 = vadd.f32 %v1286, %v1319
      %v1323 = vadd.f32 %v1287, %v1319
      %v1324 = vadd.f32 %v1288, %v1319
      %v1325 = vadd.f32 %v1289, %v1319
      %v1326 = vadd.f32 %v1290, %v1319
      %v1327 = vadd.f32 %v1291, %v1319
      %v1328 = vadd.f32 %v1292, %v1319
      %v1329 = vadd.f32 %v1293, %v1319
      %v1330 = vadd.f32 %v1294, %v1319
      %v1331 = vadd.f32 %v1295, %v1319
      %v1332 = vadd.f32 %v1296, %v1319
      %v1333 = vadd.f32 %v1297, %v1319
      %v1334 = vadd.f32 %v1298, %v1319
      %v1335 = vadd.f32 %v1299, %v1319
      %v1336 = vadd.f32 %v1300, %v1319
      %v1337 = vadd.f32 %v1301, %v1319
      %v1338 = vadd.f32 %v1302, %v1319
      %v1339 = vadd.f32 %v1303, %v1319
      %v1340 = vadd.f32 %v1304, %v1319
      %v1341 = vadd.f32 %v1305, %v1319
      %v1342 = vadd.f32 %v1306, %v1319
      %v1343 = vadd.f32 %v1307, %v1319
      %v1344 = vadd.f32 %v1308, %v1319
      %v1345 = vadd.f32 %v1309, %v1319
      %v1346 = vadd.f32 %v1310, %v1319
      %v1347 = vadd.f32 %v1311, %v1319
      %v1348 = vadd.f32 %v1312, %v1319
      %v1349 = vadd.f32 %v1313, %v1319
      %v1350 = vadd.f32 %v1314, %v1319
      %v1351 = vadd.f32 %v1315, %v1319
      %v1352 = vadd.f32 %v1316, %v1319
      %v1353 = vxor.u32 %v1321, 2147483648
      %v1354 = vxor.u32 %v1322, 2147483648
      %v1355 = vxor.u32 %v1323, 2147483648
      %v1356 = vxor.u32 %v1324, 2147483648
      %v1357 = vxor.u32 %v1325, 2147483648
      %v1358 = vxor.u32 %v1326, 2147483648
      %v1359 = vxor.u32 %v1327, 2147483648
      %v1360 = vxor.u32 %v1328, 2147483648
      %v1361 = vxor.u32 %v1329, 2147483648
      %v1362 = vxor.u32 %v1330, 2147483648
      %v1363 = vxor.u32 %v1331, 2147483648
      %v1364 = vxor.u32 %v1332, 2147483648
      %v1365 = vxor.u32 %v1333, 2147483648
      %v1366 = vxor.u32 %v1334, 2147483648
      %v1367 = vxor.u32 %v1335, 2147483648
      %v1368 = vxor.u32 %v1336, 2147483648
      %v1369 = vxor.u32 %v1337, 2147483648
      %v1370 = vxor.u32 %v1338, 2147483648
      %v1371 = vxor.u32 %v1339, 2147483648
      %v1372 = vxor.u32 %v1340, 2147483648
      %v1373 = vxor.u32 %v1341, 2147483648
      %v1374 = vxor.u32 %v1342, 2147483648
      %v1375 = vxor.u32 %v1343, 2147483648
      %v1376 = vxor.u32 %v1344, 2147483648
      %v1377 = vxor.u32 %v1345, 2147483648
      %v1378 = vxor.u32 %v1346, 2147483648
      %v1379 = vxor.u32 %v1347, 2147483648
      %v1380 = vxor.u32 %v1348, 2147483648
      %v1381 = vxor.u32 %v1349, 2147483648
      %v1382 = vxor.u32 %v1350, 2147483648
      %v1383 = vxor.u32 %v1351, 2147483648
      %v1384 = vxor.u32 %v1352, 2147483648
      %v1385 = vmul.f32 %v1353, 1.442695
      %v1386 = vpow.pop %v1385
      %v1387 = vmul.f32 %v1354, 1.442695
      %v1388 = vpow.pop %v1387
      %v1389 = vmul.f32 %v1355, 1.442695
      %v1390 = vpow.pop %v1389
      %v1391 = vmul.f32 %v1356, 1.442695
      %v1392 = vpow.pop %v1391
      %v1393 = vmul.f32 %v1357, 1.442695
      %v1394 = vpow.pop %v1393
      %v1395 = vmul.f32 %v1358, 1.442695
      %v1396 = vpow.pop %v1395
      %v1397 = vmul.f32 %v1359, 1.442695
      %v1398 = vpow.pop %v1397
      %v1399 = vmul.f32 %v1360, 1.442695
      %v1400 = vpow.pop %v1399
      %v1401 = vmul.f32 %v1361, 1.442695
      %v1402 = vpow.pop %v1401
      %v1403 = vmul.f32 %v1362, 1.442695
      %v1404 = vpow.pop %v1403
      %v1405 = vmul.f32 %v1363, 1.442695
      %v1406 = vpow.pop %v1405
      %v1407 = vmul.f32 %v1364, 1.442695
      %v1408 = vpow.pop %v1407
      %v1409 = vmul.f32 %v1365, 1.442695
      %v1410 = vpow.pop %v1409
      %v1411 = vmul.f32 %v1366, 1.442695
      %v1412 = vpow.pop %v1411
      %v1413 = vmul.f32 %v1367, 1.442695
      %v1414 = vpow.pop %v1413
      %v1415 = vmul.f32 %v1368, 1.442695
      %v1416 = vpow.pop %v1415
      %v1417 = vmul.f32 %v1369, 1.442695
      %v1418 = vpow.pop %v1417
      %v1419 = vmul.f32 %v1370, 1.442695
      %v1420 = vpow.pop %v1419
      %v1421 = vmul.f32 %v1371, 1.442695
      %v1422 = vpow.pop %v1421
      %v1423 = vmul.f32 %v1372, 1.442695
      %v1424 = vpow.pop %v1423
      %v1425 = vmul.f32 %v1373, 1.442695
      %v1426 = vpow.pop %v1425
      %v1427 = vmul.f32 %v1374, 1.442695
      %v1428 = vpow.pop %v1427
      %v1429 = vmul.f32 %v1375, 1.442695
      %v1430 = vpow.pop %v1429
      %v1431 = vmul.f32 %v1376, 1.442695
      %v1432 = vpow.pop %v1431
      %v1433 = vmul.f32 %v1377, 1.442695
      %v1434 = vpow.pop %v1433
      %v1435 = vmul.f32 %v1378, 1.442695
      %v1436 = vpow.pop %v1435
      %v1437 = vmul.f32 %v1379, 1.442695
      %v1438 = vpow.pop %v1437
      %v1439 = vmul.f32 %v1380, 1.442695
      %v1440 = vpow.pop %v1439
      %v1441 = vmul.f32 %v1381, 1.442695
      %v1442 = vpow.pop %v1441
      %v1443 = vmul.f32 %v1382, 1.442695
      %v1444 = vpow.pop %v1443
      %v1445 = vmul.f32 %v1383, 1.442695
      %v1446 = vpow.pop %v1445
      %v1447 = vmul.f32 %v1384, 1.442695
      %v1448 = vpow.pop %v1447
      %v1449 = vadd.f32 %v1386, 1.0
      %v1450 = vadd.f32 %v1388, 1.0
      %v1451 = vadd.f32 %v1390, 1.0
      %v1452 = vadd.f32 %v1392, 1.0
      %v1453 = vadd.f32 %v1394, 1.0
      %v1454 = vadd.f32 %v1396, 1.0
      %v1455 = vadd.f32 %v1398, 1.0
      %v1456 = vadd.f32 %v1400, 1.0
      %v1457 = vadd.f32 %v1402, 1.0
      %v1458 = vadd.f32 %v1404, 1.0
      %v1459 = vadd.f32 %v1406, 1.0
      %v1460 = vadd.f32 %v1408, 1.0
      %v1461 = vadd.f32 %v1410, 1.0
      %v1462 = vadd.f32 %v1412, 1.0
      %v1463 = vadd.f32 %v1414, 1.0
      %v1464 = vadd.f32 %v1416, 1.0
      %v1465 = vadd.f32 %v1418, 1.0
      %v1466 = vadd.f32 %v1420, 1.0
      %v1467 = vadd.f32 %v1422, 1.0
      %v1468 = vadd.f32 %v1424, 1.0
      %v1469 = vadd.f32 %v1426, 1.0
      %v1470 = vadd.f32 %v1428, 1.0
      %v1471 = vadd.f32 %v1430, 1.0
      %v1472 = vadd.f32 %v1432, 1.0
      %v1473 = vadd.f32 %v1434, 1.0
      %v1474 = vadd.f32 %v1436, 1.0
      %v1475 = vadd.f32 %v1438, 1.0
      %v1476 = vadd.f32 %v1440, 1.0
      %v1477 = vadd.f32 %v1442, 1.0
      %v1478 = vadd.f32 %v1444, 1.0
      %v1479 = vadd.f32 %v1446, 1.0
      %v1480 = vadd.f32 %v1448, 1.0
      %v1481 = vrcp.pop %v1449
      %v1482 = vmul.f32 %v1449, %v1481
      %v1483 = vsub.f32 1.0, %v1482
      %v1484 = vmul.f32 %v1481, %v1483
      %v1485 = vadd.f32 %v1481, %v1484
      %vm1486 = vweird.f32 %v1449
      %vm1487 = vweird.f32 %v1481
      %vm1488 = vmor %vm1486, %vm1487
      %v1489 = vsel %vm1488, %v1481, %v1485
      %v1490 = vand.u32 2147483647, %v1449
      %vm1491 = vcmp.eq.f32.partialorder %v1490, 8.507059e+37
      %v1492 = vand.u32 %v1449, 2147483648
      %v1493 = vor.u32 1.1754944e-38, %v1492
      %v1494 = vsel %vm1491, %v1493, %v1489
      %v1495 = vmul.f32 1.0, %v1494
      %v1496 = vrcp.pop %v1450
      %v1497 = vmul.f32 %v1450, %v1496
      %v1498 = vsub.f32 1.0, %v1497
      %v1499 = vmul.f32 %v1496, %v1498
      %v1500 = vadd.f32 %v1496, %v1499
      %vm1501 = vweird.f32 %v1450
      %vm1502 = vweird.f32 %v1496
      %vm1503 = vmor %vm1501, %vm1502
      %v1504 = vsel %vm1503, %v1496, %v1500
      %v1505 = vand.u32 2147483647, %v1450
      %vm1506 = vcmp.eq.f32.partialorder %v1505, 8.507059e+37
      %v1507 = vand.u32 %v1450, 2147483648
      %v1508 = vor.u32 1.1754944e-38, %v1507
      %v1509 = vsel %vm1506, %v1508, %v1504
      %v1510 = vmul.f32 1.0, %v1509
      %v1511 = vrcp.pop %v1451
      %v1512 = vmul.f32 %v1451, %v1511
      %v1513 = vsub.f32 1.0, %v1512
      %v1514 = vmul.f32 %v1511, %v1513
      %v1515 = vadd.f32 %v1511, %v1514
      %vm1516 = vweird.f32 %v1451
      %vm1517 = vweird.f32 %v1511
      %vm1518 = vmor %vm1516, %vm1517
      %v1519 = vsel %vm1518, %v1511, %v1515
      %v1520 = vand.u32 2147483647, %v1451
      %vm1521 = vcmp.eq.f32.partialorder %v1520, 8.507059e+37
      %v1522 = vand.u32 %v1451, 2147483648
      %v1523 = vor.u32 1.1754944e-38, %v1522
      %v1524 = vsel %vm1521, %v1523, %v1519
      %v1525 = vmul.f32 1.0, %v1524
      %v1526 = vrcp.pop %v1452
      %v1527 = vmul.f32 %v1452, %v1526
      %v1528 = vsub.f32 1.0, %v1527
      %v1529 = vmul.f32 %v1526, %v1528
      %v1530 = vadd.f32 %v1526, %v1529
      %vm1531 = vweird.f32 %v1452
      %vm1532 = vweird.f32 %v1526
      %vm1533 = vmor %vm1531, %vm1532
      %v1534 = vsel %vm1533, %v1526, %v1530
      %v1535 = vand.u32 2147483647, %v1452
      %vm1536 = vcmp.eq.f32.partialorder %v1535, 8.507059e+37
      %v1537 = vand.u32 %v1452, 2147483648
      %v1538 = vor.u32 1.1754944e-38, %v1537
      %v1539 = vsel %vm1536, %v1538, %v1534
      %v1540 = vmul.f32 1.0, %v1539
      %v1541 = vrcp.pop %v1453
      %v1542 = vmul.f32 %v1453, %v1541
      %v1543 = vsub.f32 1.0, %v1542
      %v1544 = vmul.f32 %v1541, %v1543
      %v1545 = vadd.f32 %v1541, %v1544
      %vm1546 = vweird.f32 %v1453
      %vm1547 = vweird.f32 %v1541
      %vm1548 = vmor %vm1546, %vm1547
      %v1549 = vsel %vm1548, %v1541, %v1545
      %v1550 = vand.u32 2147483647, %v1453
      %vm1551 = vcmp.eq.f32.partialorder %v1550, 8.507059e+37
      %v1552 = vand.u32 %v1453, 2147483648
      %v1553 = vor.u32 1.1754944e-38, %v1552
      %v1554 = vsel %vm1551, %v1553, %v1549
      %v1555 = vmul.f32 1.0, %v1554
      %v1556 = vrcp.pop %v1454
      %v1557 = vmul.f32 %v1454, %v1556
      %v1558 = vsub.f32 1.0, %v1557
      %v1559 = vmul.f32 %v1556, %v1558
      %v1560 = vadd.f32 %v1556, %v1559
      %vm1561 = vweird.f32 %v1454
      %vm1562 = vweird.f32 %v1556
      %vm1563 = vmor %vm1561, %vm1562
      %v1564 = vsel %vm1563, %v1556, %v1560
      %v1565 = vand.u32 2147483647, %v1454
      %vm1566 = vcmp.eq.f32.partialorder %v1565, 8.507059e+37
      %v1567 = vand.u32 %v1454, 2147483648
      %v1568 = vor.u32 1.1754944e-38, %v1567
      %v1569 = vsel %vm1566, %v1568, %v1564
      %v1570 = vmul.f32 1.0, %v1569
      %v1571 = vrcp.pop %v1455
      %v1572 = vmul.f32 %v1455, %v1571
      %v1573 = vsub.f32 1.0, %v1572
      %v1574 = vmul.f32 %v1571, %v1573
      %v1575 = vadd.f32 %v1571, %v1574
      %vm1576 = vweird.f32 %v1455
      %vm1577 = vweird.f32 %v1571
      %vm1578 = vmor %vm1576, %vm1577
      %v1579 = vsel %vm1578, %v1571, %v1575
      %v1580 = vand.u32 2147483647, %v1455
      %vm1581 = vcmp.eq.f32.partialorder %v1580, 8.507059e+37
      %v1582 = vand.u32 %v1455, 2147483648
      %v1583 = vor.u32 1.1754944e-38, %v1582
      %v1584 = vsel %vm1581, %v1583, %v1579
      %v1585 = vmul.f32 1.0, %v1584
      %v1586 = vrcp.pop %v1456
      %v1587 = vmul.f32 %v1456, %v1586
      %v1588 = vsub.f32 1.0, %v1587
      %v1589 = vmul.f32 %v1586, %v1588
      %v1590 = vadd.f32 %v1586, %v1589
      %vm1591 = vweird.f32 %v1456
      %vm1592 = vweird.f32 %v1586
      %vm1593 = vmor %vm1591, %vm1592
      %v1594 = vsel %vm1593, %v1586, %v1590
      %v1595 = vand.u32 2147483647, %v1456
      %vm1596 = vcmp.eq.f32.partialorder %v1595, 8.507059e+37
      %v1597 = vand.u32 %v1456, 2147483648
      %v1598 = vor.u32 1.1754944e-38, %v1597
      %v1599 = vsel %vm1596, %v1598, %v1594
      %v1600 = vmul.f32 1.0, %v1599
      %v1601 = vrcp.pop %v1457
      %v1602 = vmul.f32 %v1457, %v1601
      %v1603 = vsub.f32 1.0, %v1602
      %v1604 = vmul.f32 %v1601, %v1603
      %v1605 = vadd.f32 %v1601, %v1604
      %vm1606 = vweird.f32 %v1457
      %vm1607 = vweird.f32 %v1601
      %vm1608 = vmor %vm1606, %vm1607
      %v1609 = vsel %vm1608, %v1601, %v1605
      %v1610 = vand.u32 2147483647, %v1457
      %vm1611 = vcmp.eq.f32.partialorder %v1610, 8.507059e+37
      %v1612 = vand.u32 %v1457, 2147483648
      %v1613 = vor.u32 1.1754944e-38, %v1612
      %v1614 = vsel %vm1611, %v1613, %v1609
      %v1615 = vmul.f32 1.0, %v1614
      %v1616 = vrcp.pop %v1458
      %v1617 = vmul.f32 %v1458, %v1616
      %v1618 = vsub.f32 1.0, %v1617
      %v1619 = vmul.f32 %v1616, %v1618
      %v1620 = vadd.f32 %v1616, %v1619
      %vm1621 = vweird.f32 %v1458
      %vm1622 = vweird.f32 %v1616
      %vm1623 = vmor %vm1621, %vm1622
      %v1624 = vsel %vm1623, %v1616, %v1620
      %v1625 = vand.u32 2147483647, %v1458
      %vm1626 = vcmp.eq.f32.partialorder %v1625, 8.507059e+37
      %v1627 = vand.u32 %v1458, 2147483648
      %v1628 = vor.u32 1.1754944e-38, %v1627
      %v1629 = vsel %vm1626, %v1628, %v1624
      %v1630 = vmul.f32 1.0, %v1629
      %v1631 = vrcp.pop %v1459
      %v1632 = vmul.f32 %v1459, %v1631
      %v1633 = vsub.f32 1.0, %v1632
      %v1634 = vmul.f32 %v1631, %v1633
      %v1635 = vadd.f32 %v1631, %v1634
      %vm1636 = vweird.f32 %v1459
      %vm1637 = vweird.f32 %v1631
      %vm1638 = vmor %vm1636, %vm1637
      %v1639 = vsel %vm1638, %v1631, %v1635
      %v1640 = vand.u32 2147483647, %v1459
      %vm1641 = vcmp.eq.f32.partialorder %v1640, 8.507059e+37
      %v1642 = vand.u32 %v1459, 2147483648
      %v1643 = vor.u32 1.1754944e-38, %v1642
      %v1644 = vsel %vm1641, %v1643, %v1639
      %v1645 = vmul.f32 1.0, %v1644
      %v1646 = vrcp.pop %v1460
      %v1647 = vmul.f32 %v1460, %v1646
      %v1648 = vsub.f32 1.0, %v1647
      %v1649 = vmul.f32 %v1646, %v1648
      %v1650 = vadd.f32 %v1646, %v1649
      %vm1651 = vweird.f32 %v1460
      %vm1652 = vweird.f32 %v1646
      %vm1653 = vmor %vm1651, %vm1652
      %v1654 = vsel %vm1653, %v1646, %v1650
      %v1655 = vand.u32 2147483647, %v1460
      %vm1656 = vcmp.eq.f32.partialorder %v1655, 8.507059e+37
      %v1657 = vand.u32 %v1460, 2147483648
      %v1658 = vor.u32 1.1754944e-38, %v1657
      %v1659 = vsel %vm1656, %v1658, %v1654
      %v1660 = vmul.f32 1.0, %v1659
      %v1661 = vrcp.pop %v1461
      %v1662 = vmul.f32 %v1461, %v1661
      %v1663 = vsub.f32 1.0, %v1662
      %v1664 = vmul.f32 %v1661, %v1663
      %v1665 = vadd.f32 %v1661, %v1664
      %vm1666 = vweird.f32 %v1461
      %vm1667 = vweird.f32 %v1661
      %vm1668 = vmor %vm1666, %vm1667
      %v1669 = vsel %vm1668, %v1661, %v1665
      %v1670 = vand.u32 2147483647, %v1461
      %vm1671 = vcmp.eq.f32.partialorder %v1670, 8.507059e+37
      %v1672 = vand.u32 %v1461, 2147483648
      %v1673 = vor.u32 1.1754944e-38, %v1672
      %v1674 = vsel %vm1671, %v1673, %v1669
      %v1675 = vmul.f32 1.0, %v1674
      %v1676 = vrcp.pop %v1462
      %v1677 = vmul.f32 %v1462, %v1676
      %v1678 = vsub.f32 1.0, %v1677
      %v1679 = vmul.f32 %v1676, %v1678
      %v1680 = vadd.f32 %v1676, %v1679
      %vm1681 = vweird.f32 %v1462
      %vm1682 = vweird.f32 %v1676
      %vm1683 = vmor %vm1681, %vm1682
      %v1684 = vsel %vm1683, %v1676, %v1680
      %v1685 = vand.u32 2147483647, %v1462
      %vm1686 = vcmp.eq.f32.partialorder %v1685, 8.507059e+37
      %v1687 = vand.u32 %v1462, 2147483648
      %v1688 = vor.u32 1.1754944e-38, %v1687
      %v1689 = vsel %vm1686, %v1688, %v1684
      %v1690 = vmul.f32 1.0, %v1689
      %v1691 = vrcp.pop %v1463
      %v1692 = vmul.f32 %v1463, %v1691
      %v1693 = vsub.f32 1.0, %v1692
      %v1694 = vmul.f32 %v1691, %v1693
      %v1695 = vadd.f32 %v1691, %v1694
      %vm1696 = vweird.f32 %v1463
      %vm1697 = vweird.f32 %v1691
      %vm1698 = vmor %vm1696, %vm1697
      %v1699 = vsel %vm1698, %v1691, %v1695
      %v1700 = vand.u32 2147483647, %v1463
      %vm1701 = vcmp.eq.f32.partialorder %v1700, 8.507059e+37
      %v1702 = vand.u32 %v1463, 2147483648
      %v1703 = vor.u32 1.1754944e-38, %v1702
      %v1704 = vsel %vm1701, %v1703, %v1699
      %v1705 = vmul.f32 1.0, %v1704
      %v1706 = vrcp.pop %v1464
      %v1707 = vmul.f32 %v1464, %v1706
      %v1708 = vsub.f32 1.0, %v1707
      %v1709 = vmul.f32 %v1706, %v1708
      %v1710 = vadd.f32 %v1706, %v1709
      %vm1711 = vweird.f32 %v1464
      %vm1712 = vweird.f32 %v1706
      %vm1713 = vmor %vm1711, %vm1712
      %v1714 = vsel %vm1713, %v1706, %v1710
      %v1715 = vand.u32 2147483647, %v1464
      %vm1716 = vcmp.eq.f32.partialorder %v1715, 8.507059e+37
      %v1717 = vand.u32 %v1464, 2147483648
      %v1718 = vor.u32 1.1754944e-38, %v1717
      %v1719 = vsel %vm1716, %v1718, %v1714
      %v1720 = vmul.f32 1.0, %v1719
      %v1721 = vrcp.pop %v1465
      %v1722 = vmul.f32 %v1465, %v1721
      %v1723 = vsub.f32 1.0, %v1722
      %v1724 = vmul.f32 %v1721, %v1723
      %v1725 = vadd.f32 %v1721, %v1724
      %vm1726 = vweird.f32 %v1465
      %vm1727 = vweird.f32 %v1721
      %vm1728 = vmor %vm1726, %vm1727
      %v1729 = vsel %vm1728, %v1721, %v1725
      %v1730 = vand.u32 2147483647, %v1465
      %vm1731 = vcmp.eq.f32.partialorder %v1730, 8.507059e+37
      %v1732 = vand.u32 %v1465, 2147483648
      %v1733 = vor.u32 1.1754944e-38, %v1732
      %v1734 = vsel %vm1731, %v1733, %v1729
      %v1735 = vmul.f32 1.0, %v1734
      %v1736 = vrcp.pop %v1466
      %v1737 = vmul.f32 %v1466, %v1736
      %v1738 = vsub.f32 1.0, %v1737
      %v1739 = vmul.f32 %v1736, %v1738
      %v1740 = vadd.f32 %v1736, %v1739
      %vm1741 = vweird.f32 %v1466
      %vm1742 = vweird.f32 %v1736
      %vm1743 = vmor %vm1741, %vm1742
      %v1744 = vsel %vm1743, %v1736, %v1740
      %v1745 = vand.u32 2147483647, %v1466
      %vm1746 = vcmp.eq.f32.partialorder %v1745, 8.507059e+37
      %v1747 = vand.u32 %v1466, 2147483648
      %v1748 = vor.u32 1.1754944e-38, %v1747
      %v1749 = vsel %vm1746, %v1748, %v1744
      %v1750 = vmul.f32 1.0, %v1749
      %v1751 = vrcp.pop %v1467
      %v1752 = vmul.f32 %v1467, %v1751
      %v1753 = vsub.f32 1.0, %v1752
      %v1754 = vmul.f32 %v1751, %v1753
      %v1755 = vadd.f32 %v1751, %v1754
      %vm1756 = vweird.f32 %v1467
      %vm1757 = vweird.f32 %v1751
      %vm1758 = vmor %vm1756, %vm1757
      %v1759 = vsel %vm1758, %v1751, %v1755
      %v1760 = vand.u32 2147483647, %v1467
      %vm1761 = vcmp.eq.f32.partialorder %v1760, 8.507059e+37
      %v1762 = vand.u32 %v1467, 2147483648
      %v1763 = vor.u32 1.1754944e-38, %v1762
      %v1764 = vsel %vm1761, %v1763, %v1759
      %v1765 = vmul.f32 1.0, %v1764
      %v1766 = vrcp.pop %v1468
      %v1767 = vmul.f32 %v1468, %v1766
      %v1768 = vsub.f32 1.0, %v1767
      %v1769 = vmul.f32 %v1766, %v1768
      %v1770 = vadd.f32 %v1766, %v1769
      %vm1771 = vweird.f32 %v1468
      %vm1772 = vweird.f32 %v1766
      %vm1773 = vmor %vm1771, %vm1772
      %v1774 = vsel %vm1773, %v1766, %v1770
      %v1775 = vand.u32 2147483647, %v1468
      %vm1776 = vcmp.eq.f32.partialorder %v1775, 8.507059e+37
      %v1777 = vand.u32 %v1468, 2147483648
      %v1778 = vor.u32 1.1754944e-38, %v1777
      %v1779 = vsel %vm1776, %v1778, %v1774
      %v1780 = vmul.f32 1.0, %v1779
      %v1781 = vrcp.pop %v1469
      %v1782 = vmul.f32 %v1469, %v1781
      %v1783 = vsub.f32 1.0, %v1782
      %v1784 = vmul.f32 %v1781, %v1783
      %v1785 = vadd.f32 %v1781, %v1784
      %vm1786 = vweird.f32 %v1469
      %vm1787 = vweird.f32 %v1781
      %vm1788 = vmor %vm1786, %vm1787
      %v1789 = vsel %vm1788, %v1781, %v1785
      %v1790 = vand.u32 2147483647, %v1469
      %vm1791 = vcmp.eq.f32.partialorder %v1790, 8.507059e+37
      %v1792 = vand.u32 %v1469, 2147483648
      %v1793 = vor.u32 1.1754944e-38, %v1792
      %v1794 = vsel %vm1791, %v1793, %v1789
      %v1795 = vmul.f32 1.0, %v1794
      %v1796 = vrcp.pop %v1470
      %v1797 = vmul.f32 %v1470, %v1796
      %v1798 = vsub.f32 1.0, %v1797
      %v1799 = vmul.f32 %v1796, %v1798
      %v1800 = vadd.f32 %v1796, %v1799
      %vm1801 = vweird.f32 %v1470
      %vm1802 = vweird.f32 %v1796
      %vm1803 = vmor %vm1801, %vm1802
      %v1804 = vsel %vm1803, %v1796, %v1800
      %v1805 = vand.u32 2147483647, %v1470
      %vm1806 = vcmp.eq.f32.partialorder %v1805, 8.507059e+37
      %v1807 = vand.u32 %v1470, 2147483648
      %v1808 = vor.u32 1.1754944e-38, %v1807
      %v1809 = vsel %vm1806, %v1808, %v1804
      %v1810 = vmul.f32 1.0, %v1809
      %v1811 = vrcp.pop %v1471
      %v1812 = vmul.f32 %v1471, %v1811
      %v1813 = vsub.f32 1.0, %v1812
      %v1814 = vmul.f32 %v1811, %v1813
      %v1815 = vadd.f32 %v1811, %v1814
      %vm1816 = vweird.f32 %v1471
      %vm1817 = vweird.f32 %v1811
      %vm1818 = vmor %vm1816, %vm1817
      %v1819 = vsel %vm1818, %v1811, %v1815
      %v1820 = vand.u32 2147483647, %v1471
      %vm1821 = vcmp.eq.f32.partialorder %v1820, 8.507059e+37
      %v1822 = vand.u32 %v1471, 2147483648
      %v1823 = vor.u32 1.1754944e-38, %v1822
      %v1824 = vsel %vm1821, %v1823, %v1819
      %v1825 = vmul.f32 1.0, %v1824
      %v1826 = vrcp.pop %v1472
      %v1827 = vmul.f32 %v1472, %v1826
      %v1828 = vsub.f32 1.0, %v1827
      %v1829 = vmul.f32 %v1826, %v1828
      %v1830 = vadd.f32 %v1826, %v1829
      %vm1831 = vweird.f32 %v1472
      %vm1832 = vweird.f32 %v1826
      %vm1833 = vmor %vm1831, %vm1832
      %v1834 = vsel %vm1833, %v1826, %v1830
      %v1835 = vand.u32 2147483647, %v1472
      %vm1836 = vcmp.eq.f32.partialorder %v1835, 8.507059e+37
      %v1837 = vand.u32 %v1472, 2147483648
      %v1838 = vor.u32 1.1754944e-38, %v1837
      %v1839 = vsel %vm1836, %v1838, %v1834
      %v1840 = vmul.f32 1.0, %v1839
      %v1841 = vrcp.pop %v1473
      %v1842 = vmul.f32 %v1473, %v1841
      %v1843 = vsub.f32 1.0, %v1842
      %v1844 = vmul.f32 %v1841, %v1843
      %v1845 = vadd.f32 %v1841, %v1844
      %vm1846 = vweird.f32 %v1473
      %vm1847 = vweird.f32 %v1841
      %vm1848 = vmor %vm1846, %vm1847
      %v1849 = vsel %vm1848, %v1841, %v1845
      %v1850 = vand.u32 2147483647, %v1473
      %vm1851 = vcmp.eq.f32.partialorder %v1850, 8.507059e+37
      %v1852 = vand.u32 %v1473, 2147483648
      %v1853 = vor.u32 1.1754944e-38, %v1852
      %v1854 = vsel %vm1851, %v1853, %v1849
      %v1855 = vmul.f32 1.0, %v1854
      %v1856 = vrcp.pop %v1474
      %v1857 = vmul.f32 %v1474, %v1856
      %v1858 = vsub.f32 1.0, %v1857
      %v1859 = vmul.f32 %v1856, %v1858
      %v1860 = vadd.f32 %v1856, %v1859
      %vm1861 = vweird.f32 %v1474
      %vm1862 = vweird.f32 %v1856
      %vm1863 = vmor %vm1861, %vm1862
      %v1864 = vsel %vm1863, %v1856, %v1860
      %v1865 = vand.u32 2147483647, %v1474
      %vm1866 = vcmp.eq.f32.partialorder %v1865, 8.507059e+37
      %v1867 = vand.u32 %v1474, 2147483648
      %v1868 = vor.u32 1.1754944e-38, %v1867
      %v1869 = vsel %vm1866, %v1868, %v1864
      %v1870 = vmul.f32 1.0, %v1869
      %v1871 = vrcp.pop %v1475
      %v1872 = vmul.f32 %v1475, %v1871
      %v1873 = vsub.f32 1.0, %v1872
      %v1874 = vmul.f32 %v1871, %v1873
      %v1875 = vadd.f32 %v1871, %v1874
      %vm1876 = vweird.f32 %v1475
      %vm1877 = vweird.f32 %v1871
      %vm1878 = vmor %vm1876, %vm1877
      %v1879 = vsel %vm1878, %v1871, %v1875
      %v1880 = vand.u32 2147483647, %v1475
      %vm1881 = vcmp.eq.f32.partialorder %v1880, 8.507059e+37
      %v1882 = vand.u32 %v1475, 2147483648
      %v1883 = vor.u32 1.1754944e-38, %v1882
      %v1884 = vsel %vm1881, %v1883, %v1879
      %v1885 = vmul.f32 1.0, %v1884
      %v1886 = vrcp.pop %v1476
      %v1887 = vmul.f32 %v1476, %v1886
      %v1888 = vsub.f32 1.0, %v1887
      %v1889 = vmul.f32 %v1886, %v1888
      %v1890 = vadd.f32 %v1886, %v1889
      %vm1891 = vweird.f32 %v1476
      %vm1892 = vweird.f32 %v1886
      %vm1893 = vmor %vm1891, %vm1892
      %v1894 = vsel %vm1893, %v1886, %v1890
      %v1895 = vand.u32 2147483647, %v1476
      %vm1896 = vcmp.eq.f32.partialorder %v1895, 8.507059e+37
      %v1897 = vand.u32 %v1476, 2147483648
      %v1898 = vor.u32 1.1754944e-38, %v1897
      %v1899 = vsel %vm1896, %v1898, %v1894
      %v1900 = vmul.f32 1.0, %v1899
      %v1901 = vrcp.pop %v1477
      %v1902 = vmul.f32 %v1477, %v1901
      %v1903 = vsub.f32 1.0, %v1902
      %v1904 = vmul.f32 %v1901, %v1903
      %v1905 = vadd.f32 %v1901, %v1904
      %vm1906 = vweird.f32 %v1477
      %vm1907 = vweird.f32 %v1901
      %vm1908 = vmor %vm1906, %vm1907
      %v1909 = vsel %vm1908, %v1901, %v1905
      %v1910 = vand.u32 2147483647, %v1477
      %vm1911 = vcmp.eq.f32.partialorder %v1910, 8.507059e+37
      %v1912 = vand.u32 %v1477, 2147483648
      %v1913 = vor.u32 1.1754944e-38, %v1912
      %v1914 = vsel %vm1911, %v1913, %v1909
      %v1915 = vmul.f32 1.0, %v1914
      %v1916 = vrcp.pop %v1478
      %v1917 = vmul.f32 %v1478, %v1916
      %v1918 = vsub.f32 1.0, %v1917
      %v1919 = vmul.f32 %v1916, %v1918
      %v1920 = vadd.f32 %v1916, %v1919
      %vm1921 = vweird.f32 %v1478
      %vm1922 = vweird.f32 %v1916
      %vm1923 = vmor %vm1921, %vm1922
      %v1924 = vsel %vm1923, %v1916, %v1920
      %v1925 = vand.u32 2147483647, %v1478
      %vm1926 = vcmp.eq.f32.partialorder %v1925, 8.507059e+37
      %v1927 = vand.u32 %v1478, 2147483648
      %v1928 = vor.u32 1.1754944e-38, %v1927
      %v1929 = vsel %vm1926, %v1928, %v1924
      %v1930 = vmul.f32 1.0, %v1929
      %v1931 = vrcp.pop %v1479
      %v1932 = vmul.f32 %v1479, %v1931
      %v1933 = vsub.f32 1.0, %v1932
      %v1934 = vmul.f32 %v1931, %v1933
      %v1935 = vadd.f32 %v1931, %v1934
      %vm1936 = vweird.f32 %v1479
      %vm1937 = vweird.f32 %v1931
      %vm1938 = vmor %vm1936, %vm1937
      %v1939 = vsel %vm1938, %v1931, %v1935
      %v1940 = vand.u32 2147483647, %v1479
      %vm1941 = vcmp.eq.f32.partialorder %v1940, 8.507059e+37
      %v1942 = vand.u32 %v1479, 2147483648
      %v1943 = vor.u32 1.1754944e-38, %v1942
      %v1944 = vsel %vm1941, %v1943, %v1939
      %v1945 = vmul.f32 1.0, %v1944
      %v1946 = vrcp.pop %v1480
      %v1947 = vmul.f32 %v1480, %v1946
      %v1948 = vsub.f32 1.0, %v1947
      %v1949 = vmul.f32 %v1946, %v1948
      %v1950 = vadd.f32 %v1946, %v1949
      %vm1951 = vweird.f32 %v1480
      %vm1952 = vweird.f32 %v1946
      %vm1953 = vmor %vm1951, %vm1952
      %v1954 = vsel %vm1953, %v1946, %v1950
      %v1955 = vand.u32 2147483647, %v1480
      %vm1956 = vcmp.eq.f32.partialorder %v1955, 8.507059e+37
      %v1957 = vand.u32 %v1480, 2147483648
      %v1958 = vor.u32 1.1754944e-38, %v1957
      %v1959 = vsel %vm1956, %v1958, %v1954
      %v1960 = vmul.f32 1.0, %v1959
      %v1961 = vmul.f32 %v1321, %v1495
      %v1962 = vmul.f32 %v1322, %v1510
      %v1963 = vmul.f32 %v1323, %v1525
      %v1964 = vmul.f32 %v1324, %v1540
      %v1965 = vmul.f32 %v1325, %v1555
      %v1966 = vmul.f32 %v1326, %v1570
      %v1967 = vmul.f32 %v1327, %v1585
      %v1968 = vmul.f32 %v1328, %v1600
      %v1969 = vmul.f32 %v1329, %v1615
      %v1970 = vmul.f32 %v1330, %v1630
      %v1971 = vmul.f32 %v1331, %v1645
      %v1972 = vmul.f32 %v1332, %v1660
      %v1973 = vmul.f32 %v1333, %v1675
      %v1974 = vmul.f32 %v1334, %v1690
      %v1975 = vmul.f32 %v1335, %v1705
      %v1976 = vmul.f32 %v1336, %v1720
      %v1977 = vmul.f32 %v1337, %v1735
      %v1978 = vmul.f32 %v1338, %v1750
      %v1979 = vmul.f32 %v1339, %v1765
      %v1980 = vmul.f32 %v1340, %v1780
      %v1981 = vmul.f32 %v1341, %v1795
      %v1982 = vmul.f32 %v1342, %v1810
      %v1983 = vmul.f32 %v1343, %v1825
      %v1984 = vmul.f32 %v1344, %v1840
      %v1985 = vmul.f32 %v1345, %v1855
      %v1986 = vmul.f32 %v1346, %v1870
      %v1987 = vmul.f32 %v1347, %v1885
      %v1988 = vmul.f32 %v1348, %v1900
      %v1989 = vmul.f32 %v1349, %v1915
      %v1990 = vmul.f32 %v1350, %v1930
      %v1991 = vmul.f32 %v1351, %v1945
      %v1992 = vmul.f32 %v1352, %v1960
      %v1993 = vld [vmem:[%s6] sm:$0x3]
      %v1994 = vld [vmem:[%s7] sm:$0x3]
      %v1996 = vsel %vm395, %v1961, 0
      %v1999 = vsel %vm395, %v1962, 0
      %v2002 = vsel %vm395, %v1963, 0
      %v2005 = vsel %vm395, %v1964, 0
      %v2008 = vsel %vm395, %v1965, 0
      %v2011 = vsel %vm395, %v1966, 0
      %v2014 = vsel %vm395, %v1967, 0
      %v2017 = vsel %vm395, %v1968, 0
      %v2020 = vsel %vm395, %v1969, 0
      %v2023 = vsel %vm395, %v1970, 0
      %v2026 = vsel %vm395, %v1971, 0
      %v2029 = vsel %vm395, %v1972, 0
      %v2032 = vsel %vm395, %v1973, 0
      %v2035 = vsel %vm395, %v1974, 0
      %v2038 = vsel %vm395, %v1975, 0
      %v2041 = vsel %vm395, %v1976, 0
      %v2044 = vsel %vm395, %v1977, 0
      %v2047 = vsel %vm395, %v1978, 0
      %v2050 = vsel %vm395, %v1979, 0
      %v2053 = vsel %vm395, %v1980, 0
      %v2056 = vsel %vm395, %v1981, 0
      %v2059 = vsel %vm395, %v1982, 0
      %v2062 = vsel %vm395, %v1983, 0
      %v2065 = vsel %vm395, %v1984, 0
      %v2068 = vsel %vm395, %v1985, 0
      %v2071 = vsel %vm395, %v1986, 0
      %v2074 = vsel %vm395, %v1987, 0
      %v2077 = vsel %vm395, %v1988, 0
      %v2080 = vsel %vm395, %v1989, 0
      %v2083 = vsel %vm395, %v1990, 0
      %v2086 = vsel %vm395, %v1991, 0
      %v2089 = vsel %vm395, %v1992, 0
      %v2092 = vsel %vm492, %v1994, 0
      %2094 = vmatpush.msra.mxu0 0.0
      %2095 = vmatpush.msra.mxu0 0.0
      %2096 = vmatpush.msra.mxu0 0.0
      %2097 = vmatpush.msra.mxu0 0.0
      %2098 = vmatpush.msra.mxu0 0.0
      %2099 = vmatpush.msra.mxu0 0.0
      %2100 = vmatpush.msra.mxu0 0.0
      %2101 = vmatpush.msra.mxu0 0.0
      %2102 = vmatpush.msra.mxu0 0.0
      %2103 = vmatpush.msra.mxu0 0.0
      %2104 = vmatpush.msra.mxu0 0.0
      %2105 = vmatpush.msra.mxu0 0.0
      %2106 = vmatpush.msra.mxu0 0.0
      %2107 = vmatpush.msra.mxu0 0.0
      %2108 = vmatpush.msra.mxu0 0.0
      %2109 = vmatpush.msra.mxu0 %v2092
      %2110 = vmatmul.f32.gmra.mxu0 %v1996
      %v2111 = vpop.f32.mrf.mxu0
      %v2112 = vadd.f32 0.0, %v2111
      %2113 = vmatmul.f32.gmra.mxu0 %v1999
      %v2114 = vpop.f32.mrf.mxu0
      %v2115 = vadd.f32 0.0, %v2114
      %2116 = vmatmul.f32.gmra.mxu0 %v2002
      %v2117 = vpop.f32.mrf.mxu0
      %v2118 = vadd.f32 0.0, %v2117
      %2119 = vmatmul.f32.gmra.mxu0 %v2005
      %v2120 = vpop.f32.mrf.mxu0
      %v2121 = vadd.f32 0.0, %v2120
      %2122 = vmatmul.f32.gmra.mxu0 %v2008
      %v2123 = vpop.f32.mrf.mxu0
      %v2124 = vadd.f32 0.0, %v2123
      %2125 = vmatmul.f32.gmra.mxu0 %v2011
      %v2126 = vpop.f32.mrf.mxu0
      %v2127 = vadd.f32 0.0, %v2126
      %2128 = vmatmul.f32.gmra.mxu0 %v2014
      %v2129 = vpop.f32.mrf.mxu0
      %v2130 = vadd.f32 0.0, %v2129
      %2131 = vmatmul.f32.gmra.mxu0 %v2017
      %v2132 = vpop.f32.mrf.mxu0
      %v2133 = vadd.f32 0.0, %v2132
      %2134 = vmatmul.f32.gmra.mxu0 %v2020
      %v2135 = vpop.f32.mrf.mxu0
      %v2136 = vadd.f32 0.0, %v2135
      %2137 = vmatmul.f32.gmra.mxu0 %v2023
      %v2138 = vpop.f32.mrf.mxu0
      %v2139 = vadd.f32 0.0, %v2138
      %2140 = vmatmul.f32.gmra.mxu0 %v2026
      %v2141 = vpop.f32.mrf.mxu0
      %v2142 = vadd.f32 0.0, %v2141
      %2143 = vmatmul.f32.gmra.mxu0 %v2029
      %v2144 = vpop.f32.mrf.mxu0
      %v2145 = vadd.f32 0.0, %v2144
      %2146 = vmatmul.f32.gmra.mxu0 %v2032
      %v2147 = vpop.f32.mrf.mxu0
      %v2148 = vadd.f32 0.0, %v2147
      %2149 = vmatmul.f32.gmra.mxu0 %v2035
      %v2150 = vpop.f32.mrf.mxu0
      %v2151 = vadd.f32 0.0, %v2150
      %2152 = vmatmul.f32.gmra.mxu0 %v2038
      %v2153 = vpop.f32.mrf.mxu0
      %v2154 = vadd.f32 0.0, %v2153
      %2155 = vmatmul.f32.gmra.mxu0 %v2041
      %v2156 = vpop.f32.mrf.mxu0
      %v2157 = vadd.f32 0.0, %v2156
      %2158 = vmatmul.f32.gmra.mxu0 %v2044
      %v2159 = vpop.f32.mrf.mxu0
      %v2160 = vadd.f32 0.0, %v2159
      %2161 = vmatmul.f32.gmra.mxu0 %v2047
      %v2162 = vpop.f32.mrf.mxu0
      %v2163 = vadd.f32 0.0, %v2162
      %2164 = vmatmul.f32.gmra.mxu0 %v2050
      %v2165 = vpop.f32.mrf.mxu0
      %v2166 = vadd.f32 0.0, %v2165
      %2167 = vmatmul.f32.gmra.mxu0 %v2053
      %v2168 = vpop.f32.mrf.mxu0
      %v2169 = vadd.f32 0.0, %v2168
      %2170 = vmatmul.f32.gmra.mxu0 %v2056
      %v2171 = vpop.f32.mrf.mxu0
      %v2172 = vadd.f32 0.0, %v2171
      %2173 = vmatmul.f32.gmra.mxu0 %v2059
      %v2174 = vpop.f32.mrf.mxu0
      %v2175 = vadd.f32 0.0, %v2174
      %2176 = vmatmul.f32.gmra.mxu0 %v2062
      %v2177 = vpop.f32.mrf.mxu0
      %v2178 = vadd.f32 0.0, %v2177
      %2179 = vmatmul.f32.gmra.mxu0 %v2065
      %v2180 = vpop.f32.mrf.mxu0
      %v2181 = vadd.f32 0.0, %v2180
      %2182 = vmatmul.f32.gmra.mxu0 %v2068
      %v2183 = vpop.f32.mrf.mxu0
      %v2184 = vadd.f32 0.0, %v2183
      %2185 = vmatmul.f32.gmra.mxu0 %v2071
      %v2186 = vpop.f32.mrf.mxu0
      %v2187 = vadd.f32 0.0, %v2186
      %2188 = vmatmul.f32.gmra.mxu0 %v2074
      %v2189 = vpop.f32.mrf.mxu0
      %v2190 = vadd.f32 0.0, %v2189
      %2191 = vmatmul.f32.gmra.mxu0 %v2077
      %v2192 = vpop.f32.mrf.mxu0
      %v2193 = vadd.f32 0.0, %v2192
      %2194 = vmatmul.f32.gmra.mxu0 %v2080
      %v2195 = vpop.f32.mrf.mxu0
      %v2196 = vadd.f32 0.0, %v2195
      %2197 = vmatmul.f32.gmra.mxu0 %v2083
      %v2198 = vpop.f32.mrf.mxu0
      %v2199 = vadd.f32 0.0, %v2198
      %2200 = vmatmul.f32.gmra.mxu0 %v2086
      %v2201 = vpop.f32.mrf.mxu0
      %v2202 = vadd.f32 0.0, %v2201
      %2203 = vmatmul.f32.gmra.mxu0 %v2089
      %v2204 = vpop.f32.mrf.mxu0
      %v2205 = vadd.f32 0.0, %v2204
      %2206 = vdwg.mxu0
      %v2208 = vsel %vm395, %v1217, 0
      %v2211 = vsel %vm395, %v1218, 0
      %v2214 = vsel %vm395, %v1219, 0
      %v2217 = vsel %vm395, %v1220, 0
      %v2220 = vsel %vm395, %v1221, 0
      %v2223 = vsel %vm395, %v1222, 0
      %v2226 = vsel %vm395, %v1223, 0
      %v2229 = vsel %vm395, %v1224, 0
      %v2232 = vsel %vm395, %v1225, 0
      %v2235 = vsel %vm395, %v1226, 0
      %v2238 = vsel %vm395, %v1227, 0
      %v2241 = vsel %vm395, %v1228, 0
      %v2244 = vsel %vm395, %v1229, 0
      %v2247 = vsel %vm395, %v1230, 0
      %v2250 = vsel %vm395, %v1231, 0
      %v2253 = vsel %vm395, %v1232, 0
      %v2256 = vsel %vm395, %v1233, 0
      %v2259 = vsel %vm395, %v1234, 0
      %v2262 = vsel %vm395, %v1235, 0
      %v2265 = vsel %vm395, %v1236, 0
      %v2268 = vsel %vm395, %v1237, 0
      %v2271 = vsel %vm395, %v1238, 0
      %v2274 = vsel %vm395, %v1239, 0
      %v2277 = vsel %vm395, %v1240, 0
      %v2280 = vsel %vm395, %v1241, 0
      %v2283 = vsel %vm395, %v1242, 0
      %v2286 = vsel %vm395, %v1243, 0
      %v2289 = vsel %vm395, %v1244, 0
      %v2292 = vsel %vm395, %v1245, 0
      %v2295 = vsel %vm395, %v1246, 0
      %v2298 = vsel %vm395, %v1247, 0
      %v2301 = vsel %vm395, %v1248, 0
      %v2304 = vsel %vm492, %v1993, 0
      %2306 = vmatpush.msra.mxu0 0.0
      %2307 = vmatpush.msra.mxu0 0.0
      %2308 = vmatpush.msra.mxu0 0.0
      %2309 = vmatpush.msra.mxu0 0.0
      %2310 = vmatpush.msra.mxu0 0.0
      %2311 = vmatpush.msra.mxu0 0.0
      %2312 = vmatpush.msra.mxu0 0.0
      %2313 = vmatpush.msra.mxu0 0.0
      %2314 = vmatpush.msra.mxu0 0.0
      %2315 = vmatpush.msra.mxu0 0.0
      %2316 = vmatpush.msra.mxu0 0.0
      %2317 = vmatpush.msra.mxu0 0.0
      %2318 = vmatpush.msra.mxu0 0.0
      %2319 = vmatpush.msra.mxu0 0.0
      %2320 = vmatpush.msra.mxu0 0.0
      %2321 = vmatpush.msra.mxu0 %v2304
      %2322 = vmatmul.f32.gmra.mxu0 %v2208
      %v2323 = vpop.f32.mrf.mxu0
      %v2324 = vadd.f32 %v2112, %v2323
      %2325 = vmatmul.f32.gmra.mxu0 %v2211
      %v2326 = vpop.f32.mrf.mxu0
      %v2327 = vadd.f32 %v2115, %v2326
      %2328 = vmatmul.f32.gmra.mxu0 %v2214
      %v2329 = vpop.f32.mrf.mxu0
      %v2330 = vadd.f32 %v2118, %v2329
      %2331 = vmatmul.f32.gmra.mxu0 %v2217
      %v2332 = vpop.f32.mrf.mxu0
      %v2333 = vadd.f32 %v2121, %v2332
      %2334 = vmatmul.f32.gmra.mxu0 %v2220
      %v2335 = vpop.f32.mrf.mxu0
      %v2336 = vadd.f32 %v2124, %v2335
      %2337 = vmatmul.f32.gmra.mxu0 %v2223
      %v2338 = vpop.f32.mrf.mxu0
      %v2339 = vadd.f32 %v2127, %v2338
      %2340 = vmatmul.f32.gmra.mxu0 %v2226
      %v2341 = vpop.f32.mrf.mxu0
      %v2342 = vadd.f32 %v2130, %v2341
      %2343 = vmatmul.f32.gmra.mxu0 %v2229
      %v2344 = vpop.f32.mrf.mxu0
      %v2345 = vadd.f32 %v2133, %v2344
      %2346 = vmatmul.f32.gmra.mxu0 %v2232
      %v2347 = vpop.f32.mrf.mxu0
      %v2348 = vadd.f32 %v2136, %v2347
      %2349 = vmatmul.f32.gmra.mxu0 %v2235
      %v2350 = vpop.f32.mrf.mxu0
      %v2351 = vadd.f32 %v2139, %v2350
      %2352 = vmatmul.f32.gmra.mxu0 %v2238
      %v2353 = vpop.f32.mrf.mxu0
      %v2354 = vadd.f32 %v2142, %v2353
      %2355 = vmatmul.f32.gmra.mxu0 %v2241
      %v2356 = vpop.f32.mrf.mxu0
      %v2357 = vadd.f32 %v2145, %v2356
      %2358 = vmatmul.f32.gmra.mxu0 %v2244
      %v2359 = vpop.f32.mrf.mxu0
      %v2360 = vadd.f32 %v2148, %v2359
      %2361 = vmatmul.f32.gmra.mxu0 %v2247
      %v2362 = vpop.f32.mrf.mxu0
      %v2363 = vadd.f32 %v2151, %v2362
      %2364 = vmatmul.f32.gmra.mxu0 %v2250
      %v2365 = vpop.f32.mrf.mxu0
      %v2366 = vadd.f32 %v2154, %v2365
      %2367 = vmatmul.f32.gmra.mxu0 %v2253
      %v2368 = vpop.f32.mrf.mxu0
      %v2369 = vadd.f32 %v2157, %v2368
      %2370 = vmatmul.f32.gmra.mxu0 %v2256
      %v2371 = vpop.f32.mrf.mxu0
      %v2372 = vadd.f32 %v2160, %v2371
      %2373 = vmatmul.f32.gmra.mxu0 %v2259
      %v2374 = vpop.f32.mrf.mxu0
      %v2375 = vadd.f32 %v2163, %v2374
      %2376 = vmatmul.f32.gmra.mxu0 %v2262
      %v2377 = vpop.f32.mrf.mxu0
      %v2378 = vadd.f32 %v2166, %v2377
      %2379 = vmatmul.f32.gmra.mxu0 %v2265
      %v2380 = vpop.f32.mrf.mxu0
      %v2381 = vadd.f32 %v2169, %v2380
      %2382 = vmatmul.f32.gmra.mxu0 %v2268
      %v2383 = vpop.f32.mrf.mxu0
      %v2384 = vadd.f32 %v2172, %v2383
      %2385 = vmatmul.f32.gmra.mxu0 %v2271
      %v2386 = vpop.f32.mrf.mxu0
      %v2387 = vadd.f32 %v2175, %v2386
      %2388 = vmatmul.f32.gmra.mxu0 %v2274
      %v2389 = vpop.f32.mrf.mxu0
      %v2390 = vadd.f32 %v2178, %v2389
      %2391 = vmatmul.f32.gmra.mxu0 %v2277
      %v2392 = vpop.f32.mrf.mxu0
      %v2393 = vadd.f32 %v2181, %v2392
      %2394 = vmatmul.f32.gmra.mxu0 %v2280
      %v2395 = vpop.f32.mrf.mxu0
      %v2396 = vadd.f32 %v2184, %v2395
      %2397 = vmatmul.f32.gmra.mxu0 %v2283
      %v2398 = vpop.f32.mrf.mxu0
      %v2399 = vadd.f32 %v2187, %v2398
      %2400 = vmatmul.f32.gmra.mxu0 %v2286
      %v2401 = vpop.f32.mrf.mxu0
      %v2402 = vadd.f32 %v2190, %v2401
      %2403 = vmatmul.f32.gmra.mxu0 %v2289
      %v2404 = vpop.f32.mrf.mxu0
      %v2405 = vadd.f32 %v2193, %v2404
      %2406 = vmatmul.f32.gmra.mxu0 %v2292
      %v2407 = vpop.f32.mrf.mxu0
      %v2408 = vadd.f32 %v2196, %v2407
      %2409 = vmatmul.f32.gmra.mxu0 %v2295
      %v2410 = vpop.f32.mrf.mxu0
      %v2411 = vadd.f32 %v2199, %v2410
      %2412 = vmatmul.f32.gmra.mxu0 %v2298
      %v2413 = vpop.f32.mrf.mxu0
      %v2414 = vadd.f32 %v2202, %v2413
      %2415 = vmatmul.f32.gmra.mxu0 %v2301
      %v2416 = vpop.f32.mrf.mxu0
      %v2417 = vadd.f32 %v2205, %v2416
      %2418 = vdwg.mxu0
      %v2419 = vld [vmem:[%s8] sm:$0x1]
      %v2421 = vperm.slane %v2419, 0
      %v2423 = vadd.f32 %v2324, %v2421
      %v2424 = vadd.f32 %v2327, %v2421
      %v2425 = vadd.f32 %v2330, %v2421
      %v2426 = vadd.f32 %v2333, %v2421
      %v2427 = vadd.f32 %v2336, %v2421
      %v2428 = vadd.f32 %v2339, %v2421
      %v2429 = vadd.f32 %v2342, %v2421
      %v2430 = vadd.f32 %v2345, %v2421
      %v2431 = vadd.f32 %v2348, %v2421
      %v2432 = vadd.f32 %v2351, %v2421
      %v2433 = vadd.f32 %v2354, %v2421
      %v2434 = vadd.f32 %v2357, %v2421
      %v2435 = vadd.f32 %v2360, %v2421
      %v2436 = vadd.f32 %v2363, %v2421
      %v2437 = vadd.f32 %v2366, %v2421
      %v2438 = vadd.f32 %v2369, %v2421
      %v2439 = vadd.f32 %v2372, %v2421
      %v2440 = vadd.f32 %v2375, %v2421
      %v2441 = vadd.f32 %v2378, %v2421
      %v2442 = vadd.f32 %v2381, %v2421
      %v2443 = vadd.f32 %v2384, %v2421
      %v2444 = vadd.f32 %v2387, %v2421
      %v2445 = vadd.f32 %v2390, %v2421
      %v2446 = vadd.f32 %v2393, %v2421
      %v2447 = vadd.f32 %v2396, %v2421
      %v2448 = vadd.f32 %v2399, %v2421
      %v2449 = vadd.f32 %v2402, %v2421
      %v2450 = vadd.f32 %v2405, %v2421
      %v2451 = vadd.f32 %v2408, %v2421
      %v2452 = vadd.f32 %v2411, %v2421
      %v2453 = vadd.f32 %v2414, %v2421
      %v2454 = vadd.f32 %v2417, %v2421
      %v2455 = vxor.u32 %v2423, 2147483648
      %v2456 = vxor.u32 %v2424, 2147483648
      %v2457 = vxor.u32 %v2425, 2147483648
      %v2458 = vxor.u32 %v2426, 2147483648
      %v2459 = vxor.u32 %v2427, 2147483648
      %v2460 = vxor.u32 %v2428, 2147483648
      %v2461 = vxor.u32 %v2429, 2147483648
      %v2462 = vxor.u32 %v2430, 2147483648
      %v2463 = vxor.u32 %v2431, 2147483648
      %v2464 = vxor.u32 %v2432, 2147483648
      %v2465 = vxor.u32 %v2433, 2147483648
      %v2466 = vxor.u32 %v2434, 2147483648
      %v2467 = vxor.u32 %v2435, 2147483648
      %v2468 = vxor.u32 %v2436, 2147483648
      %v2469 = vxor.u32 %v2437, 2147483648
      %v2470 = vxor.u32 %v2438, 2147483648
      %v2471 = vxor.u32 %v2439, 2147483648
      %v2472 = vxor.u32 %v2440, 2147483648
      %v2473 = vxor.u32 %v2441, 2147483648
      %v2474 = vxor.u32 %v2442, 2147483648
      %v2475 = vxor.u32 %v2443, 2147483648
      %v2476 = vxor.u32 %v2444, 2147483648
      %v2477 = vxor.u32 %v2445, 2147483648
      %v2478 = vxor.u32 %v2446, 2147483648
      %v2479 = vxor.u32 %v2447, 2147483648
      %v2480 = vxor.u32 %v2448, 2147483648
      %v2481 = vxor.u32 %v2449, 2147483648
      %v2482 = vxor.u32 %v2450, 2147483648
      %v2483 = vxor.u32 %v2451, 2147483648
      %v2484 = vxor.u32 %v2452, 2147483648
      %v2485 = vxor.u32 %v2453, 2147483648
      %v2486 = vxor.u32 %v2454, 2147483648
      %v2487 = vmul.f32 %v2455, 1.442695
      %v2488 = vpow.pop %v2487
      %v2489 = vmul.f32 %v2456, 1.442695
      %v2490 = vpow.pop %v2489
      %v2491 = vmul.f32 %v2457, 1.442695
      %v2492 = vpow.pop %v2491
      %v2493 = vmul.f32 %v2458, 1.442695
      %v2494 = vpow.pop %v2493
      %v2495 = vmul.f32 %v2459, 1.442695
      %v2496 = vpow.pop %v2495
      %v2497 = vmul.f32 %v2460, 1.442695
      %v2498 = vpow.pop %v2497
      %v2499 = vmul.f32 %v2461, 1.442695
      %v2500 = vpow.pop %v2499
      %v2501 = vmul.f32 %v2462, 1.442695
      %v2502 = vpow.pop %v2501
      %v2503 = vmul.f32 %v2463, 1.442695
      %v2504 = vpow.pop %v2503
      %v2505 = vmul.f32 %v2464, 1.442695
      %v2506 = vpow.pop %v2505
      %v2507 = vmul.f32 %v2465, 1.442695
      %v2508 = vpow.pop %v2507
      %v2509 = vmul.f32 %v2466, 1.442695
      %v2510 = vpow.pop %v2509
      %v2511 = vmul.f32 %v2467, 1.442695
      %v2512 = vpow.pop %v2511
      %v2513 = vmul.f32 %v2468, 1.442695
      %v2514 = vpow.pop %v2513
      %v2515 = vmul.f32 %v2469, 1.442695
      %v2516 = vpow.pop %v2515
      %v2517 = vmul.f32 %v2470, 1.442695
      %v2518 = vpow.pop %v2517
      %v2519 = vmul.f32 %v2471, 1.442695
      %v2520 = vpow.pop %v2519
      %v2521 = vmul.f32 %v2472, 1.442695
      %v2522 = vpow.pop %v2521
      %v2523 = vmul.f32 %v2473, 1.442695
      %v2524 = vpow.pop %v2523
      %v2525 = vmul.f32 %v2474, 1.442695
      %v2526 = vpow.pop %v2525
      %v2527 = vmul.f32 %v2475, 1.442695
      %v2528 = vpow.pop %v2527
      %v2529 = vmul.f32 %v2476, 1.442695
      %v2530 = vpow.pop %v2529
      %v2531 = vmul.f32 %v2477, 1.442695
      %v2532 = vpow.pop %v2531
      %v2533 = vmul.f32 %v2478, 1.442695
      %v2534 = vpow.pop %v2533
      %v2535 = vmul.f32 %v2479, 1.442695
      %v2536 = vpow.pop %v2535
      %v2537 = vmul.f32 %v2480, 1.442695
      %v2538 = vpow.pop %v2537
      %v2539 = vmul.f32 %v2481, 1.442695
      %v2540 = vpow.pop %v2539
      %v2541 = vmul.f32 %v2482, 1.442695
      %v2542 = vpow.pop %v2541
      %v2543 = vmul.f32 %v2483, 1.442695
      %v2544 = vpow.pop %v2543
      %v2545 = vmul.f32 %v2484, 1.442695
      %v2546 = vpow.pop %v2545
      %v2547 = vmul.f32 %v2485, 1.442695
      %v2548 = vpow.pop %v2547
      %v2549 = vmul.f32 %v2486, 1.442695
      %v2550 = vpow.pop %v2549
      %v2551 = vadd.f32 %v2488, 1.0
      %v2552 = vadd.f32 %v2490, 1.0
      %v2553 = vadd.f32 %v2492, 1.0
      %v2554 = vadd.f32 %v2494, 1.0
      %v2555 = vadd.f32 %v2496, 1.0
      %v2556 = vadd.f32 %v2498, 1.0
      %v2557 = vadd.f32 %v2500, 1.0
      %v2558 = vadd.f32 %v2502, 1.0
      %v2559 = vadd.f32 %v2504, 1.0
      %v2560 = vadd.f32 %v2506, 1.0
      %v2561 = vadd.f32 %v2508, 1.0
      %v2562 = vadd.f32 %v2510, 1.0
      %v2563 = vadd.f32 %v2512, 1.0
      %v2564 = vadd.f32 %v2514, 1.0
      %v2565 = vadd.f32 %v2516, 1.0
      %v2566 = vadd.f32 %v2518, 1.0
      %v2567 = vadd.f32 %v2520, 1.0
      %v2568 = vadd.f32 %v2522, 1.0
      %v2569 = vadd.f32 %v2524, 1.0
      %v2570 = vadd.f32 %v2526, 1.0
      %v2571 = vadd.f32 %v2528, 1.0
      %v2572 = vadd.f32 %v2530, 1.0
      %v2573 = vadd.f32 %v2532, 1.0
      %v2574 = vadd.f32 %v2534, 1.0
      %v2575 = vadd.f32 %v2536, 1.0
      %v2576 = vadd.f32 %v2538, 1.0
      %v2577 = vadd.f32 %v2540, 1.0
      %v2578 = vadd.f32 %v2542, 1.0
      %v2579 = vadd.f32 %v2544, 1.0
      %v2580 = vadd.f32 %v2546, 1.0
      %v2581 = vadd.f32 %v2548, 1.0
      %v2582 = vadd.f32 %v2550, 1.0
      %v2583 = vrcp.pop %v2551
      %v2584 = vmul.f32 %v2551, %v2583
      %v2585 = vsub.f32 1.0, %v2584
      %v2586 = vmul.f32 %v2583, %v2585
      %v2587 = vadd.f32 %v2583, %v2586
      %vm2588 = vweird.f32 %v2551
      %vm2589 = vweird.f32 %v2583
      %vm2590 = vmor %vm2588, %vm2589
      %v2591 = vsel %vm2590, %v2583, %v2587
      %v2592 = vand.u32 2147483647, %v2551
      %vm2593 = vcmp.eq.f32.partialorder %v2592, 8.507059e+37
      %v2594 = vand.u32 %v2551, 2147483648
      %v2595 = vor.u32 1.1754944e-38, %v2594
      %v2596 = vsel %vm2593, %v2595, %v2591
      %v2597 = vmul.f32 1.0, %v2596
      %v2598 = vrcp.pop %v2552
      %v2599 = vmul.f32 %v2552, %v2598
      %v2600 = vsub.f32 1.0, %v2599
      %v2601 = vmul.f32 %v2598, %v2600
      %v2602 = vadd.f32 %v2598, %v2601
      %vm2603 = vweird.f32 %v2552
      %vm2604 = vweird.f32 %v2598
      %vm2605 = vmor %vm2603, %vm2604
      %v2606 = vsel %vm2605, %v2598, %v2602
      %v2607 = vand.u32 2147483647, %v2552
      %vm2608 = vcmp.eq.f32.partialorder %v2607, 8.507059e+37
      %v2609 = vand.u32 %v2552, 2147483648
      %v2610 = vor.u32 1.1754944e-38, %v2609
      %v2611 = vsel %vm2608, %v2610, %v2606
      %v2612 = vmul.f32 1.0, %v2611
      %v2613 = vrcp.pop %v2553
      %v2614 = vmul.f32 %v2553, %v2613
      %v2615 = vsub.f32 1.0, %v2614
      %v2616 = vmul.f32 %v2613, %v2615
      %v2617 = vadd.f32 %v2613, %v2616
      %vm2618 = vweird.f32 %v2553
      %vm2619 = vweird.f32 %v2613
      %vm2620 = vmor %vm2618, %vm2619
      %v2621 = vsel %vm2620, %v2613, %v2617
      %v2622 = vand.u32 2147483647, %v2553
      %vm2623 = vcmp.eq.f32.partialorder %v2622, 8.507059e+37
      %v2624 = vand.u32 %v2553, 2147483648
      %v2625 = vor.u32 1.1754944e-38, %v2624
      %v2626 = vsel %vm2623, %v2625, %v2621
      %v2627 = vmul.f32 1.0, %v2626
      %v2628 = vrcp.pop %v2554
      %v2629 = vmul.f32 %v2554, %v2628
      %v2630 = vsub.f32 1.0, %v2629
      %v2631 = vmul.f32 %v2628, %v2630
      %v2632 = vadd.f32 %v2628, %v2631
      %vm2633 = vweird.f32 %v2554
      %vm2634 = vweird.f32 %v2628
      %vm2635 = vmor %vm2633, %vm2634
      %v2636 = vsel %vm2635, %v2628, %v2632
      %v2637 = vand.u32 2147483647, %v2554
      %vm2638 = vcmp.eq.f32.partialorder %v2637, 8.507059e+37
      %v2639 = vand.u32 %v2554, 2147483648
      %v2640 = vor.u32 1.1754944e-38, %v2639
      %v2641 = vsel %vm2638, %v2640, %v2636
      %v2642 = vmul.f32 1.0, %v2641
      %v2643 = vrcp.pop %v2555
      %v2644 = vmul.f32 %v2555, %v2643
      %v2645 = vsub.f32 1.0, %v2644
      %v2646 = vmul.f32 %v2643, %v2645
      %v2647 = vadd.f32 %v2643, %v2646
      %vm2648 = vweird.f32 %v2555
      %vm2649 = vweird.f32 %v2643
      %vm2650 = vmor %vm2648, %vm2649
      %v2651 = vsel %vm2650, %v2643, %v2647
      %v2652 = vand.u32 2147483647, %v2555
      %vm2653 = vcmp.eq.f32.partialorder %v2652, 8.507059e+37
      %v2654 = vand.u32 %v2555, 2147483648
      %v2655 = vor.u32 1.1754944e-38, %v2654
      %v2656 = vsel %vm2653, %v2655, %v2651
      %v2657 = vmul.f32 1.0, %v2656
      %v2658 = vrcp.pop %v2556
      %v2659 = vmul.f32 %v2556, %v2658
      %v2660 = vsub.f32 1.0, %v2659
      %v2661 = vmul.f32 %v2658, %v2660
      %v2662 = vadd.f32 %v2658, %v2661
      %vm2663 = vweird.f32 %v2556
      %vm2664 = vweird.f32 %v2658
      %vm2665 = vmor %vm2663, %vm2664
      %v2666 = vsel %vm2665, %v2658, %v2662
      %v2667 = vand.u32 2147483647, %v2556
      %vm2668 = vcmp.eq.f32.partialorder %v2667, 8.507059e+37
      %v2669 = vand.u32 %v2556, 2147483648
      %v2670 = vor.u32 1.1754944e-38, %v2669
      %v2671 = vsel %vm2668, %v2670, %v2666
      %v2672 = vmul.f32 1.0, %v2671
      %v2673 = vrcp.pop %v2557
      %v2674 = vmul.f32 %v2557, %v2673
      %v2675 = vsub.f32 1.0, %v2674
      %v2676 = vmul.f32 %v2673, %v2675
      %v2677 = vadd.f32 %v2673, %v2676
      %vm2678 = vweird.f32 %v2557
      %vm2679 = vweird.f32 %v2673
      %vm2680 = vmor %vm2678, %vm2679
      %v2681 = vsel %vm2680, %v2673, %v2677
      %v2682 = vand.u32 2147483647, %v2557
      %vm2683 = vcmp.eq.f32.partialorder %v2682, 8.507059e+37
      %v2684 = vand.u32 %v2557, 2147483648
      %v2685 = vor.u32 1.1754944e-38, %v2684
      %v2686 = vsel %vm2683, %v2685, %v2681
      %v2687 = vmul.f32 1.0, %v2686
      %v2688 = vrcp.pop %v2558
      %v2689 = vmul.f32 %v2558, %v2688
      %v2690 = vsub.f32 1.0, %v2689
      %v2691 = vmul.f32 %v2688, %v2690
      %v2692 = vadd.f32 %v2688, %v2691
      %vm2693 = vweird.f32 %v2558
      %vm2694 = vweird.f32 %v2688
      %vm2695 = vmor %vm2693, %vm2694
      %v2696 = vsel %vm2695, %v2688, %v2692
      %v2697 = vand.u32 2147483647, %v2558
      %vm2698 = vcmp.eq.f32.partialorder %v2697, 8.507059e+37
      %v2699 = vand.u32 %v2558, 2147483648
      %v2700 = vor.u32 1.1754944e-38, %v2699
      %v2701 = vsel %vm2698, %v2700, %v2696
      %v2702 = vmul.f32 1.0, %v2701
      %v2703 = vrcp.pop %v2559
      %v2704 = vmul.f32 %v2559, %v2703
      %v2705 = vsub.f32 1.0, %v2704
      %v2706 = vmul.f32 %v2703, %v2705
      %v2707 = vadd.f32 %v2703, %v2706
      %vm2708 = vweird.f32 %v2559
      %vm2709 = vweird.f32 %v2703
      %vm2710 = vmor %vm2708, %vm2709
      %v2711 = vsel %vm2710, %v2703, %v2707
      %v2712 = vand.u32 2147483647, %v2559
      %vm2713 = vcmp.eq.f32.partialorder %v2712, 8.507059e+37
      %v2714 = vand.u32 %v2559, 2147483648
      %v2715 = vor.u32 1.1754944e-38, %v2714
      %v2716 = vsel %vm2713, %v2715, %v2711
      %v2717 = vmul.f32 1.0, %v2716
      %v2718 = vrcp.pop %v2560
      %v2719 = vmul.f32 %v2560, %v2718
      %v2720 = vsub.f32 1.0, %v2719
      %v2721 = vmul.f32 %v2718, %v2720
      %v2722 = vadd.f32 %v2718, %v2721
      %vm2723 = vweird.f32 %v2560
      %vm2724 = vweird.f32 %v2718
      %vm2725 = vmor %vm2723, %vm2724
      %v2726 = vsel %vm2725, %v2718, %v2722
      %v2727 = vand.u32 2147483647, %v2560
      %vm2728 = vcmp.eq.f32.partialorder %v2727, 8.507059e+37
      %v2729 = vand.u32 %v2560, 2147483648
      %v2730 = vor.u32 1.1754944e-38, %v2729
      %v2731 = vsel %vm2728, %v2730, %v2726
      %v2732 = vmul.f32 1.0, %v2731
      %v2733 = vrcp.pop %v2561
      %v2734 = vmul.f32 %v2561, %v2733
      %v2735 = vsub.f32 1.0, %v2734
      %v2736 = vmul.f32 %v2733, %v2735
      %v2737 = vadd.f32 %v2733, %v2736
      %vm2738 = vweird.f32 %v2561
      %vm2739 = vweird.f32 %v2733
      %vm2740 = vmor %vm2738, %vm2739
      %v2741 = vsel %vm2740, %v2733, %v2737
      %v2742 = vand.u32 2147483647, %v2561
      %vm2743 = vcmp.eq.f32.partialorder %v2742, 8.507059e+37
      %v2744 = vand.u32 %v2561, 2147483648
      %v2745 = vor.u32 1.1754944e-38, %v2744
      %v2746 = vsel %vm2743, %v2745, %v2741
      %v2747 = vmul.f32 1.0, %v2746
      %v2748 = vrcp.pop %v2562
      %v2749 = vmul.f32 %v2562, %v2748
      %v2750 = vsub.f32 1.0, %v2749
      %v2751 = vmul.f32 %v2748, %v2750
      %v2752 = vadd.f32 %v2748, %v2751
      %vm2753 = vweird.f32 %v2562
      %vm2754 = vweird.f32 %v2748
      %vm2755 = vmor %vm2753, %vm2754
      %v2756 = vsel %vm2755, %v2748, %v2752
      %v2757 = vand.u32 2147483647, %v2562
      %vm2758 = vcmp.eq.f32.partialorder %v2757, 8.507059e+37
      %v2759 = vand.u32 %v2562, 2147483648
      %v2760 = vor.u32 1.1754944e-38, %v2759
      %v2761 = vsel %vm2758, %v2760, %v2756
      %v2762 = vmul.f32 1.0, %v2761
      %v2763 = vrcp.pop %v2563
      %v2764 = vmul.f32 %v2563, %v2763
      %v2765 = vsub.f32 1.0, %v2764
      %v2766 = vmul.f32 %v2763, %v2765
      %v2767 = vadd.f32 %v2763, %v2766
      %vm2768 = vweird.f32 %v2563
      %vm2769 = vweird.f32 %v2763
      %vm2770 = vmor %vm2768, %vm2769
      %v2771 = vsel %vm2770, %v2763, %v2767
      %v2772 = vand.u32 2147483647, %v2563
      %vm2773 = vcmp.eq.f32.partialorder %v2772, 8.507059e+37
      %v2774 = vand.u32 %v2563, 2147483648
      %v2775 = vor.u32 1.1754944e-38, %v2774
      %v2776 = vsel %vm2773, %v2775, %v2771
      %v2777 = vmul.f32 1.0, %v2776
      %v2778 = vrcp.pop %v2564
      %v2779 = vmul.f32 %v2564, %v2778
      %v2780 = vsub.f32 1.0, %v2779
      %v2781 = vmul.f32 %v2778, %v2780
      %v2782 = vadd.f32 %v2778, %v2781
      %vm2783 = vweird.f32 %v2564
      %vm2784 = vweird.f32 %v2778
      %vm2785 = vmor %vm2783, %vm2784
      %v2786 = vsel %vm2785, %v2778, %v2782
      %v2787 = vand.u32 2147483647, %v2564
      %vm2788 = vcmp.eq.f32.partialorder %v2787, 8.507059e+37
      %v2789 = vand.u32 %v2564, 2147483648
      %v2790 = vor.u32 1.1754944e-38, %v2789
      %v2791 = vsel %vm2788, %v2790, %v2786
      %v2792 = vmul.f32 1.0, %v2791
      %v2793 = vrcp.pop %v2565
      %v2794 = vmul.f32 %v2565, %v2793
      %v2795 = vsub.f32 1.0, %v2794
      %v2796 = vmul.f32 %v2793, %v2795
      %v2797 = vadd.f32 %v2793, %v2796
      %vm2798 = vweird.f32 %v2565
      %vm2799 = vweird.f32 %v2793
      %vm2800 = vmor %vm2798, %vm2799
      %v2801 = vsel %vm2800, %v2793, %v2797
      %v2802 = vand.u32 2147483647, %v2565
      %vm2803 = vcmp.eq.f32.partialorder %v2802, 8.507059e+37
      %v2804 = vand.u32 %v2565, 2147483648
      %v2805 = vor.u32 1.1754944e-38, %v2804
      %v2806 = vsel %vm2803, %v2805, %v2801
      %v2807 = vmul.f32 1.0, %v2806
      %v2808 = vrcp.pop %v2566
      %v2809 = vmul.f32 %v2566, %v2808
      %v2810 = vsub.f32 1.0, %v2809
      %v2811 = vmul.f32 %v2808, %v2810
      %v2812 = vadd.f32 %v2808, %v2811
      %vm2813 = vweird.f32 %v2566
      %vm2814 = vweird.f32 %v2808
      %vm2815 = vmor %vm2813, %vm2814
      %v2816 = vsel %vm2815, %v2808, %v2812
      %v2817 = vand.u32 2147483647, %v2566
      %vm2818 = vcmp.eq.f32.partialorder %v2817, 8.507059e+37
      %v2819 = vand.u32 %v2566, 2147483648
      %v2820 = vor.u32 1.1754944e-38, %v2819
      %v2821 = vsel %vm2818, %v2820, %v2816
      %v2822 = vmul.f32 1.0, %v2821
      %v2823 = vrcp.pop %v2567
      %v2824 = vmul.f32 %v2567, %v2823
      %v2825 = vsub.f32 1.0, %v2824
      %v2826 = vmul.f32 %v2823, %v2825
      %v2827 = vadd.f32 %v2823, %v2826
      %vm2828 = vweird.f32 %v2567
      %vm2829 = vweird.f32 %v2823
      %vm2830 = vmor %vm2828, %vm2829
      %v2831 = vsel %vm2830, %v2823, %v2827
      %v2832 = vand.u32 2147483647, %v2567
      %vm2833 = vcmp.eq.f32.partialorder %v2832, 8.507059e+37
      %v2834 = vand.u32 %v2567, 2147483648
      %v2835 = vor.u32 1.1754944e-38, %v2834
      %v2836 = vsel %vm2833, %v2835, %v2831
      %v2837 = vmul.f32 1.0, %v2836
      %v2838 = vrcp.pop %v2568
      %v2839 = vmul.f32 %v2568, %v2838
      %v2840 = vsub.f32 1.0, %v2839
      %v2841 = vmul.f32 %v2838, %v2840
      %v2842 = vadd.f32 %v2838, %v2841
      %vm2843 = vweird.f32 %v2568
      %vm2844 = vweird.f32 %v2838
      %vm2845 = vmor %vm2843, %vm2844
      %v2846 = vsel %vm2845, %v2838, %v2842
      %v2847 = vand.u32 2147483647, %v2568
      %vm2848 = vcmp.eq.f32.partialorder %v2847, 8.507059e+37
      %v2849 = vand.u32 %v2568, 2147483648
      %v2850 = vor.u32 1.1754944e-38, %v2849
      %v2851 = vsel %vm2848, %v2850, %v2846
      %v2852 = vmul.f32 1.0, %v2851
      %v2853 = vrcp.pop %v2569
      %v2854 = vmul.f32 %v2569, %v2853
      %v2855 = vsub.f32 1.0, %v2854
      %v2856 = vmul.f32 %v2853, %v2855
      %v2857 = vadd.f32 %v2853, %v2856
      %vm2858 = vweird.f32 %v2569
      %vm2859 = vweird.f32 %v2853
      %vm2860 = vmor %vm2858, %vm2859
      %v2861 = vsel %vm2860, %v2853, %v2857
      %v2862 = vand.u32 2147483647, %v2569
      %vm2863 = vcmp.eq.f32.partialorder %v2862, 8.507059e+37
      %v2864 = vand.u32 %v2569, 2147483648
      %v2865 = vor.u32 1.1754944e-38, %v2864
      %v2866 = vsel %vm2863, %v2865, %v2861
      %v2867 = vmul.f32 1.0, %v2866
      %v2868 = vrcp.pop %v2570
      %v2869 = vmul.f32 %v2570, %v2868
      %v2870 = vsub.f32 1.0, %v2869
      %v2871 = vmul.f32 %v2868, %v2870
      %v2872 = vadd.f32 %v2868, %v2871
      %vm2873 = vweird.f32 %v2570
      %vm2874 = vweird.f32 %v2868
      %vm2875 = vmor %vm2873, %vm2874
      %v2876 = vsel %vm2875, %v2868, %v2872
      %v2877 = vand.u32 2147483647, %v2570
      %vm2878 = vcmp.eq.f32.partialorder %v2877, 8.507059e+37
      %v2879 = vand.u32 %v2570, 2147483648
      %v2880 = vor.u32 1.1754944e-38, %v2879
      %v2881 = vsel %vm2878, %v2880, %v2876
      %v2882 = vmul.f32 1.0, %v2881
      %v2883 = vrcp.pop %v2571
      %v2884 = vmul.f32 %v2571, %v2883
      %v2885 = vsub.f32 1.0, %v2884
      %v2886 = vmul.f32 %v2883, %v2885
      %v2887 = vadd.f32 %v2883, %v2886
      %vm2888 = vweird.f32 %v2571
      %vm2889 = vweird.f32 %v2883
      %vm2890 = vmor %vm2888, %vm2889
      %v2891 = vsel %vm2890, %v2883, %v2887
      %v2892 = vand.u32 2147483647, %v2571
      %vm2893 = vcmp.eq.f32.partialorder %v2892, 8.507059e+37
      %v2894 = vand.u32 %v2571, 2147483648
      %v2895 = vor.u32 1.1754944e-38, %v2894
      %v2896 = vsel %vm2893, %v2895, %v2891
      %v2897 = vmul.f32 1.0, %v2896
      %v2898 = vrcp.pop %v2572
      %v2899 = vmul.f32 %v2572, %v2898
      %v2900 = vsub.f32 1.0, %v2899
      %v2901 = vmul.f32 %v2898, %v2900
      %v2902 = vadd.f32 %v2898, %v2901
      %vm2903 = vweird.f32 %v2572
      %vm2904 = vweird.f32 %v2898
      %vm2905 = vmor %vm2903, %vm2904
      %v2906 = vsel %vm2905, %v2898, %v2902
      %v2907 = vand.u32 2147483647, %v2572
      %vm2908 = vcmp.eq.f32.partialorder %v2907, 8.507059e+37
      %v2909 = vand.u32 %v2572, 2147483648
      %v2910 = vor.u32 1.1754944e-38, %v2909
      %v2911 = vsel %vm2908, %v2910, %v2906
      %v2912 = vmul.f32 1.0, %v2911
      %v2913 = vrcp.pop %v2573
      %v2914 = vmul.f32 %v2573, %v2913
      %v2915 = vsub.f32 1.0, %v2914
      %v2916 = vmul.f32 %v2913, %v2915
      %v2917 = vadd.f32 %v2913, %v2916
      %vm2918 = vweird.f32 %v2573
      %vm2919 = vweird.f32 %v2913
      %vm2920 = vmor %vm2918, %vm2919
      %v2921 = vsel %vm2920, %v2913, %v2917
      %v2922 = vand.u32 2147483647, %v2573
      %vm2923 = vcmp.eq.f32.partialorder %v2922, 8.507059e+37
      %v2924 = vand.u32 %v2573, 2147483648
      %v2925 = vor.u32 1.1754944e-38, %v2924
      %v2926 = vsel %vm2923, %v2925, %v2921
      %v2927 = vmul.f32 1.0, %v2926
      %v2928 = vrcp.pop %v2574
      %v2929 = vmul.f32 %v2574, %v2928
      %v2930 = vsub.f32 1.0, %v2929
      %v2931 = vmul.f32 %v2928, %v2930
      %v2932 = vadd.f32 %v2928, %v2931
      %vm2933 = vweird.f32 %v2574
      %vm2934 = vweird.f32 %v2928
      %vm2935 = vmor %vm2933, %vm2934
      %v2936 = vsel %vm2935, %v2928, %v2932
      %v2937 = vand.u32 2147483647, %v2574
      %vm2938 = vcmp.eq.f32.partialorder %v2937, 8.507059e+37
      %v2939 = vand.u32 %v2574, 2147483648
      %v2940 = vor.u32 1.1754944e-38, %v2939
      %v2941 = vsel %vm2938, %v2940, %v2936
      %v2942 = vmul.f32 1.0, %v2941
      %v2943 = vrcp.pop %v2575
      %v2944 = vmul.f32 %v2575, %v2943
      %v2945 = vsub.f32 1.0, %v2944
      %v2946 = vmul.f32 %v2943, %v2945
      %v2947 = vadd.f32 %v2943, %v2946
      %vm2948 = vweird.f32 %v2575
      %vm2949 = vweird.f32 %v2943
      %vm2950 = vmor %vm2948, %vm2949
      %v2951 = vsel %vm2950, %v2943, %v2947
      %v2952 = vand.u32 2147483647, %v2575
      %vm2953 = vcmp.eq.f32.partialorder %v2952, 8.507059e+37
      %v2954 = vand.u32 %v2575, 2147483648
      %v2955 = vor.u32 1.1754944e-38, %v2954
      %v2956 = vsel %vm2953, %v2955, %v2951
      %v2957 = vmul.f32 1.0, %v2956
      %v2958 = vrcp.pop %v2576
      %v2959 = vmul.f32 %v2576, %v2958
      %v2960 = vsub.f32 1.0, %v2959
      %v2961 = vmul.f32 %v2958, %v2960
      %v2962 = vadd.f32 %v2958, %v2961
      %vm2963 = vweird.f32 %v2576
      %vm2964 = vweird.f32 %v2958
      %vm2965 = vmor %vm2963, %vm2964
      %v2966 = vsel %vm2965, %v2958, %v2962
      %v2967 = vand.u32 2147483647, %v2576
      %vm2968 = vcmp.eq.f32.partialorder %v2967, 8.507059e+37
      %v2969 = vand.u32 %v2576, 2147483648
      %v2970 = vor.u32 1.1754944e-38, %v2969
      %v2971 = vsel %vm2968, %v2970, %v2966
      %v2972 = vmul.f32 1.0, %v2971
      %v2973 = vrcp.pop %v2577
      %v2974 = vmul.f32 %v2577, %v2973
      %v2975 = vsub.f32 1.0, %v2974
      %v2976 = vmul.f32 %v2973, %v2975
      %v2977 = vadd.f32 %v2973, %v2976
      %vm2978 = vweird.f32 %v2577
      %vm2979 = vweird.f32 %v2973
      %vm2980 = vmor %vm2978, %vm2979
      %v2981 = vsel %vm2980, %v2973, %v2977
      %v2982 = vand.u32 2147483647, %v2577
      %vm2983 = vcmp.eq.f32.partialorder %v2982, 8.507059e+37
      %v2984 = vand.u32 %v2577, 2147483648
      %v2985 = vor.u32 1.1754944e-38, %v2984
      %v2986 = vsel %vm2983, %v2985, %v2981
      %v2987 = vmul.f32 1.0, %v2986
      %v2988 = vrcp.pop %v2578
      %v2989 = vmul.f32 %v2578, %v2988
      %v2990 = vsub.f32 1.0, %v2989
      %v2991 = vmul.f32 %v2988, %v2990
      %v2992 = vadd.f32 %v2988, %v2991
      %vm2993 = vweird.f32 %v2578
      %vm2994 = vweird.f32 %v2988
      %vm2995 = vmor %vm2993, %vm2994
      %v2996 = vsel %vm2995, %v2988, %v2992
      %v2997 = vand.u32 2147483647, %v2578
      %vm2998 = vcmp.eq.f32.partialorder %v2997, 8.507059e+37
      %v2999 = vand.u32 %v2578, 2147483648
      %v3000 = vor.u32 1.1754944e-38, %v2999
      %v3001 = vsel %vm2998, %v3000, %v2996
      %v3002 = vmul.f32 1.0, %v3001
      %v3003 = vrcp.pop %v2579
      %v3004 = vmul.f32 %v2579, %v3003
      %v3005 = vsub.f32 1.0, %v3004
      %v3006 = vmul.f32 %v3003, %v3005
      %v3007 = vadd.f32 %v3003, %v3006
      %vm3008 = vweird.f32 %v2579
      %vm3009 = vweird.f32 %v3003
      %vm3010 = vmor %vm3008, %vm3009
      %v3011 = vsel %vm3010, %v3003, %v3007
      %v3012 = vand.u32 2147483647, %v2579
      %vm3013 = vcmp.eq.f32.partialorder %v3012, 8.507059e+37
      %v3014 = vand.u32 %v2579, 2147483648
      %v3015 = vor.u32 1.1754944e-38, %v3014
      %v3016 = vsel %vm3013, %v3015, %v3011
      %v3017 = vmul.f32 1.0, %v3016
      %v3018 = vrcp.pop %v2580
      %v3019 = vmul.f32 %v2580, %v3018
      %v3020 = vsub.f32 1.0, %v3019
      %v3021 = vmul.f32 %v3018, %v3020
      %v3022 = vadd.f32 %v3018, %v3021
      %vm3023 = vweird.f32 %v2580
      %vm3024 = vweird.f32 %v3018
      %vm3025 = vmor %vm3023, %vm3024
      %v3026 = vsel %vm3025, %v3018, %v3022
      %v3027 = vand.u32 2147483647, %v2580
      %vm3028 = vcmp.eq.f32.partialorder %v3027, 8.507059e+37
      %v3029 = vand.u32 %v2580, 2147483648
      %v3030 = vor.u32 1.1754944e-38, %v3029
      %v3031 = vsel %vm3028, %v3030, %v3026
      %v3032 = vmul.f32 1.0, %v3031
      %v3033 = vrcp.pop %v2581
      %v3034 = vmul.f32 %v2581, %v3033
      %v3035 = vsub.f32 1.0, %v3034
      %v3036 = vmul.f32 %v3033, %v3035
      %v3037 = vadd.f32 %v3033, %v3036
      %vm3038 = vweird.f32 %v2581
      %vm3039 = vweird.f32 %v3033
      %vm3040 = vmor %vm3038, %vm3039
      %v3041 = vsel %vm3040, %v3033, %v3037
      %v3042 = vand.u32 2147483647, %v2581
      %vm3043 = vcmp.eq.f32.partialorder %v3042, 8.507059e+37
      %v3044 = vand.u32 %v2581, 2147483648
      %v3045 = vor.u32 1.1754944e-38, %v3044
      %v3046 = vsel %vm3043, %v3045, %v3041
      %v3047 = vmul.f32 1.0, %v3046
      %v3048 = vrcp.pop %v2582
      %v3049 = vmul.f32 %v2582, %v3048
      %v3050 = vsub.f32 1.0, %v3049
      %v3051 = vmul.f32 %v3048, %v3050
      %v3052 = vadd.f32 %v3048, %v3051
      %vm3053 = vweird.f32 %v2582
      %vm3054 = vweird.f32 %v3048
      %vm3055 = vmor %vm3053, %vm3054
      %v3056 = vsel %vm3055, %v3048, %v3052
      %v3057 = vand.u32 2147483647, %v2582
      %vm3058 = vcmp.eq.f32.partialorder %v3057, 8.507059e+37
      %v3059 = vand.u32 %v2582, 2147483648
      %v3060 = vor.u32 1.1754944e-38, %v3059
      %v3061 = vsel %vm3058, %v3060, %v3056
      %v3062 = vmul.f32 1.0, %v3061
      %v3063 = vmul.f32 %v2423, %v2597
      %v3064 = vmul.f32 %v2424, %v2612
      %v3065 = vmul.f32 %v2425, %v2627
      %v3066 = vmul.f32 %v2426, %v2642
      %v3067 = vmul.f32 %v2427, %v2657
      %v3068 = vmul.f32 %v2428, %v2672
      %v3069 = vmul.f32 %v2429, %v2687
      %v3070 = vmul.f32 %v2430, %v2702
      %v3071 = vmul.f32 %v2431, %v2717
      %v3072 = vmul.f32 %v2432, %v2732
      %v3073 = vmul.f32 %v2433, %v2747
      %v3074 = vmul.f32 %v2434, %v2762
      %v3075 = vmul.f32 %v2435, %v2777
      %v3076 = vmul.f32 %v2436, %v2792
      %v3077 = vmul.f32 %v2437, %v2807
      %v3078 = vmul.f32 %v2438, %v2822
      %v3079 = vmul.f32 %v2439, %v2837
      %v3080 = vmul.f32 %v2440, %v2852
      %v3081 = vmul.f32 %v2441, %v2867
      %v3082 = vmul.f32 %v2442, %v2882
      %v3083 = vmul.f32 %v2443, %v2897
      %v3084 = vmul.f32 %v2444, %v2912
      %v3085 = vmul.f32 %v2445, %v2927
      %v3086 = vmul.f32 %v2446, %v2942
      %v3087 = vmul.f32 %v2447, %v2957
      %v3088 = vmul.f32 %v2448, %v2972
      %v3089 = vmul.f32 %v2449, %v2987
      %v3090 = vmul.f32 %v2450, %v3002
      %v3091 = vmul.f32 %v2451, %v3017
      %v3092 = vmul.f32 %v2452, %v3032
      %v3093 = vmul.f32 %v2453, %v3047
      %v3094 = vmul.f32 %v2454, %v3062
      %vm3095 = vcmask 31744
      %3096 = vst.msk [vmem:[%s356] sm:$0xff] %vm3095, %v3063
      %3097 = vst.msk [vmem:[%s356 + $0x8] sm:$0xff] %vm3095, %v3064
      %3098 = vst.msk [vmem:[%s356 + $0x10] sm:$0xff] %vm3095, %v3065
      %3099 = vst.msk [vmem:[%s356 + $0x18] sm:$0xff] %vm3095, %v3066
      %3100 = vst.msk [vmem:[%s356 + $0x20] sm:$0xff] %vm3095, %v3067
      %3101 = vst.msk [vmem:[%s356 + $0x28] sm:$0xff] %vm3095, %v3068
      %3102 = vst.msk [vmem:[%s356 + $0x30] sm:$0xff] %vm3095, %v3069
      %3103 = vst.msk [vmem:[%s356 + $0x38] sm:$0xff] %vm3095, %v3070
      %3104 = vst.msk [vmem:[%s356 + $0x40] sm:$0xff] %vm3095, %v3071
      %3105 = vst.msk [vmem:[%s356 + $0x48] sm:$0xff] %vm3095, %v3072
      %3106 = vst.msk [vmem:[%s356 + $0x50] sm:$0xff] %vm3095, %v3073
      %3107 = vst.msk [vmem:[%s356 + $0x58] sm:$0xff] %vm3095, %v3074
      %3108 = vst.msk [vmem:[%s356 + $0x60] sm:$0xff] %vm3095, %v3075
      %3109 = vst.msk [vmem:[%s356 + $0x68] sm:$0xff] %vm3095, %v3076
      %3110 = vst.msk [vmem:[%s356 + $0x70] sm:$0xff] %vm3095, %v3077
      %3111 = vst.msk [vmem:[%s356 + $0x78] sm:$0xff] %vm3095, %v3078
      %3112 = vst.msk [vmem:[%s356 + $0x80] sm:$0xff] %vm3095, %v3079
      %3113 = vst.msk [vmem:[%s356 + $0x88] sm:$0xff] %vm3095, %v3080
      %3114 = vst.msk [vmem:[%s356 + $0x90] sm:$0xff] %vm3095, %v3081
      %3115 = vst.msk [vmem:[%s356 + $0x98] sm:$0xff] %vm3095, %v3082
      %3116 = vst.msk [vmem:[%s356 + $0xa0] sm:$0xff] %vm3095, %v3083
      %3117 = vst.msk [vmem:[%s356 + $0xa8] sm:$0xff] %vm3095, %v3084
      %3118 = vst.msk [vmem:[%s356 + $0xb0] sm:$0xff] %vm3095, %v3085
      %3119 = vst.msk [vmem:[%s356 + $0xb8] sm:$0xff] %vm3095, %v3086
      %3120 = vst.msk [vmem:[%s356 + $0xc0] sm:$0xff] %vm3095, %v3087
      %3121 = vst.msk [vmem:[%s356 + $0xc8] sm:$0xff] %vm3095, %v3088
      %3122 = vst.msk [vmem:[%s356 + $0xd0] sm:$0xff] %vm3095, %v3089
      %3123 = vst.msk [vmem:[%s356 + $0xd8] sm:$0xff] %vm3095, %v3090
      %3124 = vst.msk [vmem:[%s356 + $0xe0] sm:$0xff] %vm3095, %v3091
      %3125 = vst.msk [vmem:[%s356 + $0xe8] sm:$0xff] %vm3095, %v3092
      %3126 = vst.msk [vmem:[%s356 + $0xf0] sm:$0xff] %vm3095, %v3093
      %3127 = vst.msk [vmem:[%s356 + $0xf8] sm:$0xff] %vm3095, %v3094
      %s3128 = smul.u32 32, %s20
      %p3129 = scmp.lt.s32.totalorder %s3128, 63
      %s3130 = scalar_select %p3129, %s3128, 63
      %s3131 = smul.addr %s3130, 8
      %s3132 = scalar_lea.vmem %s9, %s3131
      // Predicated region
      $region57: #{bottleneck_csp_forward.7} parent=55 // pred_check
        %p3133 = pneg %p237
      $region58: #{bottleneck_csp_forward.7} parent=55 // pred_check_branch
        %3135 = sbr.rel (%p3133) target = $region60
      $region59: #{bottleneck_csp_forward.7} parent=55 // pred_region
        %s3136 = smul.u32 32, %s20
      $region60: #{bottleneck_csp_forward.7} parent=55 // pred_fallthru
        _
    $region56: #{bottleneck_csp_forward.7} parent=5 // pred_fallthru
      _
    %p3137 = scmp.le.s32.totalorder 2, %s15
    // Predicated region
    $region61: #{bottleneck_csp_forward.7} parent=5 // pred_check
      %p3138 = pneg %p3137
    $region62: #{bottleneck_csp_forward.7} parent=5 // pred_check_branch
      %3140 = sbr.rel (%p3138) target = $region64
    $region63: #{bottleneck_csp_forward.7} parent=5 // pred_region
      %s3141 = ssub.s32 %s15, 2
      // Predicated region
      $region65: #{bottleneck_csp_forward.7} parent=63 // pred_check
        %p3142 = pneg %p243
      $region66: #{bottleneck_csp_forward.7} parent=63 // pred_check_branch
        %3144 = sbr.rel (%p3142) target = $region68
      $region67: #{bottleneck_csp_forward.7} parent=63 // pred_region
        %s3145 = smul.u32 32, %s21
        %p3146 = scmp.lt.s32.totalorder %s3145, 63
        %s3147 = scalar_select %p3146, %s3145, 63
        %s3148 = smul.addr %s3147, 8
        %s3149 = scalar_lea.vmem %s9, %s3148
      $region68: #{bottleneck_csp_forward.7} parent=63 // pred_fallthru
        _
    $region64: #{bottleneck_csp_forward.7} parent=5 // pred_fallthru
      _
  $region6: #{bottleneck_csp_forward.7} parent=0 // loop_footer
    %s19 = sadd.s32 1, %s15
  $region7: #{bottleneck_csp_forward.7} parent=0 // loop_footer_branch
    %14 = sbr.rel target = $region3
  $region8: #{bottleneck_csp_forward.7} parent=0 // loop_exit
    _

</llo_original>
